<compile_context>
chip_gen: v5e
topology: v5e:2x2
jax: 0.10.0
libtpu: 0.0.40
codegen_flags: <defaults>
</compile_context>

<pallas_src>
import numpy as np
import jax
import jax.numpy as jnp
from jax.experimental import pallas as pl
from jax.experimental.pallas import tpu as pltpu


def deconv_cbam_forward(x, params, *, stride, padding):
    Wt = params["deconv_w"]      # (Cin, Cout, K, K)   ConvTranspose2d weight
    W1 = params["conv1x1_w"]     # (Cout, Cout, 1, 1)
    Wca1 = params["ca_w1"]       # (Cmid, Cout, 1, 1)
    Wca2 = params["ca_w2"]       # (Cout, Cmid, 1, 1)
    Wsa = params["sa_w"]         # (1, 2, 7, 7)
    bsa = params["sa_b"]         # (1,)

    N, Cin, H, W = x.shape
    _, Cout, K, _ = Wt.shape
    assert padding <= K - 1, "padding > K-1 not supported by this im2col lowering"
    OH = (H - 1) * stride - 2 * padding + K
    OW = (W - 1) * stride - 2 * padding + K
    HW = OH * OW
    Cmid = Wca1.shape[0]
    CKK = Cin * K * K
    SA_K = Wsa.shape[-1]
    SA_R = SA_K // 2

    # ---------------- fused kernel (per batch sample) ----------------
    def kernel(patches_ref, wd_ref, w1_ref, wca1_ref, wca2_ref,
               masks_ref, wsa_ref, bsa_ref, out_ref):
        # --- DeconvBlock: ConvTranspose2d as (Cout,CKK)@(CKK,HW) on the MXU ---
        y = jnp.dot(wd_ref[...], patches_ref[...],
                    preferred_element_type=jnp.float32)             # (Cout, HW) f32

        # InstanceNorm2d (affine=False, eps=1e-5, biased var), single-pass stats.
        mean = jnp.mean(y, axis=1, keepdims=True)
        var = jnp.maximum(jnp.mean(y * y, axis=1, keepdims=True) - mean * mean, 0.0)
        y = (y - mean) * jax.lax.rsqrt(var + 1e-5)

        # LeakyReLU(0.1)
        y = jnp.where(y > 0, y, 0.1 * y)

        # 1x1 Conv (bias=False), bf16 MXU operands, f32 accumulation.
        z = jnp.dot(w1_ref[...], y.astype(jnp.bfloat16),
                    preferred_element_type=jnp.float32)             # (Cout, HW)

        # --- CBAM channel attention: fused avg/max through one MLP pass ---
        avg_c = jnp.mean(z, axis=1, keepdims=True)                  # (Cout, 1)
        max_c = jnp.max(z, axis=1, keepdims=True)                   # (Cout, 1)
        v2 = jnp.concatenate([avg_c, max_c], axis=1)                # (Cout, 2)
        h = jnp.maximum(
            jnp.dot(wca1_ref[...], v2, preferred_element_type=jnp.float32), 0.0)
        o2 = jnp.dot(wca2_ref[...], h, preferred_element_type=jnp.float32)
        ca = jax.nn.sigmoid(o2[:, 0:1] + o2[:, 1:2])                # (Cout, 1)
        z = z * ca

        # --- CBAM spatial attention: 7x7 conv as a 49-tap VPU stencil ---
        avg_s = jnp.mean(z, axis=0, keepdims=True)                  # (1, HW)
        max_s = jnp.max(z, axis=0, keepdims=True)                   # (1, HW)
        m2 = jnp.concatenate([avg_s, max_s], axis=0)                # (2, HW)

        s = jnp.zeros((1, HW), jnp.float32) + bsa_ref[0]
        for kh in range(SA_K):
            for kw in range(SA_K):
                k = kh * SA_K + kw
                off = ((kh - SA_R) * OW + (kw - SA_R)) % HW
                # lane rotation of the flattened spatial map (wrap is masked out)
                sh = m2 if off == 0 else jnp.concatenate(
                    [m2[:, off:], m2[:, :off]], axis=1)
                msk = masks_ref[k:k + 1, :]                         # (1, HW)
                s = s + msk * (wsa_ref[k] * sh[0:1, :]
                               + wsa_ref[SA_K * SA_K + k] * sh[1:2, :])
        z = z * jax.nn.sigmoid(s)

        # final LeakyReLU(0.1)
        z = jnp.where(z > 0, z, 0.1 * z)
        out_ref[...] = z.astype(out_ref.dtype)

    # ---------------- glue: lower ConvTranspose2d to an im2col matmul ----------------
    # TODO(synk): build the im2col patches inside the kernel (per-sample DMA of raw x
    # plus in-VMEM shifted views) or use the stride^2 sub-convolution decomposition to
    # cut this host-built stream ~K^2/stride^2 x; kept on host here for robustness.
    pp = K - 1 - padding
    x_up = jnp.zeros((N, Cin, (H - 1) * stride + 1, (W - 1) * stride + 1), x.dtype)
    x_up = x_up.at[:, :, ::stride, ::stride].set(x)
    xp = jnp.pad(x_up, ((0, 0), (0, 0), (pp, pp), (pp, pp)))
    cols = [xp[:, :, kh:kh + OH, kw:kw + OW] for kh in range(K) for kw in range(K)]
    patches = jnp.stack(cols, axis=2).reshape(N, CKK, HW)            # (N, CKK, HW)

    w_eq = jnp.transpose(Wt[:, :, ::-1, ::-1], (1, 0, 2, 3))         # (Cout,Cin,K,K)
    wd_mat = w_eq.reshape(Cout, CKK)                                 # (Cout, CKK)
    w1_mat = W1.reshape(Cout, Cout)                                  # (out, in)
    wca1_mat = Wca1.reshape(Cmid, Cout)                              # (Cmid, Cout)
    wca2_mat = Wca2.reshape(Cout, Cmid)                              # (Cout, Cmid)
    wsa_flat = Wsa.reshape(2 * SA_K * SA_K).astype(jnp.float32)      # 98 tap scalars
    bsa_arr = jnp.asarray(bsa, jnp.float32).reshape(1)

    # ---- glue: static border masks for the 49-tap stencil (structure only) ----
    masks = np.zeros((SA_K * SA_K, HW), np.float32)
    oh_i = np.arange(OH)
    ow_i = np.arange(OW)
    for kh in range(SA_K):
        for kw in range(SA_K):
            dh, dw = kh - SA_R, kw - SA_R
            rv = (oh_i + dh >= 0) & (oh_i + dh < OH)
            cv = (ow_i + dw >= 0) & (ow_i + dw < OW)
            masks[kh * SA_K + kw] = (rv[:, None] & cv[None, :]).reshape(HW)
    masks = jnp.asarray(masks)

    grid_spec = pltpu.PrefetchScalarGridSpec(
        num_scalar_prefetch=0,
        grid=(N,),
        in_specs=[
            pl.BlockSpec((None, CKK, HW), lambda n: (n, 0, 0)),      # patches (bf16)
            pl.BlockSpec((Cout, CKK), lambda n: (0, 0)),             # deconv weight
            pl.BlockSpec((Cout, Cout), lambda n: (0, 0)),            # 1x1 conv weight
            pl.BlockSpec((Cmid, Cout), lambda n: (0, 0)),            # CA MLP fc1
            pl.BlockSpec((Cout, Cmid), lambda n: (0, 0)),            # CA MLP fc2
            pl.BlockSpec((SA_K * SA_K, HW), lambda n: (0, 0)),       # stencil masks
            pl.BlockSpec(memory_space=pltpu.MemorySpace.SMEM),       # SA tap weights
            pl.BlockSpec(memory_space=pltpu.MemorySpace.SMEM),       # SA bias
        ],
        out_specs=pl.BlockSpec((None, Cout, HW), lambda n: (n, 0, 0)),
    )

    out_flat = pl.pallas_call(
        kernel,
        out_shape=jax.ShapeDtypeStruct((N, Cout, HW), jnp.float32),
        grid_spec=grid_spec,
        compiler_params=pltpu.CompilerParams(
            dimension_semantics=("parallel",)),
    )(patches.astype(jnp.bfloat16), wd_mat.astype(jnp.bfloat16),
      w1_mat.astype(jnp.bfloat16), wca1_mat.astype(jnp.float32),
      wca2_mat.astype(jnp.float32), masks, wsa_flat, bsa_arr)

    # (N, Cout, HW) -> NCHW directly (channel-on-sublane layout needs no transpose)
    return out_flat.reshape(N, Cout, OH, OW)


# ----------------------- independent numpy reference -----------------------
def _sigmoid(v):
    return 1.0 / (1.0 + np.exp(-v))


def reference_forward(x, params, *, stride, padding):
    Wt = np.asarray(params["deconv_w"], np.float32)
    W1 = np.asarray(params["conv1x1_w"], np.float32)
    Wca1 = np.asarray(params["ca_w1"], np.float32)
    Wca2 = np.asarray(params["ca_w2"], np.float32)
    Wsa = np.asarray(params["sa_w"], np.float32)
    bsa = np.asarray(params["sa_b"], np.float32)
    x = np.asarray(x, np.float32)
    N, Cin, H, W = x.shape
    _, Cout, K, _ = Wt.shape
    OH = (H - 1) * stride - 2 * padding + K
    OW = (W - 1) * stride - 2 * padding + K

    # ConvTranspose2d (bias=False), from the definition
    y = np.zeros((N, Cout, OH, OW), np.float32)
    for n in range(N):
        for ci in range(Cin):
            for ih in range(H):
                for iw in range(W):
                    v = x[n, ci, ih, iw]
                    for kh in range(K):
                        oh = ih * stride - padding + kh
                        if not (0 <= oh < OH):
                            continue
                        for kw in range(K):
                            ow = iw * stride - padding + kw
                            if not (0 <= ow < OW):
                                continue
                            y[n, :, oh, ow] += v * Wt[ci, :, kh, kw]

    mean = y.mean(axis=(2, 3), keepdims=True)
    var = y.var(axis=(2, 3), keepdims=True)
    y = (y - mean) / np.sqrt(var + 1e-5)
    y = np.where(y > 0, y, 0.1 * y)
    z = np.einsum('oc,nchw->nohw', W1.reshape(Cout, Cout), y)

    Cmid = Wca1.shape[0]
    avg = z.mean(axis=(2, 3))
    mx = z.max(axis=(2, 3))

    def mlp(v):
        h = np.maximum(v @ Wca1.reshape(Cmid, Cout).T, 0.0)
        return h @ Wca2.reshape(Cout, Cmid).T

    ca = _sigmoid(mlp(avg) + mlp(mx))[:, :, None, None]
    z = z * ca

    avg_s = z.mean(axis=1, keepdims=True)
    max_s = z.max(axis=1, keepdims=True)
    cat = np.concatenate([avg_s, max_s], axis=1)
    pad = np.pad(cat, ((0, 0), (0, 0), (3, 3), (3, 3)))
    s = np.zeros((N, 1, OH, OW), np.float32) + bsa.reshape(1, 1, 1, 1)
    for c in range(2):
        for kh in range(7):
            for kw in range(7):
                s[:, 0] += pad[:, c, kh:kh + OH, kw:kw + OW] * Wsa[0, c, kh, kw]
    z = z * _sigmoid(s)
    return np.where(z > 0, z, 0.1 * z)


if __name__ == "__main__":
    N, Cin, Cout = 2, 4, 8
    H = W = 8
    K, stride, padding = 4, 2, 1

    key = jax.random.PRNGKey(0)
    ks = jax.random.split(key, 7)
    x = jax.random.normal(ks[0], (N, Cin, H, W), jnp.float32)
    params = dict(
        deconv_w=0.1 * jax.random.normal(ks[1], (Cin, Cout, K, K), jnp.float32),
        conv1x1_w=0.1 * jax.random.normal(ks[2], (Cout, Cout, 1, 1), jnp.float32),
        ca_w1=0.1 * jax.random.normal(ks[3], (Cout // 2, Cout, 1, 1), jnp.float32),
        ca_w2=0.1 * jax.random.normal(ks[4], (Cout, Cout // 2, 1, 1), jnp.float32),
        sa_w=0.1 * jax.random.normal(ks[5], (1, 2, 7, 7), jnp.float32),
        sa_b=0.1 * jax.random.normal(ks[6], (1,), jnp.float32),
    )

    out = deconv_cbam_forward(x, params, stride=stride, padding=padding)
    out = jax.block_until_ready(out)

    ref = reference_forward(x, params, stride=stride, padding=padding)
    err = float(np.max(np.abs(np.asarray(out) - ref)))
    assert err < 1e-2, f"max abs err {err}"
    print("KERNEL_OK")
</pallas_src>

<mosaic_0001>
module attributes {stable_mosaic.version = 11 : i64} {
  func.func @kernel(%arg0: i32, %arg1: memref<1x64x256xbf16, #tpu.memory_space<vmem>>, %arg2: memref<8x64xbf16, #tpu.memory_space<vmem>>, %arg3: memref<8x8xbf16, #tpu.memory_space<vmem>>, %arg4: memref<4x8xf32, #tpu.memory_space<vmem>>, %arg5: memref<8x4xf32, #tpu.memory_space<vmem>>, %arg6: memref<49x256xf32, #tpu.memory_space<vmem>>, %arg7: memref<98xf32, #tpu.memory_space<smem>>, %arg8: memref<1xf32, #tpu.memory_space<smem>>, %arg9: memref<1x8x256xf32, #tpu.memory_space<vmem>>) attributes {dimension_semantics = [#tpu.dimension_semantics<parallel>], iteration_bounds = array<i64: 2>, scalar_prefetch = 0 : i64, scratch_operands = 0 : i64, tpu.core_type = #tpu.core_type<tc>, window_params = [{transform_indices = @transform_0, window_bounds = array<i64: 1, 64, 256>}, {pipeline_mode = #tpu.pipeline_mode<synchronous>, transform_indices = @transform_1, window_bounds = array<i64: 8, 64>}, {pipeline_mode = #tpu.pipeline_mode<synchronous>, transform_indices = @transform_2, window_bounds = array<i64: 8, 8>}, {pipeline_mode = #tpu.pipeline_mode<synchronous>, transform_indices = @transform_3, window_bounds = array<i64: 4, 8>}, {pipeline_mode = #tpu.pipeline_mode<synchronous>, transform_indices = @transform_4, window_bounds = array<i64: 8, 4>}, {pipeline_mode = #tpu.pipeline_mode<synchronous>, transform_indices = @transform_5, window_bounds = array<i64: 49, 256>}, {transform_indices = @transform_6, window_bounds = array<i64: 98>}, {transform_indices = @transform_7, window_bounds = array<i64: 1>}, {transform_indices = @transform_8, window_bounds = array<i64: 1, 8, 256>}]} {
    %c0 = arith.constant 0 : index
    %c0_0 = arith.constant 0 : index
    %0 = vector.load %arg2[%c0, %c0_0] : memref<8x64xbf16, #tpu.memory_space<vmem>>, vector<8x64xbf16>
    %c0_1 = arith.constant 0 : index
    %c0_2 = arith.constant 0 : index
    %c0_3 = arith.constant 0 : index
    %1 = vector.load %arg1[%c0_1, %c0_2, %c0_3] : memref<1x64x256xbf16, #tpu.memory_space<vmem>>, vector<1x64x256xbf16>
    %2 = vector.shape_cast %1 : vector<1x64x256xbf16> to vector<64x256xbf16>
    %cst = arith.constant dense<0.000000e+00> : vector<8x256xf32>
    %3 = tpu.matmul %0, %2, %cst {dimension_numbers = #tpu.dot_dimension_numbers<[1], [0], [0], [1], [0, 0, 1, 1], [], []>} : vector<8x64xbf16>, vector<64x256xbf16>, vector<8x256xf32> -> vector<8x256xf32>
    %cst_4 = arith.constant dense<0.000000e+00> : vector<8xf32>
    %4 = vector.multi_reduction <add>, %3, %cst_4 [1] : vector<8x256xf32> to vector<8xf32>
    %5 = vector.shape_cast %4 : vector<8xf32> to vector<8x1xf32>
    %cst_5 = arith.constant 2.560000e+02 : f32
    %6 = vector.broadcast %cst_5 : f32 to vector<8x1xf32>
    %7 = arith.divf %5, %6 : vector<8x1xf32>
    %8 = arith.mulf %3, %3 : vector<8x256xf32>
    %cst_6 = arith.constant dense<0.000000e+00> : vector<8xf32>
    %9 = vector.multi_reduction <add>, %8, %cst_6 [1] : vector<8x256xf32> to vector<8xf32>
    %10 = vector.shape_cast %9 : vector<8xf32> to vector<8x1xf32>
    %cst_7 = arith.constant 2.560000e+02 : f32
    %11 = vector.broadcast %cst_7 : f32 to vector<8x1xf32>
    %12 = arith.divf %10, %11 : vector<8x1xf32>
    %13 = arith.mulf %7, %7 : vector<8x1xf32>
    %14 = arith.subf %12, %13 : vector<8x1xf32>
    %cst_8 = arith.constant 0.000000e+00 : f32
    %15 = vector.broadcast %cst_8 : f32 to vector<8x1xf32>
    %16 = arith.maximumf %14, %15 : vector<8x1xf32>
    %17 = vector.broadcast %7 : vector<8x1xf32> to vector<8x256xf32>
    %18 = arith.subf %3, %17 : vector<8x256xf32>
    %cst_9 = arith.constant 9.99999974E-6 : f32
    %19 = vector.broadcast %cst_9 : f32 to vector<8x1xf32>
    %20 = arith.addf %16, %19 : vector<8x1xf32>
    %21 = math.rsqrt %20 : vector<8x1xf32>
    %22 = vector.broadcast %21 : vector<8x1xf32> to vector<8x256xf32>
    %23 = arith.mulf %18, %22 : vector<8x256xf32>
    %cst_10 = arith.constant 0.000000e+00 : f32
    %24 = vector.broadcast %cst_10 : f32 to vector<8x256xf32>
    %25 = arith.cmpf ogt, %23, %24 : vector<8x256xf32>
    %cst_11 = arith.constant 1.000000e-01 : f32
    %26 = vector.broadcast %cst_11 : f32 to vector<8x256xf32>
    %27 = arith.mulf %26, %23 : vector<8x256xf32>
    %28 = arith.select %25, %23, %27 : vector<8x256xi1>, vector<8x256xf32>
    %c0_12 = arith.constant 0 : index
    %c0_13 = arith.constant 0 : index
    %29 = vector.load %arg3[%c0_12, %c0_13] : memref<8x8xbf16, #tpu.memory_space<vmem>>, vector<8x8xbf16>
    %30 = arith.truncf %28 : vector<8x256xf32> to vector<8x256xbf16>
    %cst_14 = arith.constant dense<0.000000e+00> : vector<8x256xf32>
    %31 = tpu.matmul %29, %30, %cst_14 {dimension_numbers = #tpu.dot_dimension_numbers<[1], [0], [0], [1], [0, 0, 1, 1], [], []>} : vector<8x8xbf16>, vector<8x256xbf16>, vector<8x256xf32> -> vector<8x256xf32>
    %cst_15 = arith.constant dense<0.000000e+00> : vector<8xf32>
    %32 = vector.multi_reduction <add>, %31, %cst_15 [1] : vector<8x256xf32> to vector<8xf32>
    %33 = vector.shape_cast %32 : vector<8xf32> to vector<8x1xf32>
    %cst_16 = arith.constant 2.560000e+02 : f32
    %34 = vector.broadcast %cst_16 : f32 to vector<8x1xf32>
    %35 = arith.divf %33, %34 : vector<8x1xf32>
    %cst_17 = arith.constant dense<0xFF800000> : vector<8xf32>
    %36 = vector.multi_reduction <maximumf>, %31, %cst_17 [1] : vector<8x256xf32> to vector<8xf32>
    %37 = vector.shape_cast %36 : vector<8xf32> to vector<8x1xf32>
    %38 = tpu.concatenate %35, %37 in 1 : vector<8x1xf32>, vector<8x1xf32> -> vector<8x2xf32>
    %c0_18 = arith.constant 0 : index
    %c0_19 = arith.constant 0 : index
    %39 = vector.load %arg4[%c0_18, %c0_19] : memref<4x8xf32, #tpu.memory_space<vmem>>, vector<4x8xf32>
    %cst_20 = arith.constant dense<0.000000e+00> : vector<4x2xf32>
    %40 = tpu.matmul %39, %38, %cst_20 {dimension_numbers = #tpu.dot_dimension_numbers<[1], [0], [0], [1], [0, 0, 1, 1], [], []>} : vector<4x8xf32>, vector<8x2xf32>, vector<4x2xf32> -> vector<4x2xf32>
    %cst_21 = arith.constant 0.000000e+00 : f32
    %41 = vector.broadcast %cst_21 : f32 to vector<4x2xf32>
    %42 = arith.maximumf %40, %41 : vector<4x2xf32>
    %c0_22 = arith.constant 0 : index
    %c0_23 = arith.constant 0 : index
    %43 = vector.load %arg5[%c0_22, %c0_23] : memref<8x4xf32, #tpu.memory_space<vmem>>, vector<8x4xf32>
    %cst_24 = arith.constant dense<0.000000e+00> : vector<8x2xf32>
    %44 = tpu.matmul %43, %42, %cst_24 {dimension_numbers = #tpu.dot_dimension_numbers<[1], [0], [0], [1], [0, 0, 1, 1], [], []>} : vector<8x4xf32>, vector<4x2xf32>, vector<8x2xf32> -> vector<8x2xf32>
    %45 = vector.extract_strided_slice %44 {offsets = [0, 0], sizes = [8, 1], strides = [1, 1]} : vector<8x2xf32> to vector<8x1xf32>
    %46 = vector.extract_strided_slice %44 {offsets = [0, 1], sizes = [8, 1], strides = [1, 1]} : vector<8x2xf32> to vector<8x1xf32>
    %47 = arith.addf %45, %46 : vector<8x1xf32>
    %48 = arith.negf %47 : vector<8x1xf32>
    %49 = math.exp %48 : vector<8x1xf32>
    %cst_25 = arith.constant 1.000000e+00 : f32
    %50 = vector.broadcast %cst_25 : f32 to vector<8x1xf32>
    %51 = arith.addf %50, %49 : vector<8x1xf32>
    %52 = arith.divf %50, %51 : vector<8x1xf32>
    %53 = vector.broadcast %52 : vector<8x1xf32> to vector<8x256xf32>
    %54 = arith.mulf %31, %53 : vector<8x256xf32>
    %cst_26 = arith.constant dense<0.000000e+00> : vector<256xf32>
    %55 = vector.multi_reduction <add>, %54, %cst_26 [0] : vector<8x256xf32> to vector<256xf32>
    %56 = vector.shape_cast %55 : vector<256xf32> to vector<1x256xf32>
    %cst_27 = arith.constant 8.000000e+00 : f32
    %57 = vector.broadcast %cst_27 : f32 to vector<1x256xf32>
    %58 = arith.divf %56, %57 : vector<1x256xf32>
    %cst_28 = arith.constant dense<0xFF800000> : vector<256xf32>
    %59 = vector.multi_reduction <maximumf>, %54, %cst_28 [0] : vector<8x256xf32> to vector<256xf32>
    %60 = vector.shape_cast %59 : vector<256xf32> to vector<1x256xf32>
    %61 = tpu.concatenate %58, %60 in 0 : vector<1x256xf32>, vector<1x256xf32> -> vector<2x256xf32>
    %cst_29 = arith.constant 0.000000e+00 : f32
    %62 = vector.broadcast %cst_29 : f32 to vector<1x256xf32>
    %c0_30 = arith.constant 0 : index
    %63 = memref.load %arg8[%c0_30] : memref<1xf32, #tpu.memory_space<smem>>
    %64 = vector.broadcast %63 : f32 to vector<1x256xf32>
    %65 = arith.addf %62, %64 : vector<1x256xf32>
    %66 = vector.extract_strided_slice %61 {offsets = [0, 205], sizes = [2, 51], strides = [1, 1]} : vector<2x256xf32> to vector<2x51xf32>
    %67 = vector.extract_strided_slice %61 {offsets = [0, 0], sizes = [2, 205], strides = [1, 1]} : vector<2x256xf32> to vector<2x205xf32>
    %68 = tpu.concatenate %66, %67 in 1 : vector<2x51xf32>, vector<2x205xf32> -> vector<2x256xf32>
    %c0_31 = arith.constant 0 : index
    %c0_32 = arith.constant 0 : index
    %69 = vector.load %arg6[%c0_31, %c0_32] : memref<49x256xf32, #tpu.memory_space<vmem>>, vector<1x256xf32>
    %c0_33 = arith.constant 0 : index
    %70 = memref.load %arg7[%c0_33] : memref<98xf32, #tpu.memory_space<smem>>
    %71 = vector.extract_strided_slice %68 {offsets = [0, 0], sizes = [1, 256], strides = [1, 1]} : vector<2x256xf32> to vector<1x256xf32>
    %72 = vector.broadcast %70 : f32 to vector<1x256xf32>
    %73 = arith.mulf %72, %71 : vector<1x256xf32>
    %c49 = arith.constant 49 : index
    %74 = memref.load %arg7[%c49] : memref<98xf32, #tpu.memory_space<smem>>
    %75 = vector.extract_strided_slice %68 {offsets = [1, 0], sizes = [1, 256], strides = [1, 1]} : vector<2x256xf32> to vector<1x256xf32>
    %76 = vector.broadcast %74 : f32 to vector<1x256xf32>
    %77 = arith.mulf %76, %75 : vector<1x256xf32>
    %78 = arith.addf %73, %77 : vector<1x256xf32>
    %79 = arith.mulf %69, %78 : vector<1x256xf32>
    %80 = arith.addf %65, %79 : vector<1x256xf32>
    %81 = vector.extract_strided_slice %61 {offsets = [0, 206], sizes = [2, 50], strides = [1, 1]} : vector<2x256xf32> to vector<2x50xf32>
    %82 = vector.extract_strided_slice %61 {offsets = [0, 0], sizes = [2, 206], strides = [1, 1]} : vector<2x256xf32> to vector<2x206xf32>
    %83 = tpu.concatenate %81, %82 in 1 : vector<2x50xf32>, vector<2x206xf32> -> vector<2x256xf32>
    %c1 = arith.constant 1 : index
    %c0_34 = arith.constant 0 : index
    %84 = vector.load %arg6[%c1, %c0_34] : memref<49x256xf32, #tpu.memory_space<vmem>>, vector<1x256xf32>
    %c1_35 = arith.constant 1 : index
    %85 = memref.load %arg7[%c1_35] : memref<98xf32, #tpu.memory_space<smem>>
    %86 = vector.extract_strided_slice %83 {offsets = [0, 0], sizes = [1, 256], strides = [1, 1]} : vector<2x256xf32> to vector<1x256xf32>
    %87 = vector.broadcast %85 : f32 to vector<1x256xf32>
    %88 = arith.mulf %87, %86 : vector<1x256xf32>
    %c50 = arith.constant 50 : index
    %89 = memref.load %arg7[%c50] : memref<98xf32, #tpu.memory_space<smem>>
    %90 = vector.extract_strided_slice %83 {offsets = [1, 0], sizes = [1, 256], strides = [1, 1]} : vector<2x256xf32> to vector<1x256xf32>
    %91 = vector.broadcast %89 : f32 to vector<1x256xf32>
    %92 = arith.mulf %91, %90 : vector<1x256xf32>
    %93 = arith.addf %88, %92 : vector<1x256xf32>
    %94 = arith.mulf %84, %93 : vector<1x256xf32>
    %95 = arith.addf %80, %94 : vector<1x256xf32>
    %96 = vector.extract_strided_slice %61 {offsets = [0, 207], sizes = [2, 49], strides = [1, 1]} : vector<2x256xf32> to vector<2x49xf32>
    %97 = vector.extract_strided_slice %61 {offsets = [0, 0], sizes = [2, 207], strides = [1, 1]} : vector<2x256xf32> to vector<2x207xf32>
    %98 = tpu.concatenate %96, %97 in 1 : vector<2x49xf32>, vector<2x207xf32> -> vector<2x256xf32>
    %c2 = arith.constant 2 : index
    %c0_36 = arith.constant 0 : index
    %99 = vector.load %arg6[%c2, %c0_36] : memref<49x256xf32, #tpu.memory_space<vmem>>, vector<1x256xf32>
    %c2_37 = arith.constant 2 : index
    %100 = memref.load %arg7[%c2_37] : memref<98xf32, #tpu.memory_space<smem>>
    %101 = vector.extract_strided_slice %98 {offsets = [0, 0], sizes = [1, 256], strides = [1, 1]} : vector<2x256xf32> to vector<1x256xf32>
    %102 = vector.broadcast %100 : f32 to vector<1x256xf32>
    %103 = arith.mulf %102, %101 : vector<1x256xf32>
    %c51 = arith.constant 51 : index
    %104 = memref.load %arg7[%c51] : memref<98xf32, #tpu.memory_space<smem>>
    %105 = vector.extract_strided_slice %98 {offsets = [1, 0], sizes = [1, 256], strides = [1, 1]} : vector<2x256xf32> to vector<1x256xf32>
    %106 = vector.broadcast %104 : f32 to vector<1x256xf32>
    %107 = arith.mulf %106, %105 : vector<1x256xf32>
    %108 = arith.addf %103, %107 : vector<1x256xf32>
    %109 = arith.mulf %99, %108 : vector<1x256xf32>
    %110 = arith.addf %95, %109 : vector<1x256xf32>
    %111 = vector.extract_strided_slice %61 {offsets = [0, 208], sizes = [2, 48], strides = [1, 1]} : vector<2x256xf32> to vector<2x48xf32>
    %112 = vector.extract_strided_slice %61 {offsets = [0, 0], sizes = [2, 208], strides = [1, 1]} : vector<2x256xf32> to vector<2x208xf32>
    %113 = tpu.concatenate %111, %112 in 1 : vector<2x48xf32>, vector<2x208xf32> -> vector<2x256xf32>
    %c3 = arith.constant 3 : index
    %c0_38 = arith.constant 0 : index
    %114 = vector.load %arg6[%c3, %c0_38] : memref<49x256xf32, #tpu.memory_space<vmem>>, vector<1x256xf32>
    %c3_39 = arith.constant 3 : index
    %115 = memref.load %arg7[%c3_39] : memref<98xf32, #tpu.memory_space<smem>>
    %116 = vector.extract_strided_slice %113 {offsets = [0, 0], sizes = [1, 256], strides = [1, 1]} : vector<2x256xf32> to vector<1x256xf32>
    %117 = vector.broadcast %115 : f32 to vector<1x256xf32>
    %118 = arith.mulf %117, %116 : vector<1x256xf32>
    %c52 = arith.constant 52 : index
    %119 = memref.load %arg7[%c52] : memref<98xf32, #tpu.memory_space<smem>>
    %120 = vector.extract_strided_slice %113 {offsets = [1, 0], sizes = [1, 256], strides = [1, 1]} : vector<2x256xf32> to vector<1x256xf32>
    %121 = vector.broadcast %119 : f32 to vector<1x256xf32>
    %122 = arith.mulf %121, %120 : vector<1x256xf32>
    %123 = arith.addf %118, %122 : vector<1x256xf32>
    %124 = arith.mulf %114, %123 : vector<1x256xf32>
    %125 = arith.addf %110, %124 : vector<1x256xf32>
    %126 = vector.extract_strided_slice %61 {offsets = [0, 209], sizes = [2, 47], strides = [1, 1]} : vector<2x256xf32> to vector<2x47xf32>
    %127 = vector.extract_strided_slice %61 {offsets = [0, 0], sizes = [2, 209], strides = [1, 1]} : vector<2x256xf32> to vector<2x209xf32>
    %128 = tpu.concatenate %126, %127 in 1 : vector<2x47xf32>, vector<2x209xf32> -> vector<2x256xf32>
    %c4 = arith.constant 4 : index
    %c0_40 = arith.constant 0 : index
    %129 = vector.load %arg6[%c4, %c0_40] : memref<49x256xf32, #tpu.memory_space<vmem>>, vector<1x256xf32>
    %c4_41 = arith.constant 4 : index
    %130 = memref.load %arg7[%c4_41] : memref<98xf32, #tpu.memory_space<smem>>
    %131 = vector.extract_strided_slice %128 {offsets = [0, 0], sizes = [1, 256], strides = [1, 1]} : vector<2x256xf32> to vector<1x256xf32>
    %132 = vector.broadcast %130 : f32 to vector<1x256xf32>
    %133 = arith.mulf %132, %131 : vector<1x256xf32>
    %c53 = arith.constant 53 : index
    %134 = memref.load %arg7[%c53] : memref<98xf32, #tpu.memory_space<smem>>
    %135 = vector.extract_strided_slice %128 {offsets = [1, 0], sizes = [1, 256], strides = [1, 1]} : vector<2x256xf32> to vector<1x256xf32>
    %136 = vector.broadcast %134 : f32 to vector<1x256xf32>
    %137 = arith.mulf %136, %135 : vector<1x256xf32>
    %138 = arith.addf %133, %137 : vector<1x256xf32>
    %139 = arith.mulf %129, %138 : vector<1x256xf32>
    %140 = arith.addf %125, %139 : vector<1x256xf32>
    %141 = vector.extract_strided_slice %61 {offsets = [0, 210], sizes = [2, 46], strides = [1, 1]} : vector<2x256xf32> to vector<2x46xf32>
    %142 = vector.extract_strided_slice %61 {offsets = [0, 0], sizes = [2, 210], strides = [1, 1]} : vector<2x256xf32> to vector<2x210xf32>
    %143 = tpu.concatenate %141, %142 in 1 : vector<2x46xf32>, vector<2x210xf32> -> vector<2x256xf32>
    %c5 = arith.constant 5 : index
    %c0_42 = arith.constant 0 : index
    %144 = vector.load %arg6[%c5, %c0_42] : memref<49x256xf32, #tpu.memory_space<vmem>>, vector<1x256xf32>
    %c5_43 = arith.constant 5 : index
    %145 = memref.load %arg7[%c5_43] : memref<98xf32, #tpu.memory_space<smem>>
    %146 = vector.extract_strided_slice %143 {offsets = [0, 0], sizes = [1, 256], strides = [1, 1]} : vector<2x256xf32> to vector<1x256xf32>
    %147 = vector.broadcast %145 : f32 to vector<1x256xf32>
    %148 = arith.mulf %147, %146 : vector<1x256xf32>
    %c54 = arith.constant 54 : index
    %149 = memref.load %arg7[%c54] : memref<98xf32, #tpu.memory_space<smem>>
    %150 = vector.extract_strided_slice %143 {offsets = [1, 0], sizes = [1, 256], strides = [1, 1]} : vector<2x256xf32> to vector<1x256xf32>
    %151 = vector.broadcast %149 : f32 to vector<1x256xf32>
    %152 = arith.mulf %151, %150 : vector<1x256xf32>
    %153 = arith.addf %148, %152 : vector<1x256xf32>
    %154 = arith.mulf %144, %153 : vector<1x256xf32>
    %155 = arith.addf %140, %154 : vector<1x256xf32>
    %156 = vector.extract_strided_slice %61 {offsets = [0, 211], sizes = [2, 45], strides = [1, 1]} : vector<2x256xf32> to vector<2x45xf32>
    %157 = vector.extract_strided_slice %61 {offsets = [0, 0], sizes = [2, 211], strides = [1, 1]} : vector<2x256xf32> to vector<2x211xf32>
    %158 = tpu.concatenate %156, %157 in 1 : vector<2x45xf32>, vector<2x211xf32> -> vector<2x256xf32>
    %c6 = arith.constant 6 : index
    %c0_44 = arith.constant 0 : index
    %159 = vector.load %arg6[%c6, %c0_44] : memref<49x256xf32, #tpu.memory_space<vmem>>, vector<1x256xf32>
    %c6_45 = arith.constant 6 : index
    %160 = memref.load %arg7[%c6_45] : memref<98xf32, #tpu.memory_space<smem>>
    %161 = vector.extract_strided_slice %158 {offsets = [0, 0], sizes = [1, 256], strides = [1, 1]} : vector<2x256xf32> to vector<1x256xf32>
    %162 = vector.broadcast %160 : f32 to vector<1x256xf32>
    %163 = arith.mulf %162, %161 : vector<1x256xf32>
    %c55 = arith.constant 55 : index
    %164 = memref.load %arg7[%c55] : memref<98xf32, #tpu.memory_space<smem>>
    %165 = vector.extract_strided_slice %158 {offsets = [1, 0], sizes = [1, 256], strides = [1, 1]} : vector<2x256xf32> to vector<1x256xf32>
    %166 = vector.broadcast %164 : f32 to vector<1x256xf32>
    %167 = arith.mulf %166, %165 : vector<1x256xf32>
    %168 = arith.addf %163, %167 : vector<1x256xf32>
    %169 = arith.mulf %159, %168 : vector<1x256xf32>
    %170 = arith.addf %155, %169 : vector<1x256xf32>
    %171 = vector.extract_strided_slice %61 {offsets = [0, 221], sizes = [2, 35], strides = [1, 1]} : vector<2x256xf32> to vector<2x35xf32>
    %172 = vector.extract_strided_slice %61 {offsets = [0, 0], sizes = [2, 221], strides = [1, 1]} : vector<2x256xf32> to vector<2x221xf32>
    %173 = tpu.concatenate %171, %172 in 1 : vector<2x35xf32>, vector<2x221xf32> -> vector<2x256xf32>
    %c7 = arith.constant 7 : index
    %c0_46 = arith.constant 0 : index
    %174 = vector.load %arg6[%c7, %c0_46] : memref<49x256xf32, #tpu.memory_space<vmem>>, vector<1x256xf32>
    %c7_47 = arith.constant 7 : index
    %175 = memref.load %arg7[%c7_47] : memref<98xf32, #tpu.memory_space<smem>>
    %176 = vector.extract_strided_slice %173 {offsets = [0, 0], sizes = [1, 256], strides = [1, 1]} : vector<2x256xf32> to vector<1x256xf32>
    %177 = vector.broadcast %175 : f32 to vector<1x256xf32>
    %178 = arith.mulf %177, %176 : vector<1x256xf32>
    %c56 = arith.constant 56 : index
    %179 = memref.load %arg7[%c56] : memref<98xf32, #tpu.memory_space<smem>>
    %180 = vector.extract_strided_slice %173 {offsets = [1, 0], sizes = [1, 256], strides = [1, 1]} : vector<2x256xf32> to vector<1x256xf32>
    %181 = vector.broadcast %179 : f32 to vector<1x256xf32>
    %182 = arith.mulf %181, %180 : vector<1x256xf32>
    %183 = arith.addf %178, %182 : vector<1x256xf32>
    %184 = arith.mulf %174, %183 : vector<1x256xf32>
    %185 = arith.addf %170, %184 : vector<1x256xf32>
    %186 = vector.extract_strided_slice %61 {offsets = [0, 222], sizes = [2, 34], strides = [1, 1]} : vector<2x256xf32> to vector<2x34xf32>
    %187 = vector.extract_strided_slice %61 {offsets = [0, 0], sizes = [2, 222], strides = [1, 1]} : vector<2x256xf32> to vector<2x222xf32>
    %188 = tpu.concatenate %186, %187 in 1 : vector<2x34xf32>, vector<2x222xf32> -> vector<2x256xf32>
    %c8 = arith.constant 8 : index
    %c0_48 = arith.constant 0 : index
    %189 = vector.load %arg6[%c8, %c0_48] : memref<49x256xf32, #tpu.memory_space<vmem>>, vector<1x256xf32>
    %c8_49 = arith.constant 8 : index
    %190 = memref.load %arg7[%c8_49] : memref<98xf32, #tpu.memory_space<smem>>
    %191 = vector.extract_strided_slice %188 {offsets = [0, 0], sizes = [1, 256], strides = [1, 1]} : vector<2x256xf32> to vector<1x256xf32>
    %192 = vector.broadcast %190 : f32 to vector<1x256xf32>
    %193 = arith.mulf %192, %191 : vector<1x256xf32>
    %c57 = arith.constant 57 : index
    %194 = memref.load %arg7[%c57] : memref<98xf32, #tpu.memory_space<smem>>
    %195 = vector.extract_strided_slice %188 {offsets = [1, 0], sizes = [1, 256], strides = [1, 1]} : vector<2x256xf32> to vector<1x256xf32>
    %196 = vector.broadcast %194 : f32 to vector<1x256xf32>
    %197 = arith.mulf %196, %195 : vector<1x256xf32>
    %198 = arith.addf %193, %197 : vector<1x256xf32>
    %199 = arith.mulf %189, %198 : vector<1x256xf32>
    %200 = arith.addf %185, %199 : vector<1x256xf32>
    %201 = vector.extract_strided_slice %61 {offsets = [0, 223], sizes = [2, 33], strides = [1, 1]} : vector<2x256xf32> to vector<2x33xf32>
    %202 = vector.extract_strided_slice %61 {offsets = [0, 0], sizes = [2, 223], strides = [1, 1]} : vector<2x256xf32> to vector<2x223xf32>
    %203 = tpu.concatenate %201, %202 in 1 : vector<2x33xf32>, vector<2x223xf32> -> vector<2x256xf32>
    %c9 = arith.constant 9 : index
    %c0_50 = arith.constant 0 : index
    %204 = vector.load %arg6[%c9, %c0_50] : memref<49x256xf32, #tpu.memory_space<vmem>>, vector<1x256xf32>
    %c9_51 = arith.constant 9 : index
    %205 = memref.load %arg7[%c9_51] : memref<98xf32, #tpu.memory_space<smem>>
    %206 = vector.extract_strided_slice %203 {offsets = [0, 0], sizes = [1, 256], strides = [1, 1]} : vector<2x256xf32> to vector<1x256xf32>
    %207 = vector.broadcast %205 : f32 to vector<1x256xf32>
    %208 = arith.mulf %207, %206 : vector<1x256xf32>
    %c58 = arith.constant 58 : index
    %209 = memref.load %arg7[%c58] : memref<98xf32, #tpu.memory_space<smem>>
    %210 = vector.extract_strided_slice %203 {offsets = [1, 0], sizes = [1, 256], strides = [1, 1]} : vector<2x256xf32> to vector<1x256xf32>
    %211 = vector.broadcast %209 : f32 to vector<1x256xf32>
    %212 = arith.mulf %211, %210 : vector<1x256xf32>
    %213 = arith.addf %208, %212 : vector<1x256xf32>
    %214 = arith.mulf %204, %213 : vector<1x256xf32>
    %215 = arith.addf %200, %214 : vector<1x256xf32>
    %216 = vector.extract_strided_slice %61 {offsets = [0, 224], sizes = [2, 32], strides = [1, 1]} : vector<2x256xf32> to vector<2x32xf32>
    %217 = vector.extract_strided_slice %61 {offsets = [0, 0], sizes = [2, 224], strides = [1, 1]} : vector<2x256xf32> to vector<2x224xf32>
    %218 = tpu.concatenate %216, %217 in 1 : vector<2x32xf32>, vector<2x224xf32> -> vector<2x256xf32>
    %c10 = arith.constant 10 : index
    %c0_52 = arith.constant 0 : index
    %219 = vector.load %arg6[%c10, %c0_52] : memref<49x256xf32, #tpu.memory_space<vmem>>, vector<1x256xf32>
    %c10_53 = arith.constant 10 : index
    %220 = memref.load %arg7[%c10_53] : memref<98xf32, #tpu.memory_space<smem>>
    %221 = vector.extract_strided_slice %218 {offsets = [0, 0], sizes = [1, 256], strides = [1, 1]} : vector<2x256xf32> to vector<1x256xf32>
    %222 = vector.broadcast %220 : f32 to vector<1x256xf32>
    %223 = arith.mulf %222, %221 : vector<1x256xf32>
    %c59 = arith.constant 59 : index
    %224 = memref.load %arg7[%c59] : memref<98xf32, #tpu.memory_space<smem>>
    %225 = vector.extract_strided_slice %218 {offsets = [1, 0], sizes = [1, 256], strides = [1, 1]} : vector<2x256xf32> to vector<1x256xf32>
    %226 = vector.broadcast %224 : f32 to vector<1x256xf32>
    %227 = arith.mulf %226, %225 : vector<1x256xf32>
    %228 = arith.addf %223, %227 : vector<1x256xf32>
    %229 = arith.mulf %219, %228 : vector<1x256xf32>
    %230 = arith.addf %215, %229 : vector<1x256xf32>
    %231 = vector.extract_strided_slice %61 {offsets = [0, 225], sizes = [2, 31], strides = [1, 1]} : vector<2x256xf32> to vector<2x31xf32>
    %232 = vector.extract_strided_slice %61 {offsets = [0, 0], sizes = [2, 225], strides = [1, 1]} : vector<2x256xf32> to vector<2x225xf32>
    %233 = tpu.concatenate %231, %232 in 1 : vector<2x31xf32>, vector<2x225xf32> -> vector<2x256xf32>
    %c11 = arith.constant 11 : index
    %c0_54 = arith.constant 0 : index
    %234 = vector.load %arg6[%c11, %c0_54] : memref<49x256xf32, #tpu.memory_space<vmem>>, vector<1x256xf32>
    %c11_55 = arith.constant 11 : index
    %235 = memref.load %arg7[%c11_55] : memref<98xf32, #tpu.memory_space<smem>>
    %236 = vector.extract_strided_slice %233 {offsets = [0, 0], sizes = [1, 256], strides = [1, 1]} : vector<2x256xf32> to vector<1x256xf32>
    %237 = vector.broadcast %235 : f32 to vector<1x256xf32>
    %238 = arith.mulf %237, %236 : vector<1x256xf32>
    %c60 = arith.constant 60 : index
    %239 = memref.load %arg7[%c60] : memref<98xf32, #tpu.memory_space<smem>>
    %240 = vector.extract_strided_slice %233 {offsets = [1, 0], sizes = [1, 256], strides = [1, 1]} : vector<2x256xf32> to vector<1x256xf32>
    %241 = vector.broadcast %239 : f32 to vector<1x256xf32>
    %242 = arith.mulf %241, %240 : vector<1x256xf32>
    %243 = arith.addf %238, %242 : vector<1x256xf32>
    %244 = arith.mulf %234, %243 : vector<1x256xf32>
    %245 = arith.addf %230, %244 : vector<1x256xf32>
    %246 = vector.extract_strided_slice %61 {offsets = [0, 226], sizes = [2, 30], strides = [1, 1]} : vector<2x256xf32> to vector<2x30xf32>
    %247 = vector.extract_strided_slice %61 {offsets = [0, 0], sizes = [2, 226], strides = [1, 1]} : vector<2x256xf32> to vector<2x226xf32>
    %248 = tpu.concatenate %246, %247 in 1 : vector<2x30xf32>, vector<2x226xf32> -> vector<2x256xf32>
    %c12 = arith.constant 12 : index
    %c0_56 = arith.constant 0 : index
    %249 = vector.load %arg6[%c12, %c0_56] : memref<49x256xf32, #tpu.memory_space<vmem>>, vector<1x256xf32>
    %c12_57 = arith.constant 12 : index
    %250 = memref.load %arg7[%c12_57] : memref<98xf32, #tpu.memory_space<smem>>
    %251 = vector.extract_strided_slice %248 {offsets = [0, 0], sizes = [1, 256], strides = [1, 1]} : vector<2x256xf32> to vector<1x256xf32>
    %252 = vector.broadcast %250 : f32 to vector<1x256xf32>
    %253 = arith.mulf %252, %251 : vector<1x256xf32>
    %c61 = arith.constant 61 : index
    %254 = memref.load %arg7[%c61] : memref<98xf32, #tpu.memory_space<smem>>
    %255 = vector.extract_strided_slice %248 {offsets = [1, 0], sizes = [1, 256], strides = [1, 1]} : vector<2x256xf32> to vector<1x256xf32>
    %256 = vector.broadcast %254 : f32 to vector<1x256xf32>
    %257 = arith.mulf %256, %255 : vector<1x256xf32>
    %258 = arith.addf %253, %257 : vector<1x256xf32>
    %259 = arith.mulf %249, %258 : vector<1x256xf32>
    %260 = arith.addf %245, %259 : vector<1x256xf32>
    %261 = vector.extract_strided_slice %61 {offsets = [0, 227], sizes = [2, 29], strides = [1, 1]} : vector<2x256xf32> to vector<2x29xf32>
    %262 = vector.extract_strided_slice %61 {offsets = [0, 0], sizes = [2, 227], strides = [1, 1]} : vector<2x256xf32> to vector<2x227xf32>
    %263 = tpu.concatenate %261, %262 in 1 : vector<2x29xf32>, vector<2x227xf32> -> vector<2x256xf32>
    %c13 = arith.constant 13 : index
    %c0_58 = arith.constant 0 : index
    %264 = vector.load %arg6[%c13, %c0_58] : memref<49x256xf32, #tpu.memory_space<vmem>>, vector<1x256xf32>
    %c13_59 = arith.constant 13 : index
    %265 = memref.load %arg7[%c13_59] : memref<98xf32, #tpu.memory_space<smem>>
    %266 = vector.extract_strided_slice %263 {offsets = [0, 0], sizes = [1, 256], strides = [1, 1]} : vector<2x256xf32> to vector<1x256xf32>
    %267 = vector.broadcast %265 : f32 to vector<1x256xf32>
    %268 = arith.mulf %267, %266 : vector<1x256xf32>
    %c62 = arith.constant 62 : index
    %269 = memref.load %arg7[%c62] : memref<98xf32, #tpu.memory_space<smem>>
    %270 = vector.extract_strided_slice %263 {offsets = [1, 0], sizes = [1, 256], strides = [1, 1]} : vector<2x256xf32> to vector<1x256xf32>
    %271 = vector.broadcast %269 : f32 to vector<1x256xf32>
    %272 = arith.mulf %271, %270 : vector<1x256xf32>
    %273 = arith.addf %268, %272 : vector<1x256xf32>
    %274 = arith.mulf %264, %273 : vector<1x256xf32>
    %275 = arith.addf %260, %274 : vector<1x256xf32>
    %276 = vector.extract_strided_slice %61 {offsets = [0, 237], sizes = [2, 19], strides = [1, 1]} : vector<2x256xf32> to vector<2x19xf32>
    %277 = vector.extract_strided_slice %61 {offsets = [0, 0], sizes = [2, 237], strides = [1, 1]} : vector<2x256xf32> to vector<2x237xf32>
    %278 = tpu.concatenate %276, %277 in 1 : vector<2x19xf32>, vector<2x237xf32> -> vector<2x256xf32>
    %c14 = arith.constant 14 : index
    %c0_60 = arith.constant 0 : index
    %279 = vector.load %arg6[%c14, %c0_60] : memref<49x256xf32, #tpu.memory_space<vmem>>, vector<1x256xf32>
    %c14_61 = arith.constant 14 : index
    %280 = memref.load %arg7[%c14_61] : memref<98xf32, #tpu.memory_space<smem>>
    %281 = vector.extract_strided_slice %278 {offsets = [0, 0], sizes = [1, 256], strides = [1, 1]} : vector<2x256xf32> to vector<1x256xf32>
    %282 = vector.broadcast %280 : f32 to vector<1x256xf32>
    %283 = arith.mulf %282, %281 : vector<1x256xf32>
    %c63 = arith.constant 63 : index
    %284 = memref.load %arg7[%c63] : memref<98xf32, #tpu.memory_space<smem>>
    %285 = vector.extract_strided_slice %278 {offsets = [1, 0], sizes = [1, 256], strides = [1, 1]} : vector<2x256xf32> to vector<1x256xf32>
    %286 = vector.broadcast %284 : f32 to vector<1x256xf32>
    %287 = arith.mulf %286, %285 : vector<1x256xf32>
    %288 = arith.addf %283, %287 : vector<1x256xf32>
    %289 = arith.mulf %279, %288 : vector<1x256xf32>
    %290 = arith.addf %275, %289 : vector<1x256xf32>
    %291 = vector.extract_strided_slice %61 {offsets = [0, 238], sizes = [2, 18], strides = [1, 1]} : vector<2x256xf32> to vector<2x18xf32>
    %292 = vector.extract_strided_slice %61 {offsets = [0, 0], sizes = [2, 238], strides = [1, 1]} : vector<2x256xf32> to vector<2x238xf32>
    %293 = tpu.concatenate %291, %292 in 1 : vector<2x18xf32>, vector<2x238xf32> -> vector<2x256xf32>
    %c15 = arith.constant 15 : index
    %c0_62 = arith.constant 0 : index
    %294 = vector.load %arg6[%c15, %c0_62] : memref<49x256xf32, #tpu.memory_space<vmem>>, vector<1x256xf32>
    %c15_63 = arith.constant 15 : index
    %295 = memref.load %arg7[%c15_63] : memref<98xf32, #tpu.memory_space<smem>>
    %296 = vector.extract_strided_slice %293 {offsets = [0, 0], sizes = [1, 256], strides = [1, 1]} : vector<2x256xf32> to vector<1x256xf32>
    %297 = vector.broadcast %295 : f32 to vector<1x256xf32>
    %298 = arith.mulf %297, %296 : vector<1x256xf32>
    %c64 = arith.constant 64 : index
    %299 = memref.load %arg7[%c64] : memref<98xf32, #tpu.memory_space<smem>>
    %300 = vector.extract_strided_slice %293 {offsets = [1, 0], sizes = [1, 256], strides = [1, 1]} : vector<2x256xf32> to vector<1x256xf32>
    %301 = vector.broadcast %299 : f32 to vector<1x256xf32>
    %302 = arith.mulf %301, %300 : vector<1x256xf32>
    %303 = arith.addf %298, %302 : vector<1x256xf32>
    %304 = arith.mulf %294, %303 : vector<1x256xf32>
    %305 = arith.addf %290, %304 : vector<1x256xf32>
    %306 = vector.extract_strided_slice %61 {offsets = [0, 239], sizes = [2, 17], strides = [1, 1]} : vector<2x256xf32> to vector<2x17xf32>
    %307 = vector.extract_strided_slice %61 {offsets = [0, 0], sizes = [2, 239], strides = [1, 1]} : vector<2x256xf32> to vector<2x239xf32>
    %308 = tpu.concatenate %306, %307 in 1 : vector<2x17xf32>, vector<2x239xf32> -> vector<2x256xf32>
    %c16 = arith.constant 16 : index
    %c0_64 = arith.constant 0 : index
    %309 = vector.load %arg6[%c16, %c0_64] : memref<49x256xf32, #tpu.memory_space<vmem>>, vector<1x256xf32>
    %c16_65 = arith.constant 16 : index
    %310 = memref.load %arg7[%c16_65] : memref<98xf32, #tpu.memory_space<smem>>
    %311 = vector.extract_strided_slice %308 {offsets = [0, 0], sizes = [1, 256], strides = [1, 1]} : vector<2x256xf32> to vector<1x256xf32>
    %312 = vector.broadcast %310 : f32 to vector<1x256xf32>
    %313 = arith.mulf %312, %311 : vector<1x256xf32>
    %c65 = arith.constant 65 : index
    %314 = memref.load %arg7[%c65] : memref<98xf32, #tpu.memory_space<smem>>
    %315 = vector.extract_strided_slice %308 {offsets = [1, 0], sizes = [1, 256], strides = [1, 1]} : vector<2x256xf32> to vector<1x256xf32>
    %316 = vector.broadcast %314 : f32 to vector<1x256xf32>
    %317 = arith.mulf %316, %315 : vector<1x256xf32>
    %318 = arith.addf %313, %317 : vector<1x256xf32>
    %319 = arith.mulf %309, %318 : vector<1x256xf32>
    %320 = arith.addf %305, %319 : vector<1x256xf32>
    %321 = vector.extract_strided_slice %61 {offsets = [0, 240], sizes = [2, 16], strides = [1, 1]} : vector<2x256xf32> to vector<2x16xf32>
    %322 = vector.extract_strided_slice %61 {offsets = [0, 0], sizes = [2, 240], strides = [1, 1]} : vector<2x256xf32> to vector<2x240xf32>
    %323 = tpu.concatenate %321, %322 in 1 : vector<2x16xf32>, vector<2x240xf32> -> vector<2x256xf32>
    %c17 = arith.constant 17 : index
    %c0_66 = arith.constant 0 : index
    %324 = vector.load %arg6[%c17, %c0_66] : memref<49x256xf32, #tpu.memory_space<vmem>>, vector<1x256xf32>
    %c17_67 = arith.constant 17 : index
    %325 = memref.load %arg7[%c17_67] : memref<98xf32, #tpu.memory_space<smem>>
    %326 = vector.extract_strided_slice %323 {offsets = [0, 0], sizes = [1, 256], strides = [1, 1]} : vector<2x256xf32> to vector<1x256xf32>
    %327 = vector.broadcast %325 : f32 to vector<1x256xf32>
    %328 = arith.mulf %327, %326 : vector<1x256xf32>
    %c66 = arith.constant 66 : index
    %329 = memref.load %arg7[%c66] : memref<98xf32, #tpu.memory_space<smem>>
    %330 = vector.extract_strided_slice %323 {offsets = [1, 0], sizes = [1, 256], strides = [1, 1]} : vector<2x256xf32> to vector<1x256xf32>
    %331 = vector.broadcast %329 : f32 to vector<1x256xf32>
    %332 = arith.mulf %331, %330 : vector<1x256xf32>
    %333 = arith.addf %328, %332 : vector<1x256xf32>
    %334 = arith.mulf %324, %333 : vector<1x256xf32>
    %335 = arith.addf %320, %334 : vector<1x256xf32>
    %336 = vector.extract_strided_slice %61 {offsets = [0, 241], sizes = [2, 15], strides = [1, 1]} : vector<2x256xf32> to vector<2x15xf32>
    %337 = vector.extract_strided_slice %61 {offsets = [0, 0], sizes = [2, 241], strides = [1, 1]} : vector<2x256xf32> to vector<2x241xf32>
    %338 = tpu.concatenate %336, %337 in 1 : vector<2x15xf32>, vector<2x241xf32> -> vector<2x256xf32>
    %c18 = arith.constant 18 : index
    %c0_68 = arith.constant 0 : index
    %339 = vector.load %arg6[%c18, %c0_68] : memref<49x256xf32, #tpu.memory_space<vmem>>, vector<1x256xf32>
    %c18_69 = arith.constant 18 : index
    %340 = memref.load %arg7[%c18_69] : memref<98xf32, #tpu.memory_space<smem>>
    %341 = vector.extract_strided_slice %338 {offsets = [0, 0], sizes = [1, 256], strides = [1, 1]} : vector<2x256xf32> to vector<1x256xf32>
    %342 = vector.broadcast %340 : f32 to vector<1x256xf32>
    %343 = arith.mulf %342, %341 : vector<1x256xf32>
    %c67 = arith.constant 67 : index
    %344 = memref.load %arg7[%c67] : memref<98xf32, #tpu.memory_space<smem>>
    %345 = vector.extract_strided_slice %338 {offsets = [1, 0], sizes = [1, 256], strides = [1, 1]} : vector<2x256xf32> to vector<1x256xf32>
    %346 = vector.broadcast %344 : f32 to vector<1x256xf32>
    %347 = arith.mulf %346, %345 : vector<1x256xf32>
    %348 = arith.addf %343, %347 : vector<1x256xf32>
    %349 = arith.mulf %339, %348 : vector<1x256xf32>
    %350 = arith.addf %335, %349 : vector<1x256xf32>
    %351 = vector.extract_strided_slice %61 {offsets = [0, 242], sizes = [2, 14], strides = [1, 1]} : vector<2x256xf32> to vector<2x14xf32>
    %352 = vector.extract_strided_slice %61 {offsets = [0, 0], sizes = [2, 242], strides = [1, 1]} : vector<2x256xf32> to vector<2x242xf32>
    %353 = tpu.concatenate %351, %352 in 1 : vector<2x14xf32>, vector<2x242xf32> -> vector<2x256xf32>
    %c19 = arith.constant 19 : index
    %c0_70 = arith.constant 0 : index
    %354 = vector.load %arg6[%c19, %c0_70] : memref<49x256xf32, #tpu.memory_space<vmem>>, vector<1x256xf32>
    %c19_71 = arith.constant 19 : index
    %355 = memref.load %arg7[%c19_71] : memref<98xf32, #tpu.memory_space<smem>>
    %356 = vector.extract_strided_slice %353 {offsets = [0, 0], sizes = [1, 256], strides = [1, 1]} : vector<2x256xf32> to vector<1x256xf32>
    %357 = vector.broadcast %355 : f32 to vector<1x256xf32>
    %358 = arith.mulf %357, %356 : vector<1x256xf32>
    %c68 = arith.constant 68 : index
    %359 = memref.load %arg7[%c68] : memref<98xf32, #tpu.memory_space<smem>>
    %360 = vector.extract_strided_slice %353 {offsets = [1, 0], sizes = [1, 256], strides = [1, 1]} : vector<2x256xf32> to vector<1x256xf32>
    %361 = vector.broadcast %359 : f32 to vector<1x256xf32>
    %362 = arith.mulf %361, %360 : vector<1x256xf32>
    %363 = arith.addf %358, %362 : vector<1x256xf32>
    %364 = arith.mulf %354, %363 : vector<1x256xf32>
    %365 = arith.addf %350, %364 : vector<1x256xf32>
    %366 = vector.extract_strided_slice %61 {offsets = [0, 243], sizes = [2, 13], strides = [1, 1]} : vector<2x256xf32> to vector<2x13xf32>
    %367 = vector.extract_strided_slice %61 {offsets = [0, 0], sizes = [2, 243], strides = [1, 1]} : vector<2x256xf32> to vector<2x243xf32>
    %368 = tpu.concatenate %366, %367 in 1 : vector<2x13xf32>, vector<2x243xf32> -> vector<2x256xf32>
    %c20 = arith.constant 20 : index
    %c0_72 = arith.constant 0 : index
    %369 = vector.load %arg6[%c20, %c0_72] : memref<49x256xf32, #tpu.memory_space<vmem>>, vector<1x256xf32>
    %c20_73 = arith.constant 20 : index
    %370 = memref.load %arg7[%c20_73] : memref<98xf32, #tpu.memory_space<smem>>
    %371 = vector.extract_strided_slice %368 {offsets = [0, 0], sizes = [1, 256], strides = [1, 1]} : vector<2x256xf32> to vector<1x256xf32>
    %372 = vector.broadcast %370 : f32 to vector<1x256xf32>
    %373 = arith.mulf %372, %371 : vector<1x256xf32>
    %c69 = arith.constant 69 : index
    %374 = memref.load %arg7[%c69] : memref<98xf32, #tpu.memory_space<smem>>
    %375 = vector.extract_strided_slice %368 {offsets = [1, 0], sizes = [1, 256], strides = [1, 1]} : vector<2x256xf32> to vector<1x256xf32>
    %376 = vector.broadcast %374 : f32 to vector<1x256xf32>
    %377 = arith.mulf %376, %375 : vector<1x256xf32>
    %378 = arith.addf %373, %377 : vector<1x256xf32>
    %379 = arith.mulf %369, %378 : vector<1x256xf32>
    %380 = arith.addf %365, %379 : vector<1x256xf32>
    %381 = vector.extract_strided_slice %61 {offsets = [0, 253], sizes = [2, 3], strides = [1, 1]} : vector<2x256xf32> to vector<2x3xf32>
    %382 = vector.extract_strided_slice %61 {offsets = [0, 0], sizes = [2, 253], strides = [1, 1]} : vector<2x256xf32> to vector<2x253xf32>
    %383 = tpu.concatenate %381, %382 in 1 : vector<2x3xf32>, vector<2x253xf32> -> vector<2x256xf32>
    %c21 = arith.constant 21 : index
    %c0_74 = arith.constant 0 : index
    %384 = vector.load %arg6[%c21, %c0_74] : memref<49x256xf32, #tpu.memory_space<vmem>>, vector<1x256xf32>
    %c21_75 = arith.constant 21 : index
    %385 = memref.load %arg7[%c21_75] : memref<98xf32, #tpu.memory_space<smem>>
    %386 = vector.extract_strided_slice %383 {offsets = [0, 0], sizes = [1, 256], strides = [1, 1]} : vector<2x256xf32> to vector<1x256xf32>
    %387 = vector.broadcast %385 : f32 to vector<1x256xf32>
    %388 = arith.mulf %387, %386 : vector<1x256xf32>
    %c70 = arith.constant 70 : index
    %389 = memref.load %arg7[%c70] : memref<98xf32, #tpu.memory_space<smem>>
    %390 = vector.extract_strided_slice %383 {offsets = [1, 0], sizes = [1, 256], strides = [1, 1]} : vector<2x256xf32> to vector<1x256xf32>
    %391 = vector.broadcast %389 : f32 to vector<1x256xf32>
    %392 = arith.mulf %391, %390 : vector<1x256xf32>
    %393 = arith.addf %388, %392 : vector<1x256xf32>
    %394 = arith.mulf %384, %393 : vector<1x256xf32>
    %395 = arith.addf %380, %394 : vector<1x256xf32>
    %396 = vector.extract_strided_slice %61 {offsets = [0, 254], sizes = [2, 2], strides = [1, 1]} : vector<2x256xf32> to vector<2x2xf32>
    %397 = vector.extract_strided_slice %61 {offsets = [0, 0], sizes = [2, 254], strides = [1, 1]} : vector<2x256xf32> to vector<2x254xf32>
    %398 = tpu.concatenate %396, %397 in 1 : vector<2x2xf32>, vector<2x254xf32> -> vector<2x256xf32>
    %c22 = arith.constant 22 : index
    %c0_76 = arith.constant 0 : index
    %399 = vector.load %arg6[%c22, %c0_76] : memref<49x256xf32, #tpu.memory_space<vmem>>, vector<1x256xf32>
    %c22_77 = arith.constant 22 : index
    %400 = memref.load %arg7[%c22_77] : memref<98xf32, #tpu.memory_space<smem>>
    %401 = vector.extract_strided_slice %398 {offsets = [0, 0], sizes = [1, 256], strides = [1, 1]} : vector<2x256xf32> to vector<1x256xf32>
    %402 = vector.broadcast %400 : f32 to vector<1x256xf32>
    %403 = arith.mulf %402, %401 : vector<1x256xf32>
    %c71 = arith.constant 71 : index
    %404 = memref.load %arg7[%c71] : memref<98xf32, #tpu.memory_space<smem>>
    %405 = vector.extract_strided_slice %398 {offsets = [1, 0], sizes = [1, 256], strides = [1, 1]} : vector<2x256xf32> to vector<1x256xf32>
    %406 = vector.broadcast %404 : f32 to vector<1x256xf32>
    %407 = arith.mulf %406, %405 : vector<1x256xf32>
    %408 = arith.addf %403, %407 : vector<1x256xf32>
    %409 = arith.mulf %399, %408 : vector<1x256xf32>
    %410 = arith.addf %395, %409 : vector<1x256xf32>
    %411 = vector.extract_strided_slice %61 {offsets = [0, 255], sizes = [2, 1], strides = [1, 1]} : vector<2x256xf32> to vector<2x1xf32>
    %412 = vector.extract_strided_slice %61 {offsets = [0, 0], sizes = [2, 255], strides = [1, 1]} : vector<2x256xf32> to vector<2x255xf32>
    %413 = tpu.concatenate %411, %412 in 1 : vector<2x1xf32>, vector<2x255xf32> -> vector<2x256xf32>
    %c23 = arith.constant 23 : index
    %c0_78 = arith.constant 0 : index
    %414 = vector.load %arg6[%c23, %c0_78] : memref<49x256xf32, #tpu.memory_space<vmem>>, vector<1x256xf32>
    %c23_79 = arith.constant 23 : index
    %415 = memref.load %arg7[%c23_79] : memref<98xf32, #tpu.memory_space<smem>>
    %416 = vector.extract_strided_slice %413 {offsets = [0, 0], sizes = [1, 256], strides = [1, 1]} : vector<2x256xf32> to vector<1x256xf32>
    %417 = vector.broadcast %415 : f32 to vector<1x256xf32>
    %418 = arith.mulf %417, %416 : vector<1x256xf32>
    %c72 = arith.constant 72 : index
    %419 = memref.load %arg7[%c72] : memref<98xf32, #tpu.memory_space<smem>>
    %420 = vector.extract_strided_slice %413 {offsets = [1, 0], sizes = [1, 256], strides = [1, 1]} : vector<2x256xf32> to vector<1x256xf32>
    %421 = vector.broadcast %419 : f32 to vector<1x256xf32>
    %422 = arith.mulf %421, %420 : vector<1x256xf32>
    %423 = arith.addf %418, %422 : vector<1x256xf32>
    %424 = arith.mulf %414, %423 : vector<1x256xf32>
    %425 = arith.addf %410, %424 : vector<1x256xf32>
    %c24 = arith.constant 24 : index
    %c0_80 = arith.constant 0 : index
    %426 = vector.load %arg6[%c24, %c0_80] : memref<49x256xf32, #tpu.memory_space<vmem>>, vector<1x256xf32>
    %c24_81 = arith.constant 24 : index
    %427 = memref.load %arg7[%c24_81] : memref<98xf32, #tpu.memory_space<smem>>
    %428 = vector.extract_strided_slice %61 {offsets = [0, 0], sizes = [1, 256], strides = [1, 1]} : vector<2x256xf32> to vector<1x256xf32>
    %429 = vector.broadcast %427 : f32 to vector<1x256xf32>
    %430 = arith.mulf %429, %428 : vector<1x256xf32>
    %c73 = arith.constant 73 : index
    %431 = memref.load %arg7[%c73] : memref<98xf32, #tpu.memory_space<smem>>
    %432 = vector.extract_strided_slice %61 {offsets = [1, 0], sizes = [1, 256], strides = [1, 1]} : vector<2x256xf32> to vector<1x256xf32>
    %433 = vector.broadcast %431 : f32 to vector<1x256xf32>
    %434 = arith.mulf %433, %432 : vector<1x256xf32>
    %435 = arith.addf %430, %434 : vector<1x256xf32>
    %436 = arith.mulf %426, %435 : vector<1x256xf32>
    %437 = arith.addf %425, %436 : vector<1x256xf32>
    %438 = vector.extract_strided_slice %61 {offsets = [0, 1], sizes = [2, 255], strides = [1, 1]} : vector<2x256xf32> to vector<2x255xf32>
    %439 = vector.extract_strided_slice %61 {offsets = [0, 0], sizes = [2, 1], strides = [1, 1]} : vector<2x256xf32> to vector<2x1xf32>
    %440 = tpu.concatenate %438, %439 in 1 : vector<2x255xf32>, vector<2x1xf32> -> vector<2x256xf32>
    %c25 = arith.constant 25 : index
    %c0_82 = arith.constant 0 : index
    %441 = vector.load %arg6[%c25, %c0_82] : memref<49x256xf32, #tpu.memory_space<vmem>>, vector<1x256xf32>
    %c25_83 = arith.constant 25 : index
    %442 = memref.load %arg7[%c25_83] : memref<98xf32, #tpu.memory_space<smem>>
    %443 = vector.extract_strided_slice %440 {offsets = [0, 0], sizes = [1, 256], strides = [1, 1]} : vector<2x256xf32> to vector<1x256xf32>
    %444 = vector.broadcast %442 : f32 to vector<1x256xf32>
    %445 = arith.mulf %444, %443 : vector<1x256xf32>
    %c74 = arith.constant 74 : index
    %446 = memref.load %arg7[%c74] : memref<98xf32, #tpu.memory_space<smem>>
    %447 = vector.extract_strided_slice %440 {offsets = [1, 0], sizes = [1, 256], strides = [1, 1]} : vector<2x256xf32> to vector<1x256xf32>
    %448 = vector.broadcast %446 : f32 to vector<1x256xf32>
    %449 = arith.mulf %448, %447 : vector<1x256xf32>
    %450 = arith.addf %445, %449 : vector<1x256xf32>
    %451 = arith.mulf %441, %450 : vector<1x256xf32>
    %452 = arith.addf %437, %451 : vector<1x256xf32>
    %453 = vector.extract_strided_slice %61 {offsets = [0, 2], sizes = [2, 254], strides = [1, 1]} : vector<2x256xf32> to vector<2x254xf32>
    %454 = vector.extract_strided_slice %61 {offsets = [0, 0], sizes = [2, 2], strides = [1, 1]} : vector<2x256xf32> to vector<2x2xf32>
    %455 = tpu.concatenate %453, %454 in 1 : vector<2x254xf32>, vector<2x2xf32> -> vector<2x256xf32>
    %c26 = arith.constant 26 : index
    %c0_84 = arith.constant 0 : index
    %456 = vector.load %arg6[%c26, %c0_84] : memref<49x256xf32, #tpu.memory_space<vmem>>, vector<1x256xf32>
    %c26_85 = arith.constant 26 : index
    %457 = memref.load %arg7[%c26_85] : memref<98xf32, #tpu.memory_space<smem>>
    %458 = vector.extract_strided_slice %455 {offsets = [0, 0], sizes = [1, 256], strides = [1, 1]} : vector<2x256xf32> to vector<1x256xf32>
    %459 = vector.broadcast %457 : f32 to vector<1x256xf32>
    %460 = arith.mulf %459, %458 : vector<1x256xf32>
    %c75 = arith.constant 75 : index
    %461 = memref.load %arg7[%c75] : memref<98xf32, #tpu.memory_space<smem>>
    %462 = vector.extract_strided_slice %455 {offsets = [1, 0], sizes = [1, 256], strides = [1, 1]} : vector<2x256xf32> to vector<1x256xf32>
    %463 = vector.broadcast %461 : f32 to vector<1x256xf32>
    %464 = arith.mulf %463, %462 : vector<1x256xf32>
    %465 = arith.addf %460, %464 : vector<1x256xf32>
    %466 = arith.mulf %456, %465 : vector<1x256xf32>
    %467 = arith.addf %452, %466 : vector<1x256xf32>
    %468 = vector.extract_strided_slice %61 {offsets = [0, 3], sizes = [2, 253], strides = [1, 1]} : vector<2x256xf32> to vector<2x253xf32>
    %469 = vector.extract_strided_slice %61 {offsets = [0, 0], sizes = [2, 3], strides = [1, 1]} : vector<2x256xf32> to vector<2x3xf32>
    %470 = tpu.concatenate %468, %469 in 1 : vector<2x253xf32>, vector<2x3xf32> -> vector<2x256xf32>
    %c27 = arith.constant 27 : index
    %c0_86 = arith.constant 0 : index
    %471 = vector.load %arg6[%c27, %c0_86] : memref<49x256xf32, #tpu.memory_space<vmem>>, vector<1x256xf32>
    %c27_87 = arith.constant 27 : index
    %472 = memref.load %arg7[%c27_87] : memref<98xf32, #tpu.memory_space<smem>>
    %473 = vector.extract_strided_slice %470 {offsets = [0, 0], sizes = [1, 256], strides = [1, 1]} : vector<2x256xf32> to vector<1x256xf32>
    %474 = vector.broadcast %472 : f32 to vector<1x256xf32>
    %475 = arith.mulf %474, %473 : vector<1x256xf32>
    %c76 = arith.constant 76 : index
    %476 = memref.load %arg7[%c76] : memref<98xf32, #tpu.memory_space<smem>>
    %477 = vector.extract_strided_slice %470 {offsets = [1, 0], sizes = [1, 256], strides = [1, 1]} : vector<2x256xf32> to vector<1x256xf32>
    %478 = vector.broadcast %476 : f32 to vector<1x256xf32>
    %479 = arith.mulf %478, %477 : vector<1x256xf32>
    %480 = arith.addf %475, %479 : vector<1x256xf32>
    %481 = arith.mulf %471, %480 : vector<1x256xf32>
    %482 = arith.addf %467, %481 : vector<1x256xf32>
    %483 = vector.extract_strided_slice %61 {offsets = [0, 13], sizes = [2, 243], strides = [1, 1]} : vector<2x256xf32> to vector<2x243xf32>
    %484 = vector.extract_strided_slice %61 {offsets = [0, 0], sizes = [2, 13], strides = [1, 1]} : vector<2x256xf32> to vector<2x13xf32>
    %485 = tpu.concatenate %483, %484 in 1 : vector<2x243xf32>, vector<2x13xf32> -> vector<2x256xf32>
    %c28 = arith.constant 28 : index
    %c0_88 = arith.constant 0 : index
    %486 = vector.load %arg6[%c28, %c0_88] : memref<49x256xf32, #tpu.memory_space<vmem>>, vector<1x256xf32>
    %c28_89 = arith.constant 28 : index
    %487 = memref.load %arg7[%c28_89] : memref<98xf32, #tpu.memory_space<smem>>
    %488 = vector.extract_strided_slice %485 {offsets = [0, 0], sizes = [1, 256], strides = [1, 1]} : vector<2x256xf32> to vector<1x256xf32>
    %489 = vector.broadcast %487 : f32 to vector<1x256xf32>
    %490 = arith.mulf %489, %488 : vector<1x256xf32>
    %c77 = arith.constant 77 : index
    %491 = memref.load %arg7[%c77] : memref<98xf32, #tpu.memory_space<smem>>
    %492 = vector.extract_strided_slice %485 {offsets = [1, 0], sizes = [1, 256], strides = [1, 1]} : vector<2x256xf32> to vector<1x256xf32>
    %493 = vector.broadcast %491 : f32 to vector<1x256xf32>
    %494 = arith.mulf %493, %492 : vector<1x256xf32>
    %495 = arith.addf %490, %494 : vector<1x256xf32>
    %496 = arith.mulf %486, %495 : vector<1x256xf32>
    %497 = arith.addf %482, %496 : vector<1x256xf32>
    %498 = vector.extract_strided_slice %61 {offsets = [0, 14], sizes = [2, 242], strides = [1, 1]} : vector<2x256xf32> to vector<2x242xf32>
    %499 = vector.extract_strided_slice %61 {offsets = [0, 0], sizes = [2, 14], strides = [1, 1]} : vector<2x256xf32> to vector<2x14xf32>
    %500 = tpu.concatenate %498, %499 in 1 : vector<2x242xf32>, vector<2x14xf32> -> vector<2x256xf32>
    %c29 = arith.constant 29 : index
    %c0_90 = arith.constant 0 : index
    %501 = vector.load %arg6[%c29, %c0_90] : memref<49x256xf32, #tpu.memory_space<vmem>>, vector<1x256xf32>
    %c29_91 = arith.constant 29 : index
    %502 = memref.load %arg7[%c29_91] : memref<98xf32, #tpu.memory_space<smem>>
    %503 = vector.extract_strided_slice %500 {offsets = [0, 0], sizes = [1, 256], strides = [1, 1]} : vector<2x256xf32> to vector<1x256xf32>
    %504 = vector.broadcast %502 : f32 to vector<1x256xf32>
    %505 = arith.mulf %504, %503 : vector<1x256xf32>
    %c78 = arith.constant 78 : index
    %506 = memref.load %arg7[%c78] : memref<98xf32, #tpu.memory_space<smem>>
    %507 = vector.extract_strided_slice %500 {offsets = [1, 0], sizes = [1, 256], strides = [1, 1]} : vector<2x256xf32> to vector<1x256xf32>
    %508 = vector.broadcast %506 : f32 to vector<1x256xf32>
    %509 = arith.mulf %508, %507 : vector<1x256xf32>
    %510 = arith.addf %505, %509 : vector<1x256xf32>
    %511 = arith.mulf %501, %510 : vector<1x256xf32>
    %512 = arith.addf %497, %511 : vector<1x256xf32>
    %513 = vector.extract_strided_slice %61 {offsets = [0, 15], sizes = [2, 241], strides = [1, 1]} : vector<2x256xf32> to vector<2x241xf32>
    %514 = vector.extract_strided_slice %61 {offsets = [0, 0], sizes = [2, 15], strides = [1, 1]} : vector<2x256xf32> to vector<2x15xf32>
    %515 = tpu.concatenate %513, %514 in 1 : vector<2x241xf32>, vector<2x15xf32> -> vector<2x256xf32>
    %c30 = arith.constant 30 : index
    %c0_92 = arith.constant 0 : index
    %516 = vector.load %arg6[%c30, %c0_92] : memref<49x256xf32, #tpu.memory_space<vmem>>, vector<1x256xf32>
    %c30_93 = arith.constant 30 : index
    %517 = memref.load %arg7[%c30_93] : memref<98xf32, #tpu.memory_space<smem>>
    %518 = vector.extract_strided_slice %515 {offsets = [0, 0], sizes = [1, 256], strides = [1, 1]} : vector<2x256xf32> to vector<1x256xf32>
    %519 = vector.broadcast %517 : f32 to vector<1x256xf32>
    %520 = arith.mulf %519, %518 : vector<1x256xf32>
    %c79 = arith.constant 79 : index
    %521 = memref.load %arg7[%c79] : memref<98xf32, #tpu.memory_space<smem>>
    %522 = vector.extract_strided_slice %515 {offsets = [1, 0], sizes = [1, 256], strides = [1, 1]} : vector<2x256xf32> to vector<1x256xf32>
    %523 = vector.broadcast %521 : f32 to vector<1x256xf32>
    %524 = arith.mulf %523, %522 : vector<1x256xf32>
    %525 = arith.addf %520, %524 : vector<1x256xf32>
    %526 = arith.mulf %516, %525 : vector<1x256xf32>
    %527 = arith.addf %512, %526 : vector<1x256xf32>
    %528 = vector.extract_strided_slice %61 {offsets = [0, 16], sizes = [2, 240], strides = [1, 1]} : vector<2x256xf32> to vector<2x240xf32>
    %529 = vector.extract_strided_slice %61 {offsets = [0, 0], sizes = [2, 16], strides = [1, 1]} : vector<2x256xf32> to vector<2x16xf32>
    %530 = tpu.concatenate %528, %529 in 1 : vector<2x240xf32>, vector<2x16xf32> -> vector<2x256xf32>
    %c31 = arith.constant 31 : index
    %c0_94 = arith.constant 0 : index
    %531 = vector.load %arg6[%c31, %c0_94] : memref<49x256xf32, #tpu.memory_space<vmem>>, vector<1x256xf32>
    %c31_95 = arith.constant 31 : index
    %532 = memref.load %arg7[%c31_95] : memref<98xf32, #tpu.memory_space<smem>>
    %533 = vector.extract_strided_slice %530 {offsets = [0, 0], sizes = [1, 256], strides = [1, 1]} : vector<2x256xf32> to vector<1x256xf32>
    %534 = vector.broadcast %532 : f32 to vector<1x256xf32>
    %535 = arith.mulf %534, %533 : vector<1x256xf32>
    %c80 = arith.constant 80 : index
    %536 = memref.load %arg7[%c80] : memref<98xf32, #tpu.memory_space<smem>>
    %537 = vector.extract_strided_slice %530 {offsets = [1, 0], sizes = [1, 256], strides = [1, 1]} : vector<2x256xf32> to vector<1x256xf32>
    %538 = vector.broadcast %536 : f32 to vector<1x256xf32>
    %539 = arith.mulf %538, %537 : vector<1x256xf32>
    %540 = arith.addf %535, %539 : vector<1x256xf32>
    %541 = arith.mulf %531, %540 : vector<1x256xf32>
    %542 = arith.addf %527, %541 : vector<1x256xf32>
    %543 = vector.extract_strided_slice %61 {offsets = [0, 17], sizes = [2, 239], strides = [1, 1]} : vector<2x256xf32> to vector<2x239xf32>
    %544 = vector.extract_strided_slice %61 {offsets = [0, 0], sizes = [2, 17], strides = [1, 1]} : vector<2x256xf32> to vector<2x17xf32>
    %545 = tpu.concatenate %543, %544 in 1 : vector<2x239xf32>, vector<2x17xf32> -> vector<2x256xf32>
    %c32 = arith.constant 32 : index
    %c0_96 = arith.constant 0 : index
    %546 = vector.load %arg6[%c32, %c0_96] : memref<49x256xf32, #tpu.memory_space<vmem>>, vector<1x256xf32>
    %c32_97 = arith.constant 32 : index
    %547 = memref.load %arg7[%c32_97] : memref<98xf32, #tpu.memory_space<smem>>
    %548 = vector.extract_strided_slice %545 {offsets = [0, 0], sizes = [1, 256], strides = [1, 1]} : vector<2x256xf32> to vector<1x256xf32>
    %549 = vector.broadcast %547 : f32 to vector<1x256xf32>
    %550 = arith.mulf %549, %548 : vector<1x256xf32>
    %c81 = arith.constant 81 : index
    %551 = memref.load %arg7[%c81] : memref<98xf32, #tpu.memory_space<smem>>
    %552 = vector.extract_strided_slice %545 {offsets = [1, 0], sizes = [1, 256], strides = [1, 1]} : vector<2x256xf32> to vector<1x256xf32>
    %553 = vector.broadcast %551 : f32 to vector<1x256xf32>
    %554 = arith.mulf %553, %552 : vector<1x256xf32>
    %555 = arith.addf %550, %554 : vector<1x256xf32>
    %556 = arith.mulf %546, %555 : vector<1x256xf32>
    %557 = arith.addf %542, %556 : vector<1x256xf32>
    %558 = vector.extract_strided_slice %61 {offsets = [0, 18], sizes = [2, 238], strides = [1, 1]} : vector<2x256xf32> to vector<2x238xf32>
    %559 = vector.extract_strided_slice %61 {offsets = [0, 0], sizes = [2, 18], strides = [1, 1]} : vector<2x256xf32> to vector<2x18xf32>
    %560 = tpu.concatenate %558, %559 in 1 : vector<2x238xf32>, vector<2x18xf32> -> vector<2x256xf32>
    %c33 = arith.constant 33 : index
    %c0_98 = arith.constant 0 : index
    %561 = vector.load %arg6[%c33, %c0_98] : memref<49x256xf32, #tpu.memory_space<vmem>>, vector<1x256xf32>
    %c33_99 = arith.constant 33 : index
    %562 = memref.load %arg7[%c33_99] : memref<98xf32, #tpu.memory_space<smem>>
    %563 = vector.extract_strided_slice %560 {offsets = [0, 0], sizes = [1, 256], strides = [1, 1]} : vector<2x256xf32> to vector<1x256xf32>
    %564 = vector.broadcast %562 : f32 to vector<1x256xf32>
    %565 = arith.mulf %564, %563 : vector<1x256xf32>
    %c82 = arith.constant 82 : index
    %566 = memref.load %arg7[%c82] : memref<98xf32, #tpu.memory_space<smem>>
    %567 = vector.extract_strided_slice %560 {offsets = [1, 0], sizes = [1, 256], strides = [1, 1]} : vector<2x256xf32> to vector<1x256xf32>
    %568 = vector.broadcast %566 : f32 to vector<1x256xf32>
    %569 = arith.mulf %568, %567 : vector<1x256xf32>
    %570 = arith.addf %565, %569 : vector<1x256xf32>
    %571 = arith.mulf %561, %570 : vector<1x256xf32>
    %572 = arith.addf %557, %571 : vector<1x256xf32>
    %573 = vector.extract_strided_slice %61 {offsets = [0, 19], sizes = [2, 237], strides = [1, 1]} : vector<2x256xf32> to vector<2x237xf32>
    %574 = vector.extract_strided_slice %61 {offsets = [0, 0], sizes = [2, 19], strides = [1, 1]} : vector<2x256xf32> to vector<2x19xf32>
    %575 = tpu.concatenate %573, %574 in 1 : vector<2x237xf32>, vector<2x19xf32> -> vector<2x256xf32>
    %c34 = arith.constant 34 : index
    %c0_100 = arith.constant 0 : index
    %576 = vector.load %arg6[%c34, %c0_100] : memref<49x256xf32, #tpu.memory_space<vmem>>, vector<1x256xf32>
    %c34_101 = arith.constant 34 : index
    %577 = memref.load %arg7[%c34_101] : memref<98xf32, #tpu.memory_space<smem>>
    %578 = vector.extract_strided_slice %575 {offsets = [0, 0], sizes = [1, 256], strides = [1, 1]} : vector<2x256xf32> to vector<1x256xf32>
    %579 = vector.broadcast %577 : f32 to vector<1x256xf32>
    %580 = arith.mulf %579, %578 : vector<1x256xf32>
    %c83 = arith.constant 83 : index
    %581 = memref.load %arg7[%c83] : memref<98xf32, #tpu.memory_space<smem>>
    %582 = vector.extract_strided_slice %575 {offsets = [1, 0], sizes = [1, 256], strides = [1, 1]} : vector<2x256xf32> to vector<1x256xf32>
    %583 = vector.broadcast %581 : f32 to vector<1x256xf32>
    %584 = arith.mulf %583, %582 : vector<1x256xf32>
    %585 = arith.addf %580, %584 : vector<1x256xf32>
    %586 = arith.mulf %576, %585 : vector<1x256xf32>
    %587 = arith.addf %572, %586 : vector<1x256xf32>
    %588 = vector.extract_strided_slice %61 {offsets = [0, 29], sizes = [2, 227], strides = [1, 1]} : vector<2x256xf32> to vector<2x227xf32>
    %589 = vector.extract_strided_slice %61 {offsets = [0, 0], sizes = [2, 29], strides = [1, 1]} : vector<2x256xf32> to vector<2x29xf32>
    %590 = tpu.concatenate %588, %589 in 1 : vector<2x227xf32>, vector<2x29xf32> -> vector<2x256xf32>
    %c35 = arith.constant 35 : index
    %c0_102 = arith.constant 0 : index
    %591 = vector.load %arg6[%c35, %c0_102] : memref<49x256xf32, #tpu.memory_space<vmem>>, vector<1x256xf32>
    %c35_103 = arith.constant 35 : index
    %592 = memref.load %arg7[%c35_103] : memref<98xf32, #tpu.memory_space<smem>>
    %593 = vector.extract_strided_slice %590 {offsets = [0, 0], sizes = [1, 256], strides = [1, 1]} : vector<2x256xf32> to vector<1x256xf32>
    %594 = vector.broadcast %592 : f32 to vector<1x256xf32>
    %595 = arith.mulf %594, %593 : vector<1x256xf32>
    %c84 = arith.constant 84 : index
    %596 = memref.load %arg7[%c84] : memref<98xf32, #tpu.memory_space<smem>>
    %597 = vector.extract_strided_slice %590 {offsets = [1, 0], sizes = [1, 256], strides = [1, 1]} : vector<2x256xf32> to vector<1x256xf32>
    %598 = vector.broadcast %596 : f32 to vector<1x256xf32>
    %599 = arith.mulf %598, %597 : vector<1x256xf32>
    %600 = arith.addf %595, %599 : vector<1x256xf32>
    %601 = arith.mulf %591, %600 : vector<1x256xf32>
    %602 = arith.addf %587, %601 : vector<1x256xf32>
    %603 = vector.extract_strided_slice %61 {offsets = [0, 30], sizes = [2, 226], strides = [1, 1]} : vector<2x256xf32> to vector<2x226xf32>
    %604 = vector.extract_strided_slice %61 {offsets = [0, 0], sizes = [2, 30], strides = [1, 1]} : vector<2x256xf32> to vector<2x30xf32>
    %605 = tpu.concatenate %603, %604 in 1 : vector<2x226xf32>, vector<2x30xf32> -> vector<2x256xf32>
    %c36 = arith.constant 36 : index
    %c0_104 = arith.constant 0 : index
    %606 = vector.load %arg6[%c36, %c0_104] : memref<49x256xf32, #tpu.memory_space<vmem>>, vector<1x256xf32>
    %c36_105 = arith.constant 36 : index
    %607 = memref.load %arg7[%c36_105] : memref<98xf32, #tpu.memory_space<smem>>
    %608 = vector.extract_strided_slice %605 {offsets = [0, 0], sizes = [1, 256], strides = [1, 1]} : vector<2x256xf32> to vector<1x256xf32>
    %609 = vector.broadcast %607 : f32 to vector<1x256xf32>
    %610 = arith.mulf %609, %608 : vector<1x256xf32>
    %c85 = arith.constant 85 : index
    %611 = memref.load %arg7[%c85] : memref<98xf32, #tpu.memory_space<smem>>
    %612 = vector.extract_strided_slice %605 {offsets = [1, 0], sizes = [1, 256], strides = [1, 1]} : vector<2x256xf32> to vector<1x256xf32>
    %613 = vector.broadcast %611 : f32 to vector<1x256xf32>
    %614 = arith.mulf %613, %612 : vector<1x256xf32>
    %615 = arith.addf %610, %614 : vector<1x256xf32>
    %616 = arith.mulf %606, %615 : vector<1x256xf32>
    %617 = arith.addf %602, %616 : vector<1x256xf32>
    %618 = vector.extract_strided_slice %61 {offsets = [0, 31], sizes = [2, 225], strides = [1, 1]} : vector<2x256xf32> to vector<2x225xf32>
    %619 = vector.extract_strided_slice %61 {offsets = [0, 0], sizes = [2, 31], strides = [1, 1]} : vector<2x256xf32> to vector<2x31xf32>
    %620 = tpu.concatenate %618, %619 in 1 : vector<2x225xf32>, vector<2x31xf32> -> vector<2x256xf32>
    %c37 = arith.constant 37 : index
    %c0_106 = arith.constant 0 : index
    %621 = vector.load %arg6[%c37, %c0_106] : memref<49x256xf32, #tpu.memory_space<vmem>>, vector<1x256xf32>
    %c37_107 = arith.constant 37 : index
    %622 = memref.load %arg7[%c37_107] : memref<98xf32, #tpu.memory_space<smem>>
    %623 = vector.extract_strided_slice %620 {offsets = [0, 0], sizes = [1, 256], strides = [1, 1]} : vector<2x256xf32> to vector<1x256xf32>
    %624 = vector.broadcast %622 : f32 to vector<1x256xf32>
    %625 = arith.mulf %624, %623 : vector<1x256xf32>
    %c86 = arith.constant 86 : index
    %626 = memref.load %arg7[%c86] : memref<98xf32, #tpu.memory_space<smem>>
    %627 = vector.extract_strided_slice %620 {offsets = [1, 0], sizes = [1, 256], strides = [1, 1]} : vector<2x256xf32> to vector<1x256xf32>
    %628 = vector.broadcast %626 : f32 to vector<1x256xf32>
    %629 = arith.mulf %628, %627 : vector<1x256xf32>
    %630 = arith.addf %625, %629 : vector<1x256xf32>
    %631 = arith.mulf %621, %630 : vector<1x256xf32>
    %632 = arith.addf %617, %631 : vector<1x256xf32>
    %633 = vector.extract_strided_slice %61 {offsets = [0, 32], sizes = [2, 224], strides = [1, 1]} : vector<2x256xf32> to vector<2x224xf32>
    %634 = vector.extract_strided_slice %61 {offsets = [0, 0], sizes = [2, 32], strides = [1, 1]} : vector<2x256xf32> to vector<2x32xf32>
    %635 = tpu.concatenate %633, %634 in 1 : vector<2x224xf32>, vector<2x32xf32> -> vector<2x256xf32>
    %c38 = arith.constant 38 : index
    %c0_108 = arith.constant 0 : index
    %636 = vector.load %arg6[%c38, %c0_108] : memref<49x256xf32, #tpu.memory_space<vmem>>, vector<1x256xf32>
    %c38_109 = arith.constant 38 : index
    %637 = memref.load %arg7[%c38_109] : memref<98xf32, #tpu.memory_space<smem>>
    %638 = vector.extract_strided_slice %635 {offsets = [0, 0], sizes = [1, 256], strides = [1, 1]} : vector<2x256xf32> to vector<1x256xf32>
    %639 = vector.broadcast %637 : f32 to vector<1x256xf32>
    %640 = arith.mulf %639, %638 : vector<1x256xf32>
    %c87 = arith.constant 87 : index
    %641 = memref.load %arg7[%c87] : memref<98xf32, #tpu.memory_space<smem>>
    %642 = vector.extract_strided_slice %635 {offsets = [1, 0], sizes = [1, 256], strides = [1, 1]} : vector<2x256xf32> to vector<1x256xf32>
    %643 = vector.broadcast %641 : f32 to vector<1x256xf32>
    %644 = arith.mulf %643, %642 : vector<1x256xf32>
    %645 = arith.addf %640, %644 : vector<1x256xf32>
    %646 = arith.mulf %636, %645 : vector<1x256xf32>
    %647 = arith.addf %632, %646 : vector<1x256xf32>
    %648 = vector.extract_strided_slice %61 {offsets = [0, 33], sizes = [2, 223], strides = [1, 1]} : vector<2x256xf32> to vector<2x223xf32>
    %649 = vector.extract_strided_slice %61 {offsets = [0, 0], sizes = [2, 33], strides = [1, 1]} : vector<2x256xf32> to vector<2x33xf32>
    %650 = tpu.concatenate %648, %649 in 1 : vector<2x223xf32>, vector<2x33xf32> -> vector<2x256xf32>
    %c39 = arith.constant 39 : index
    %c0_110 = arith.constant 0 : index
    %651 = vector.load %arg6[%c39, %c0_110] : memref<49x256xf32, #tpu.memory_space<vmem>>, vector<1x256xf32>
    %c39_111 = arith.constant 39 : index
    %652 = memref.load %arg7[%c39_111] : memref<98xf32, #tpu.memory_space<smem>>
    %653 = vector.extract_strided_slice %650 {offsets = [0, 0], sizes = [1, 256], strides = [1, 1]} : vector<2x256xf32> to vector<1x256xf32>
    %654 = vector.broadcast %652 : f32 to vector<1x256xf32>
    %655 = arith.mulf %654, %653 : vector<1x256xf32>
    %c88 = arith.constant 88 : index
    %656 = memref.load %arg7[%c88] : memref<98xf32, #tpu.memory_space<smem>>
    %657 = vector.extract_strided_slice %650 {offsets = [1, 0], sizes = [1, 256], strides = [1, 1]} : vector<2x256xf32> to vector<1x256xf32>
    %658 = vector.broadcast %656 : f32 to vector<1x256xf32>
    %659 = arith.mulf %658, %657 : vector<1x256xf32>
    %660 = arith.addf %655, %659 : vector<1x256xf32>
    %661 = arith.mulf %651, %660 : vector<1x256xf32>
    %662 = arith.addf %647, %661 : vector<1x256xf32>
    %663 = vector.extract_strided_slice %61 {offsets = [0, 34], sizes = [2, 222], strides = [1, 1]} : vector<2x256xf32> to vector<2x222xf32>
    %664 = vector.extract_strided_slice %61 {offsets = [0, 0], sizes = [2, 34], strides = [1, 1]} : vector<2x256xf32> to vector<2x34xf32>
    %665 = tpu.concatenate %663, %664 in 1 : vector<2x222xf32>, vector<2x34xf32> -> vector<2x256xf32>
    %c40 = arith.constant 40 : index
    %c0_112 = arith.constant 0 : index
    %666 = vector.load %arg6[%c40, %c0_112] : memref<49x256xf32, #tpu.memory_space<vmem>>, vector<1x256xf32>
    %c40_113 = arith.constant 40 : index
    %667 = memref.load %arg7[%c40_113] : memref<98xf32, #tpu.memory_space<smem>>
    %668 = vector.extract_strided_slice %665 {offsets = [0, 0], sizes = [1, 256], strides = [1, 1]} : vector<2x256xf32> to vector<1x256xf32>
    %669 = vector.broadcast %667 : f32 to vector<1x256xf32>
    %670 = arith.mulf %669, %668 : vector<1x256xf32>
    %c89 = arith.constant 89 : index
    %671 = memref.load %arg7[%c89] : memref<98xf32, #tpu.memory_space<smem>>
    %672 = vector.extract_strided_slice %665 {offsets = [1, 0], sizes = [1, 256], strides = [1, 1]} : vector<2x256xf32> to vector<1x256xf32>
    %673 = vector.broadcast %671 : f32 to vector<1x256xf32>
    %674 = arith.mulf %673, %672 : vector<1x256xf32>
    %675 = arith.addf %670, %674 : vector<1x256xf32>
    %676 = arith.mulf %666, %675 : vector<1x256xf32>
    %677 = arith.addf %662, %676 : vector<1x256xf32>
    %678 = vector.extract_strided_slice %61 {offsets = [0, 35], sizes = [2, 221], strides = [1, 1]} : vector<2x256xf32> to vector<2x221xf32>
    %679 = vector.extract_strided_slice %61 {offsets = [0, 0], sizes = [2, 35], strides = [1, 1]} : vector<2x256xf32> to vector<2x35xf32>
    %680 = tpu.concatenate %678, %679 in 1 : vector<2x221xf32>, vector<2x35xf32> -> vector<2x256xf32>
    %c41 = arith.constant 41 : index
    %c0_114 = arith.constant 0 : index
    %681 = vector.load %arg6[%c41, %c0_114] : memref<49x256xf32, #tpu.memory_space<vmem>>, vector<1x256xf32>
    %c41_115 = arith.constant 41 : index
    %682 = memref.load %arg7[%c41_115] : memref<98xf32, #tpu.memory_space<smem>>
    %683 = vector.extract_strided_slice %680 {offsets = [0, 0], sizes = [1, 256], strides = [1, 1]} : vector<2x256xf32> to vector<1x256xf32>
    %684 = vector.broadcast %682 : f32 to vector<1x256xf32>
    %685 = arith.mulf %684, %683 : vector<1x256xf32>
    %c90 = arith.constant 90 : index
    %686 = memref.load %arg7[%c90] : memref<98xf32, #tpu.memory_space<smem>>
    %687 = vector.extract_strided_slice %680 {offsets = [1, 0], sizes = [1, 256], strides = [1, 1]} : vector<2x256xf32> to vector<1x256xf32>
    %688 = vector.broadcast %686 : f32 to vector<1x256xf32>
    %689 = arith.mulf %688, %687 : vector<1x256xf32>
    %690 = arith.addf %685, %689 : vector<1x256xf32>
    %691 = arith.mulf %681, %690 : vector<1x256xf32>
    %692 = arith.addf %677, %691 : vector<1x256xf32>
    %693 = vector.extract_strided_slice %61 {offsets = [0, 45], sizes = [2, 211], strides = [1, 1]} : vector<2x256xf32> to vector<2x211xf32>
    %694 = vector.extract_strided_slice %61 {offsets = [0, 0], sizes = [2, 45], strides = [1, 1]} : vector<2x256xf32> to vector<2x45xf32>
    %695 = tpu.concatenate %693, %694 in 1 : vector<2x211xf32>, vector<2x45xf32> -> vector<2x256xf32>
    %c42 = arith.constant 42 : index
    %c0_116 = arith.constant 0 : index
    %696 = vector.load %arg6[%c42, %c0_116] : memref<49x256xf32, #tpu.memory_space<vmem>>, vector<1x256xf32>
    %c42_117 = arith.constant 42 : index
    %697 = memref.load %arg7[%c42_117] : memref<98xf32, #tpu.memory_space<smem>>
    %698 = vector.extract_strided_slice %695 {offsets = [0, 0], sizes = [1, 256], strides = [1, 1]} : vector<2x256xf32> to vector<1x256xf32>
    %699 = vector.broadcast %697 : f32 to vector<1x256xf32>
    %700 = arith.mulf %699, %698 : vector<1x256xf32>
    %c91 = arith.constant 91 : index
    %701 = memref.load %arg7[%c91] : memref<98xf32, #tpu.memory_space<smem>>
    %702 = vector.extract_strided_slice %695 {offsets = [1, 0], sizes = [1, 256], strides = [1, 1]} : vector<2x256xf32> to vector<1x256xf32>
    %703 = vector.broadcast %701 : f32 to vector<1x256xf32>
    %704 = arith.mulf %703, %702 : vector<1x256xf32>
    %705 = arith.addf %700, %704 : vector<1x256xf32>
    %706 = arith.mulf %696, %705 : vector<1x256xf32>
    %707 = arith.addf %692, %706 : vector<1x256xf32>
    %708 = vector.extract_strided_slice %61 {offsets = [0, 46], sizes = [2, 210], strides = [1, 1]} : vector<2x256xf32> to vector<2x210xf32>
    %709 = vector.extract_strided_slice %61 {offsets = [0, 0], sizes = [2, 46], strides = [1, 1]} : vector<2x256xf32> to vector<2x46xf32>
    %710 = tpu.concatenate %708, %709 in 1 : vector<2x210xf32>, vector<2x46xf32> -> vector<2x256xf32>
    %c43 = arith.constant 43 : index
    %c0_118 = arith.constant 0 : index
    %711 = vector.load %arg6[%c43, %c0_118] : memref<49x256xf32, #tpu.memory_space<vmem>>, vector<1x256xf32>
    %c43_119 = arith.constant 43 : index
    %712 = memref.load %arg7[%c43_119] : memref<98xf32, #tpu.memory_space<smem>>
    %713 = vector.extract_strided_slice %710 {offsets = [0, 0], sizes = [1, 256], strides = [1, 1]} : vector<2x256xf32> to vector<1x256xf32>
    %714 = vector.broadcast %712 : f32 to vector<1x256xf32>
    %715 = arith.mulf %714, %713 : vector<1x256xf32>
    %c92 = arith.constant 92 : index
    %716 = memref.load %arg7[%c92] : memref<98xf32, #tpu.memory_space<smem>>
    %717 = vector.extract_strided_slice %710 {offsets = [1, 0], sizes = [1, 256], strides = [1, 1]} : vector<2x256xf32> to vector<1x256xf32>
    %718 = vector.broadcast %716 : f32 to vector<1x256xf32>
    %719 = arith.mulf %718, %717 : vector<1x256xf32>
    %720 = arith.addf %715, %719 : vector<1x256xf32>
    %721 = arith.mulf %711, %720 : vector<1x256xf32>
    %722 = arith.addf %707, %721 : vector<1x256xf32>
    %723 = vector.extract_strided_slice %61 {offsets = [0, 47], sizes = [2, 209], strides = [1, 1]} : vector<2x256xf32> to vector<2x209xf32>
    %724 = vector.extract_strided_slice %61 {offsets = [0, 0], sizes = [2, 47], strides = [1, 1]} : vector<2x256xf32> to vector<2x47xf32>
    %725 = tpu.concatenate %723, %724 in 1 : vector<2x209xf32>, vector<2x47xf32> -> vector<2x256xf32>
    %c44 = arith.constant 44 : index
    %c0_120 = arith.constant 0 : index
    %726 = vector.load %arg6[%c44, %c0_120] : memref<49x256xf32, #tpu.memory_space<vmem>>, vector<1x256xf32>
    %c44_121 = arith.constant 44 : index
    %727 = memref.load %arg7[%c44_121] : memref<98xf32, #tpu.memory_space<smem>>
    %728 = vector.extract_strided_slice %725 {offsets = [0, 0], sizes = [1, 256], strides = [1, 1]} : vector<2x256xf32> to vector<1x256xf32>
    %729 = vector.broadcast %727 : f32 to vector<1x256xf32>
    %730 = arith.mulf %729, %728 : vector<1x256xf32>
    %c93 = arith.constant 93 : index
    %731 = memref.load %arg7[%c93] : memref<98xf32, #tpu.memory_space<smem>>
    %732 = vector.extract_strided_slice %725 {offsets = [1, 0], sizes = [1, 256], strides = [1, 1]} : vector<2x256xf32> to vector<1x256xf32>
    %733 = vector.broadcast %731 : f32 to vector<1x256xf32>
    %734 = arith.mulf %733, %732 : vector<1x256xf32>
    %735 = arith.addf %730, %734 : vector<1x256xf32>
    %736 = arith.mulf %726, %735 : vector<1x256xf32>
    %737 = arith.addf %722, %736 : vector<1x256xf32>
    %738 = vector.extract_strided_slice %61 {offsets = [0, 48], sizes = [2, 208], strides = [1, 1]} : vector<2x256xf32> to vector<2x208xf32>
    %739 = vector.extract_strided_slice %61 {offsets = [0, 0], sizes = [2, 48], strides = [1, 1]} : vector<2x256xf32> to vector<2x48xf32>
    %740 = tpu.concatenate %738, %739 in 1 : vector<2x208xf32>, vector<2x48xf32> -> vector<2x256xf32>
    %c45 = arith.constant 45 : index
    %c0_122 = arith.constant 0 : index
    %741 = vector.load %arg6[%c45, %c0_122] : memref<49x256xf32, #tpu.memory_space<vmem>>, vector<1x256xf32>
    %c45_123 = arith.constant 45 : index
    %742 = memref.load %arg7[%c45_123] : memref<98xf32, #tpu.memory_space<smem>>
    %743 = vector.extract_strided_slice %740 {offsets = [0, 0], sizes = [1, 256], strides = [1, 1]} : vector<2x256xf32> to vector<1x256xf32>
    %744 = vector.broadcast %742 : f32 to vector<1x256xf32>
    %745 = arith.mulf %744, %743 : vector<1x256xf32>
    %c94 = arith.constant 94 : index
    %746 = memref.load %arg7[%c94] : memref<98xf32, #tpu.memory_space<smem>>
    %747 = vector.extract_strided_slice %740 {offsets = [1, 0], sizes = [1, 256], strides = [1, 1]} : vector<2x256xf32> to vector<1x256xf32>
    %748 = vector.broadcast %746 : f32 to vector<1x256xf32>
    %749 = arith.mulf %748, %747 : vector<1x256xf32>
    %750 = arith.addf %745, %749 : vector<1x256xf32>
    %751 = arith.mulf %741, %750 : vector<1x256xf32>
    %752 = arith.addf %737, %751 : vector<1x256xf32>
    %753 = vector.extract_strided_slice %61 {offsets = [0, 49], sizes = [2, 207], strides = [1, 1]} : vector<2x256xf32> to vector<2x207xf32>
    %754 = vector.extract_strided_slice %61 {offsets = [0, 0], sizes = [2, 49], strides = [1, 1]} : vector<2x256xf32> to vector<2x49xf32>
    %755 = tpu.concatenate %753, %754 in 1 : vector<2x207xf32>, vector<2x49xf32> -> vector<2x256xf32>
    %c46 = arith.constant 46 : index
    %c0_124 = arith.constant 0 : index
    %756 = vector.load %arg6[%c46, %c0_124] : memref<49x256xf32, #tpu.memory_space<vmem>>, vector<1x256xf32>
    %c46_125 = arith.constant 46 : index
    %757 = memref.load %arg7[%c46_125] : memref<98xf32, #tpu.memory_space<smem>>
    %758 = vector.extract_strided_slice %755 {offsets = [0, 0], sizes = [1, 256], strides = [1, 1]} : vector<2x256xf32> to vector<1x256xf32>
    %759 = vector.broadcast %757 : f32 to vector<1x256xf32>
    %760 = arith.mulf %759, %758 : vector<1x256xf32>
    %c95 = arith.constant 95 : index
    %761 = memref.load %arg7[%c95] : memref<98xf32, #tpu.memory_space<smem>>
    %762 = vector.extract_strided_slice %755 {offsets = [1, 0], sizes = [1, 256], strides = [1, 1]} : vector<2x256xf32> to vector<1x256xf32>
    %763 = vector.broadcast %761 : f32 to vector<1x256xf32>
    %764 = arith.mulf %763, %762 : vector<1x256xf32>
    %765 = arith.addf %760, %764 : vector<1x256xf32>
    %766 = arith.mulf %756, %765 : vector<1x256xf32>
    %767 = arith.addf %752, %766 : vector<1x256xf32>
    %768 = vector.extract_strided_slice %61 {offsets = [0, 50], sizes = [2, 206], strides = [1, 1]} : vector<2x256xf32> to vector<2x206xf32>
    %769 = vector.extract_strided_slice %61 {offsets = [0, 0], sizes = [2, 50], strides = [1, 1]} : vector<2x256xf32> to vector<2x50xf32>
    %770 = tpu.concatenate %768, %769 in 1 : vector<2x206xf32>, vector<2x50xf32> -> vector<2x256xf32>
    %c47 = arith.constant 47 : index
    %c0_126 = arith.constant 0 : index
    %771 = vector.load %arg6[%c47, %c0_126] : memref<49x256xf32, #tpu.memory_space<vmem>>, vector<1x256xf32>
    %c47_127 = arith.constant 47 : index
    %772 = memref.load %arg7[%c47_127] : memref<98xf32, #tpu.memory_space<smem>>
    %773 = vector.extract_strided_slice %770 {offsets = [0, 0], sizes = [1, 256], strides = [1, 1]} : vector<2x256xf32> to vector<1x256xf32>
    %774 = vector.broadcast %772 : f32 to vector<1x256xf32>
    %775 = arith.mulf %774, %773 : vector<1x256xf32>
    %c96 = arith.constant 96 : index
    %776 = memref.load %arg7[%c96] : memref<98xf32, #tpu.memory_space<smem>>
    %777 = vector.extract_strided_slice %770 {offsets = [1, 0], sizes = [1, 256], strides = [1, 1]} : vector<2x256xf32> to vector<1x256xf32>
    %778 = vector.broadcast %776 : f32 to vector<1x256xf32>
    %779 = arith.mulf %778, %777 : vector<1x256xf32>
    %780 = arith.addf %775, %779 : vector<1x256xf32>
    %781 = arith.mulf %771, %780 : vector<1x256xf32>
    %782 = arith.addf %767, %781 : vector<1x256xf32>
    %783 = vector.extract_strided_slice %61 {offsets = [0, 51], sizes = [2, 205], strides = [1, 1]} : vector<2x256xf32> to vector<2x205xf32>
    %784 = vector.extract_strided_slice %61 {offsets = [0, 0], sizes = [2, 51], strides = [1, 1]} : vector<2x256xf32> to vector<2x51xf32>
    %785 = tpu.concatenate %783, %784 in 1 : vector<2x205xf32>, vector<2x51xf32> -> vector<2x256xf32>
    %c48 = arith.constant 48 : index
    %c0_128 = arith.constant 0 : index
    %786 = vector.load %arg6[%c48, %c0_128] : memref<49x256xf32, #tpu.memory_space<vmem>>, vector<1x256xf32>
    %c48_129 = arith.constant 48 : index
    %787 = memref.load %arg7[%c48_129] : memref<98xf32, #tpu.memory_space<smem>>
    %788 = vector.extract_strided_slice %785 {offsets = [0, 0], sizes = [1, 256], strides = [1, 1]} : vector<2x256xf32> to vector<1x256xf32>
    %789 = vector.broadcast %787 : f32 to vector<1x256xf32>
    %790 = arith.mulf %789, %788 : vector<1x256xf32>
    %c97 = arith.constant 97 : index
    %791 = memref.load %arg7[%c97] : memref<98xf32, #tpu.memory_space<smem>>
    %792 = vector.extract_strided_slice %785 {offsets = [1, 0], sizes = [1, 256], strides = [1, 1]} : vector<2x256xf32> to vector<1x256xf32>
    %793 = vector.broadcast %791 : f32 to vector<1x256xf32>
    %794 = arith.mulf %793, %792 : vector<1x256xf32>
    %795 = arith.addf %790, %794 : vector<1x256xf32>
    %796 = arith.mulf %786, %795 : vector<1x256xf32>
    %797 = arith.addf %782, %796 : vector<1x256xf32>
    %798 = arith.negf %797 : vector<1x256xf32>
    %799 = math.exp %798 : vector<1x256xf32>
    %cst_130 = arith.constant 1.000000e+00 : f32
    %800 = vector.broadcast %cst_130 : f32 to vector<1x256xf32>
    %801 = arith.addf %800, %799 : vector<1x256xf32>
    %802 = arith.divf %800, %801 : vector<1x256xf32>
    %803 = vector.broadcast %802 : vector<1x256xf32> to vector<8x256xf32>
    %804 = arith.mulf %54, %803 : vector<8x256xf32>
    %cst_131 = arith.constant 0.000000e+00 : f32
    %805 = vector.broadcast %cst_131 : f32 to vector<8x256xf32>
    %806 = arith.cmpf ogt, %804, %805 : vector<8x256xf32>
    %cst_132 = arith.constant 1.000000e-01 : f32
    %807 = vector.broadcast %cst_132 : f32 to vector<8x256xf32>
    %808 = arith.mulf %807, %804 : vector<8x256xf32>
    %809 = arith.select %806, %804, %808 : vector<8x256xi1>, vector<8x256xf32>
    %c0_133 = arith.constant 0 : index
    %c0_134 = arith.constant 0 : index
    %c0_135 = arith.constant 0 : index
    %810 = vector.load %arg9[%c0_133, %c0_134, %c0_135] : memref<1x8x256xf32, #tpu.memory_space<vmem>>, vector<1x8x256xf32>
    %811 = vector.shape_cast %810 : vector<1x8x256xf32> to vector<8x256xf32>
    %812 = vector.shape_cast %809 : vector<8x256xf32> to vector<1x8x256xf32>
    tpu.vector_store %arg9[%c0_133, %c0_134, %c0_135], %812 {strides = array<i32>} : memref<1x8x256xf32, #tpu.memory_space<vmem>>, vector<1x8x256xf32>,
    return
  }
  func.func @transform_0(%arg0: i32) -> (i32, i32, i32) {
    %c0_i32 = arith.constant 0 : i32
    %c0_i32_0 = arith.constant 0 : i32
    %c0_i32_1 = arith.constant 0 : i32
    return %arg0, %c0_i32, %c0_i32_0 : i32, i32, i32
  }
  func.func @transform_1(%arg0: i32) -> (i32, i32) {
    %c0_i32 = arith.constant 0 : i32
    %c0_i32_0 = arith.constant 0 : i32
    %c0_i32_1 = arith.constant 0 : i32
    return %c0_i32, %c0_i32_0 : i32, i32
  }
  func.func @transform_2(%arg0: i32) -> (i32, i32) {
    %c0_i32 = arith.constant 0 : i32
    %c0_i32_0 = arith.constant 0 : i32
    %c0_i32_1 = arith.constant 0 : i32
    return %c0_i32, %c0_i32_0 : i32, i32
  }
  func.func @transform_3(%arg0: i32) -> (i32, i32) {
    %c0_i32 = arith.constant 0 : i32
    %c0_i32_0 = arith.constant 0 : i32
    %c0_i32_1 = arith.constant 0 : i32
    return %c0_i32, %c0_i32_0 : i32, i32
  }
  func.func @transform_4(%arg0: i32) -> (i32, i32) {
    %c0_i32 = arith.constant 0 : i32
    %c0_i32_0 = arith.constant 0 : i32
    %c0_i32_1 = arith.constant 0 : i32
    return %c0_i32, %c0_i32_0 : i32, i32
  }
  func.func @transform_5(%arg0: i32) -> (i32, i32) {
    %c0_i32 = arith.constant 0 : i32
    %c0_i32_0 = arith.constant 0 : i32
    %c0_i32_1 = arith.constant 0 : i32
    return %c0_i32, %c0_i32_0 : i32, i32
  }
  func.func @transform_6(%arg0: i32) -> i32 {
    %c0_i32 = arith.constant 0 : i32
    %c0_i32_0 = arith.constant 0 : i32
    return %c0_i32 : i32
  }
  func.func @transform_7(%arg0: i32) -> i32 {
    %c0_i32 = arith.constant 0 : i32
    %c0_i32_0 = arith.constant 0 : i32
    return %c0_i32 : i32
  }
  func.func @transform_8(%arg0: i32) -> (i32, i32, i32) {
    %c0_i32 = arith.constant 0 : i32
    %c0_i32_0 = arith.constant 0 : i32
    %c0_i32_1 = arith.constant 0 : i32
    return %arg0, %c0_i32, %c0_i32_0 : i32, i32, i32
  }
}

</mosaic_0001>

<llo_original>
// kernel: tpu_custom_call.1
$region0: #{tpu_custom_call.1}
  #allocation0 [shape = 'u32[]', space=smem, size = 0x4, offset = 0x4, fixed_abs, tag = 'smem constant byte address 0x4 - core index']
  #allocation1 [shape = 'u32[72,128]{1,0:T(1,128)}', space=vmem, size = 0x9000, scoped, tag = 'internal scratch']
  #allocation2 [shape = 'f32[1]{0:T(128)S(6)}', space=smem, size = 0x200, scoped, tag = 'scoped memory for tpu_custom_call.1']
  %s0 = inlined_call_operand.hbm [shape: bf16[2,64,256], index: 0, kind: input, shape index: {}]
  %s1 = inlined_call_operand.vmem [shape: bf16[8,64], index: 1, kind: input, shape index: {}]
  %s2 = inlined_call_operand.vmem [shape: bf16[8,8], index: 2, kind: input, shape index: {}]
  %s3 = inlined_call_operand.vmem [shape: f32[4,8], index: 3, kind: input, shape index: {}]
  %s4 = inlined_call_operand.vmem [shape: f32[8,4], index: 4, kind: input, shape index: {}]
  %s5 = inlined_call_operand.hbm [shape: f32[49,256], index: 5, kind: input, shape index: {}]
  %s6 = inlined_call_operand.vmem [shape: f32[98], index: 6, kind: input, shape index: {}]
  %s7 = inlined_call_operand.<no memory space> [shape: f32[1], index: 7, kind: input, shape index: {}]
  %s8 = inlined_call_operand.hbm [shape: f32[2,8,256], index: 8, kind: output, shape index: {}]
  %s9 = sld [smem:[#allocation0]]
  $region77: #{tpu_custom_call.1} parent=0
    _
  %s11 = ssub.s32 1, %s9
  %s12 = scalar_select 0, %s11, %s9
  %13 = sst [smem:[#allocation2]] %s7
  $region1: #{tpu_custom_call.1} parent=0
    #allocation3 [shape = 'u8[65536]{0}', space=vmem, size = 0x10000, scoped, tag = 'input window, operand 0']
    #allocation4 [shape = 's32[2]{0}', space=sflag, size = 0x8, scoped, tag = 'scoped memory for tpu_custom_call.1']
    #allocation5 [shape = 's32[2]{0}', space=sflag, size = 0x8, scoped, tag = 'scoped memory for tpu_custom_call.1']
    #allocation6 [shape = 's32[2]{0}', space=sflag, size = 0x8, scoped, tag = 'scoped memory for tpu_custom_call.1']
    #allocation7 [shape = 'u8[57344]{0}', space=vmem, size = 0xe000, scoped, tag = 'input window, operand 5, single buffered']
    #allocation8 [shape = 's32[1]{0}', space=sflag, size = 0x4, scoped, tag = 'scoped memory for tpu_custom_call.1']
    #allocation9 [shape = 'u8[512]{0}', space=smem, size = 0x200, scoped, tag = 'input window, operand 6, single buffered']
    #allocation10 [shape = 'u8[16384]{0}', space=vmem, size = 0x4000, scoped, tag = 'output window, operand 0']
    %14 = vsyncpa [#allocation4], 0
    %s15 = scalar_lea.sflag [#allocation4], 1
    %16 = vsyncpa %s15, 0
    %17 = vsyncpa [#allocation8], 0
    %18 = vsyncpa [#allocation6], 0
    %19 = vsyncpa [#allocation5], 0
    %s20 = scalar_lea.sflag [#allocation5], 1
    %21 = vsyncpa %s20, 0
    loop: start=0, step=1, limit=4
    $region2: #{tpu_custom_call.1} parent=1 // loop_pre_header
      _
    $region3: #{tpu_custom_call.1} parent=1 // loop_header
      %s23 = sphi 0, %s27
      %p24 = scmp.ge.s32.totalorder %s23, 4
      %s33 = sphi 0, %s35
      %s36 = sphi 0, %s33
      %s37 = sphi 0, %s36
      %s53 = sphi 0, %s37
      %s57 = sphi 0, %s57
      %s59 = sphi 0, %s57
      %s60 = sphi 0, %s59
      %s74 = sphi 0, %s60
      %s78 = sphi 0, %s78
      %s80 = sphi 0, %s78
      %s81 = sphi 0, %s80
      %s95 = sphi 0, %s81
      %s99 = sphi 0, %s99
      %s101 = sphi 0, %s99
      %s102 = sphi 0, %s101
      %s116 = sphi 0, %s102
      %s120 = sphi 0, %s120
      %s122 = sphi 0, %s120
      %s123 = sphi 0, %s122
      %s137 = sphi 0, %s123
      %s141 = sphi 0, %s141
      %s143 = sphi 0, %s141
      %s144 = sphi 0, %s143
      %s158 = sphi 0, %s144
      %s162 = sphi 0, %s162
      %s164 = sphi 0, %s162
      %s165 = sphi 0, %s164
      %s179 = sphi 0, %s165
      %s183 = sphi 0, %s183
      %s185 = sphi 0, %s183
      %s186 = sphi 0, %s185
      %s200 = sphi 0, %s186
      %s206 = sphi 0, %s208
      %s209 = sphi 0, %s206
      %s210 = sphi 0, %s209
      %s226 = sphi 0, %s210
    $region4: #{tpu_custom_call.1} parent=1 // loop_header_branch
      %26 = sbr.rel (%p24) target = $region8
    $region5: #{tpu_custom_call.1} parent=1 // loop_body
      %s28 = ssub.s32 %s23, 1
      %s29 = ssub.s32 %s23, 2
      %s30 = sadd.s32 %s23, 1
      %s31 = ssub.s32 %s23, %s30
      %p32 = scmp.eq.s32.totalorder %s31, 0
      %s34 = sadd.s32 %s33, 1
      %s35 = scalar_select %p32, %s33, %s34
      %p38 = pneg %p32
      %p39 = scmp.eq.s32.totalorder %s23, 1
      %p40 = por %p38, %p39
      %p41 = scmp.ne.s32.totalorder %s33, %s36
      %p42 = scmp.eq.s32.totalorder %s23, 0
      %p43 = por %p41, %p42
      %p44 = scmp.ne.s32.totalorder %s33, %s36
      %p45 = scmp.eq.s32.totalorder %s28, 1
      %p46 = por %p44, %p45
      %p47 = scmp.ne.s32.totalorder %s36, %s37
      %p48 = scmp.eq.s32.totalorder %s28, 0
      %p49 = por %p47, %p48
      %p50 = scmp.ne.s32.totalorder %s36, %s37
      %p51 = scmp.eq.s32.totalorder %s29, 1
      %p52 = por %p50, %p51
      %p54 = scmp.ne.s32.totalorder %s37, %s53
      %p55 = scmp.eq.s32.totalorder %s29, 0
      %p56 = por %p54, %p55
      %s58 = sadd.s32 %s57, 1
      %p61 = scmp.eq.s32.totalorder %s23, 1
      %p62 = scmp.ne.s32.totalorder %s57, %s59
      %p63 = scmp.eq.s32.totalorder %s23, 0
      %p64 = por %p62, %p63
      %p65 = scmp.ne.s32.totalorder %s57, %s59
      %p66 = scmp.eq.s32.totalorder %s28, 1
      %p67 = por %p65, %p66
      %p68 = scmp.ne.s32.totalorder %s59, %s60
      %p69 = scmp.eq.s32.totalorder %s28, 0
      %p70 = por %p68, %p69
      %p71 = scmp.ne.s32.totalorder %s59, %s60
      %p72 = scmp.eq.s32.totalorder %s29, 1
      %p73 = por %p71, %p72
      %p75 = scmp.ne.s32.totalorder %s60, %s74
      %p76 = scmp.eq.s32.totalorder %s29, 0
      %p77 = por %p75, %p76
      %s79 = sadd.s32 %s78, 1
      %p82 = scmp.eq.s32.totalorder %s23, 1
      %p83 = scmp.ne.s32.totalorder %s78, %s80
      %p84 = scmp.eq.s32.totalorder %s23, 0
      %p85 = por %p83, %p84
      %p86 = scmp.ne.s32.totalorder %s78, %s80
      %p87 = scmp.eq.s32.totalorder %s28, 1
      %p88 = por %p86, %p87
      %p89 = scmp.ne.s32.totalorder %s80, %s81
      %p90 = scmp.eq.s32.totalorder %s28, 0
      %p91 = por %p89, %p90
      %p92 = scmp.ne.s32.totalorder %s80, %s81
      %p93 = scmp.eq.s32.totalorder %s29, 1
      %p94 = por %p92, %p93
      %p96 = scmp.ne.s32.totalorder %s81, %s95
      %p97 = scmp.eq.s32.totalorder %s29, 0
      %p98 = por %p96, %p97
      %s100 = sadd.s32 %s99, 1
      %p103 = scmp.eq.s32.totalorder %s23, 1
      %p104 = scmp.ne.s32.totalorder %s99, %s101
      %p105 = scmp.eq.s32.totalorder %s23, 0
      %p106 = por %p104, %p105
      %p107 = scmp.ne.s32.totalorder %s99, %s101
      %p108 = scmp.eq.s32.totalorder %s28, 1
      %p109 = por %p107, %p108
      %p110 = scmp.ne.s32.totalorder %s101, %s102
      %p111 = scmp.eq.s32.totalorder %s28, 0
      %p112 = por %p110, %p111
      %p113 = scmp.ne.s32.totalorder %s101, %s102
      %p114 = scmp.eq.s32.totalorder %s29, 1
      %p115 = por %p113, %p114
      %p117 = scmp.ne.s32.totalorder %s102, %s116
      %p118 = scmp.eq.s32.totalorder %s29, 0
      %p119 = por %p117, %p118
      %s121 = sadd.s32 %s120, 1
      %p124 = scmp.eq.s32.totalorder %s23, 1
      %p125 = scmp.ne.s32.totalorder %s120, %s122
      %p126 = scmp.eq.s32.totalorder %s23, 0
      %p127 = por %p125, %p126
      %p128 = scmp.ne.s32.totalorder %s120, %s122
      %p129 = scmp.eq.s32.totalorder %s28, 1
      %p130 = por %p128, %p129
      %p131 = scmp.ne.s32.totalorder %s122, %s123
      %p132 = scmp.eq.s32.totalorder %s28, 0
      %p133 = por %p131, %p132
      %p134 = scmp.ne.s32.totalorder %s122, %s123
      %p135 = scmp.eq.s32.totalorder %s29, 1
      %p136 = por %p134, %p135
      %p138 = scmp.ne.s32.totalorder %s123, %s137
      %p139 = scmp.eq.s32.totalorder %s29, 0
      %p140 = por %p138, %p139
      %s142 = sadd.s32 %s141, 1
      %p145 = scmp.eq.s32.totalorder %s23, 1
      %p146 = scmp.ne.s32.totalorder %s141, %s143
      %p147 = scmp.eq.s32.totalorder %s23, 0
      %p148 = por %p146, %p147
      %p149 = scmp.ne.s32.totalorder %s141, %s143
      %p150 = scmp.eq.s32.totalorder %s28, 1
      %p151 = por %p149, %p150
      %p152 = scmp.ne.s32.totalorder %s143, %s144
      %p153 = scmp.eq.s32.totalorder %s28, 0
      %p154 = por %p152, %p153
      %p155 = scmp.ne.s32.totalorder %s143, %s144
      %p156 = scmp.eq.s32.totalorder %s29, 1
      %p157 = por %p155, %p156
      %p159 = scmp.ne.s32.totalorder %s144, %s158
      %p160 = scmp.eq.s32.totalorder %s29, 0
      %p161 = por %p159, %p160
      %s163 = sadd.s32 %s162, 1
      %p166 = scmp.eq.s32.totalorder %s23, 1
      %p167 = scmp.ne.s32.totalorder %s162, %s164
      %p168 = scmp.eq.s32.totalorder %s23, 0
      %p169 = por %p167, %p168
      %p170 = scmp.ne.s32.totalorder %s162, %s164
      %p171 = scmp.eq.s32.totalorder %s28, 1
      %p172 = por %p170, %p171
      %p173 = scmp.ne.s32.totalorder %s164, %s165
      %p174 = scmp.eq.s32.totalorder %s28, 0
      %p175 = por %p173, %p174
      %p176 = scmp.ne.s32.totalorder %s164, %s165
      %p177 = scmp.eq.s32.totalorder %s29, 1
      %p178 = por %p176, %p177
      %p180 = scmp.ne.s32.totalorder %s165, %s179
      %p181 = scmp.eq.s32.totalorder %s29, 0
      %p182 = por %p180, %p181
      %s184 = sadd.s32 %s183, 1
      %p187 = scmp.eq.s32.totalorder %s23, 1
      %p188 = scmp.ne.s32.totalorder %s183, %s185
      %p189 = scmp.eq.s32.totalorder %s23, 0
      %p190 = por %p188, %p189
      %p191 = scmp.ne.s32.totalorder %s183, %s185
      %p192 = scmp.eq.s32.totalorder %s28, 1
      %p193 = por %p191, %p192
      %p194 = scmp.ne.s32.totalorder %s185, %s186
      %p195 = scmp.eq.s32.totalorder %s28, 0
      %p196 = por %p194, %p195
      %p197 = scmp.ne.s32.totalorder %s185, %s186
      %p198 = scmp.eq.s32.totalorder %s29, 1
      %p199 = por %p197, %p198
      %p201 = scmp.ne.s32.totalorder %s186, %s200
      %p202 = scmp.eq.s32.totalorder %s29, 0
      %p203 = por %p201, %p202
      %s204 = ssub.s32 %s23, %s30
      %p205 = scmp.eq.s32.totalorder %s204, 0
      %s207 = sadd.s32 %s206, 1
      %s208 = scalar_select %p205, %s206, %s207
      %p211 = pneg %p205
      %p212 = scmp.eq.s32.totalorder %s23, 1
      %p213 = por %p211, %p212
      %p214 = scmp.ne.s32.totalorder %s206, %s209
      %p215 = scmp.eq.s32.totalorder %s23, 0
      %p216 = por %p214, %p215
      %p217 = scmp.ne.s32.totalorder %s206, %s209
      %p218 = scmp.eq.s32.totalorder %s28, 1
      %p219 = por %p217, %p218
      %p220 = scmp.ne.s32.totalorder %s209, %s210
      %p221 = scmp.eq.s32.totalorder %s28, 0
      %p222 = por %p220, %p221
      %p223 = scmp.ne.s32.totalorder %s209, %s210
      %p224 = scmp.eq.s32.totalorder %s29, 1
      %p225 = por %p223, %p224
      %p227 = scmp.ne.s32.totalorder %s210, %s226
      %p228 = scmp.eq.s32.totalorder %s29, 0
      %p229 = por %p227, %p228
      %p230 = scmp.le.s32.totalorder 1, %s23
      %p231 = scmp.lt.s32.totalorder %s23, 3
      %p232 = pnand %p230, %p231
      %p233 = pneg %p232
      // Predicated region
      $region9: #{tpu_custom_call.1} parent=5 // pred_check
        _
      $region10: #{tpu_custom_call.1} parent=5 // pred_check_branch
        %235 = sbr.rel (%p232) target = $region12
      $region11: #{tpu_custom_call.1} parent=5 // pred_region
        %s236 = ssub.s32 %s23, 1
        // Predicated region
        $region13: #{tpu_custom_call.1} parent=11 // pred_check
          %p237 = pneg %p70
        $region14: #{tpu_custom_call.1} parent=11 // pred_check_branch
          %239 = sbr.rel (%p237) target = $region16
        $region15: #{tpu_custom_call.1} parent=11 // pred_region
          _
        $region16: #{tpu_custom_call.1} parent=11 // pred_fallthru
          _
        // Predicated region
        $region17: #{tpu_custom_call.1} parent=11 // pred_check
          %p240 = pneg %p91
        $region18: #{tpu_custom_call.1} parent=11 // pred_check_branch
          %242 = sbr.rel (%p240) target = $region20
        $region19: #{tpu_custom_call.1} parent=11 // pred_region
          _
        $region20: #{tpu_custom_call.1} parent=11 // pred_fallthru
          _
        // Predicated region
        $region21: #{tpu_custom_call.1} parent=11 // pred_check
          %p243 = pneg %p112
        $region22: #{tpu_custom_call.1} parent=11 // pred_check_branch
          %245 = sbr.rel (%p243) target = $region24
        $region23: #{tpu_custom_call.1} parent=11 // pred_region
          _
        $region24: #{tpu_custom_call.1} parent=11 // pred_fallthru
          _
        // Predicated region
        $region25: #{tpu_custom_call.1} parent=11 // pred_check
          %p246 = pneg %p133
        $region26: #{tpu_custom_call.1} parent=11 // pred_check_branch
          %248 = sbr.rel (%p246) target = $region28
        $region27: #{tpu_custom_call.1} parent=11 // pred_region
          _
        $region28: #{tpu_custom_call.1} parent=11 // pred_fallthru
          _
        // Predicated region
        $region29: #{tpu_custom_call.1} parent=11 // pred_check
          %p249 = pneg %p154
        $region30: #{tpu_custom_call.1} parent=11 // pred_check_branch
          %251 = sbr.rel (%p249) target = $region32
        $region31: #{tpu_custom_call.1} parent=11 // pred_region
          %253 = vsyncadd [#allocation8], 0
          %s254 = sshll.u32 %s5, 4
          %s255 = int_to_ptr.hbm [resolvable:$true] %s254
          %s256 = sshll.u32 [#allocation7], 4
          %s257 = int_to_ptr.vmem [resolvable:$true] %s256
          %262 = dma.hbm_to_vmem [thread:$0]  %s255, 1792, %s257, [#allocation8], 256, 256, 16
        $region32: #{tpu_custom_call.1} parent=11 // pred_fallthru
          _
        // Predicated region
        $region33: #{tpu_custom_call.1} parent=11 // pred_check
          %p263 = pneg %p175
        $region34: #{tpu_custom_call.1} parent=11 // pred_check_branch
          %265 = sbr.rel (%p263) target = $region36
        $region35: #{tpu_custom_call.1} parent=11 // pred_region
          %267 = vsyncadd [#allocation6], 0
          %s269 = sshll.u32 %s6, 4
          %s270 = int_to_ptr.vmem [resolvable:$true] %s269
          %272 = dma.vmem_to_smem %s270, 16, [#allocation9], [#allocation6]
        $region36: #{tpu_custom_call.1} parent=11 // pred_fallthru
          _
        // Predicated region
        $region37: #{tpu_custom_call.1} parent=11 // pred_check
          %p273 = pneg %p196
        $region38: #{tpu_custom_call.1} parent=11 // pred_check_branch
          %275 = sbr.rel (%p273) target = $region40
        $region39: #{tpu_custom_call.1} parent=11 // pred_region
          _
        $region40: #{tpu_custom_call.1} parent=11 // pred_fallthru
          _
      $region12: #{tpu_custom_call.1} parent=5 // pred_fallthru
        _
      %p276 = scmp.lt.s32.totalorder %s23, 2
      // Predicated region
      $region41: #{tpu_custom_call.1} parent=5 // pred_check
        %p277 = pneg %p276
      $region42: #{tpu_custom_call.1} parent=5 // pred_check_branch
        %279 = sbr.rel (%p277) target = $region44
      $region43: #{tpu_custom_call.1} parent=5 // pred_region
        // Predicated region
        $region45: #{tpu_custom_call.1} parent=43 // pred_check
          %p280 = pneg %p43
        $region46: #{tpu_custom_call.1} parent=43 // pred_check_branch
          %282 = sbr.rel (%p280) target = $region48
        $region47: #{tpu_custom_call.1} parent=43 // pred_region
          %s283 = sand.u32 %s33, 1
          %s284 = scalar_lea.sflag [#allocation4], %s283
          %s285 = sand.u32 %s33, 1
          %s286 = smul.addr %s285, 64
          %s287 = scalar_lea.vmem [#allocation3], %s286
          %289 = vsyncadd %s284, 0
          %s290 = smul.addr %s23, 16
          %s291 = smul.addr %s290, 4
          %s292 = scalar_lea.hbm %s0, %s291
          %s293 = sshll.u32 %s292, 4
          %s294 = int_to_ptr.hbm [resolvable:$true] %s293
          %s295 = sshll.u32 %s287, 4
          %s296 = int_to_ptr.vmem [resolvable:$true] %s295
          %301 = dma.hbm_to_vmem [thread:$0]  %s294, 1024, %s296, %s284, 128, 128, 8
        $region48: #{tpu_custom_call.1} parent=43 // pred_fallthru
          _
      $region44: #{tpu_custom_call.1} parent=5 // pred_fallthru
        _
      %p302 = scmp.le.s32.totalorder 1, %s23
      %p303 = scmp.lt.s32.totalorder %s23, 3
      %p304 = pnand %p302, %p303
      %p305 = pneg %p304
      // Predicated region
      $region49: #{tpu_custom_call.1} parent=5 // pred_check
        _
      $region50: #{tpu_custom_call.1} parent=5 // pred_check_branch
        %307 = sbr.rel (%p304) target = $region52
      $region51: #{tpu_custom_call.1} parent=5 // pred_region
        %s308 = ssub.s32 %s23, 1
        %s309 = sand.u32 %s36, 1
        %s310 = scalar_lea.sflag [#allocation4], %s309
        %s311 = sand.u32 %s36, 1
        %s312 = smul.addr %s311, 64
        %s313 = scalar_lea.vmem [#allocation3], %s312
        // Predicated region
        $region53: #{tpu_custom_call.1} parent=51 // pred_check
          %p314 = pneg %p49
        $region54: #{tpu_custom_call.1} parent=51 // pred_check_branch
          %316 = sbr.rel (%p314) target = $region56
        $region55: #{tpu_custom_call.1} parent=51 // pred_region
          %318 = dma.done %s310, 1024
        $region56: #{tpu_custom_call.1} parent=51 // pred_fallthru
          _
        // Predicated region
        $region57: #{tpu_custom_call.1} parent=51 // pred_check
          %p319 = pneg %p154
        $region58: #{tpu_custom_call.1} parent=51 // pred_check_branch
          %321 = sbr.rel (%p319) target = $region60
        $region59: #{tpu_custom_call.1} parent=51 // pred_region
          %323 = dma.done [#allocation8], 1792
        $region60: #{tpu_custom_call.1} parent=51 // pred_fallthru
          _
        // Predicated region
        $region61: #{tpu_custom_call.1} parent=51 // pred_check
          %p324 = pneg %p175
        $region62: #{tpu_custom_call.1} parent=51 // pred_check_branch
          %326 = sbr.rel (%p324) target = $region64
        $region63: #{tpu_custom_call.1} parent=51 // pred_region
          %328 = dma.done [#allocation6], 16
        $region64: #{tpu_custom_call.1} parent=51 // pred_fallthru
          _
        %329 = sfence
        %s330 = sand.u32 %s36, 1
        %s331 = scalar_lea.sflag [#allocation4], %s330
        %s332 = sand.u32 %s36, 1
        %s333 = smul.addr %s332, 64
        %s334 = scalar_lea.vmem [#allocation3], %s333
        %p335 = pneg %p49
        %p336 = pneg %p46
        %p337 = pneg %p70
        %p338 = pneg %p67
        %p339 = pneg %p91
        %p340 = pneg %p88
        %p341 = pneg %p112
        %p342 = pneg %p109
        %p343 = pneg %p133
        %p344 = pneg %p130
        %p345 = pneg %p154
        %p346 = pneg %p151
        %p347 = pneg %p175
        %p348 = pneg %p172
        %p349 = pneg %p196
        %p350 = pneg %p193
        %p351 = pneg %p222
        %p352 = pneg %p219
        %s353 = sand.u32 %s209, 1
        %s354 = scalar_lea.sflag [#allocation5], %s353
        %s355 = sand.u32 %s209, 1
        %s356 = smul.addr %s355, 16
        %s357 = scalar_lea.vmem [#allocation10], %s356
        %v359 = vld [vmem:[%s1] sm:$0xf]
        %v360 = vld [vmem:[%s313] sm:$0xff]
        %v361 = vld [vmem:[%s313 + $0x8] sm:$0xff]
        %v362 = vld [vmem:[%s313 + $0x10] sm:$0xff]
        %v363 = vld [vmem:[%s313 + $0x18] sm:$0xff]
        %v364 = vld [vmem:[%s313 + $0x20] sm:$0xff]
        %v365 = vld [vmem:[%s313 + $0x28] sm:$0xff]
        %v366 = vld [vmem:[%s313 + $0x30] sm:$0xff]
        %v367 = vld [vmem:[%s313 + $0x38] sm:$0xff]
        %v376 = vunpack.c.l.b16 %v360
        %v377 = vunpack.c.h.b16 %v360
        %v378 = vunpack.c.l.b16 %v361
        %v379 = vunpack.c.h.b16 %v361
        %v380 = vunpack.c.l.b16 %v362
        %v381 = vunpack.c.h.b16 %v362
        %v382 = vunpack.c.l.b16 %v363
        %v383 = vunpack.c.h.b16 %v363
        %v384 = vunpack.c.l.b16 %v364
        %v385 = vunpack.c.h.b16 %v364
        %v386 = vunpack.c.l.b16 %v365
        %v387 = vunpack.c.h.b16 %v365
        %v388 = vunpack.c.l.b16 %v366
        %v389 = vunpack.c.h.b16 %v366
        %v390 = vunpack.c.l.b16 %v367
        %v391 = vunpack.c.h.b16 %v367
        %v392 = vpack.c.b16 %v378, %v376
        %v393 = vpack.c.b16 %v379, %v377
        %v394 = vpack.c.b16 %v382, %v380
        %v395 = vpack.c.b16 %v383, %v381
        %v396 = vpack.c.b16 %v386, %v384
        %v397 = vpack.c.b16 %v387, %v385
        %v398 = vpack.c.b16 %v390, %v388
        %v399 = vpack.c.b16 %v391, %v389
        %vm408 = vcmask 523264
        %v410 = vsel %vm408, %v359, 0
        %412 = vmatpush.bf16.msra.mxu0 0
        %413 = vmatpush.bf16.msra.mxu0 0
        %414 = vmatpush.bf16.msra.mxu0 0
        %415 = vmatpush.bf16.msra.mxu0 0
        %416 = vmatpush.bf16.msra.mxu0 %v398
        %417 = vmatpush.bf16.msra.mxu0 %v396
        %418 = vmatpush.bf16.msra.mxu0 %v394
        %419 = vmatpush.bf16.msra.mxu0 %v392
        %420 = vmatmul.bf16.gmra.mxu0 %v410
        %v421 = vpop.f32.mrf.mxu0
        %v422 = vadd.f32 0.0, %v421
        %v423 = vpop.f32.mrf.mxu0
        %424 = vdwg.mxu0
        %425 = vmatpush.bf16.msra.mxu0 0
        %426 = vmatpush.bf16.msra.mxu0 0
        %427 = vmatpush.bf16.msra.mxu0 0
        %428 = vmatpush.bf16.msra.mxu0 0
        %429 = vmatpush.bf16.msra.mxu0 %v399
        %430 = vmatpush.bf16.msra.mxu0 %v397
        %431 = vmatpush.bf16.msra.mxu0 %v395
        %432 = vmatpush.bf16.msra.mxu0 %v393
        %433 = vmatmul.bf16.gmra.mxu0 %v410
        %v434 = vpop.f32.mrf.mxu0
        %v435 = vadd.f32 0.0, %v434
        %v436 = vpop.f32.mrf.mxu0
        %437 = vdwg.mxu0
        %v438 = vadd.f32 %v422, %v435
        %439 = vadd.xlane.f32.xlu0 %v438
        %v440 = vpop.xlane.xlu0 %439
        %v441 = vrcp.pop 256.0
        %v442 = vmul.f32 256.0, %v441
        %v443 = vsub.f32 1.0, %v442
        %v444 = vmul.f32 %v441, %v443
        %v445 = vadd.f32 %v441, %v444
        %vm446 = vweird.f32 %v441
        %v447 = vsel %vm446, %v441, %v445
        %v448 = vmul.f32 %v440, %v447
        %v449 = vmul.f32 %v422, %v422
        %v450 = vmul.f32 %v435, %v435
        %v451 = vadd.f32 %v449, %v450
        %452 = vadd.xlane.f32.xlu0 %v451
        %v453 = vpop.xlane.xlu0 %452
        %v454 = vmul.f32 %v453, %v447
        %v455 = vmul.f32 %v448, %v448
        %v456 = vsub.f32 %v454, %v455
        %v457 = vmax.f32 %v456, 0.0
        %v458 = vsub.f32 %v422, %v448
        %v459 = vsub.f32 %v435, %v448
        %v460 = vadd.f32 %v457, 1e-05
        %v461 = vrsqrt.pop %v460
        %v462 = vmul.f32 %v461, %v460
        %v463 = vmul.f32 %v462, %v461
        %v464 = vmul.f32 0.5, %v463
        %v465 = vsub.f32 1.5, %v464
        %v466 = vmul.f32 %v461, %v465
        %vm467 = vweird.f32 %v460
        %vm468 = vweird.f32 %v461
        %vm469 = vmor %vm467, %vm468
        %v470 = vsel %vm469, %v461, %v466
        %v471 = vmul.f32 %v458, %v470
        %v472 = vmul.f32 %v459, %v470
        %vm473 = vcmp.gt.f32.partialorder %v471, 0.0
        %vm474 = vcmp.gt.f32.partialorder %v472, 0.0
        %v475 = vmul.f32 %v471, 0.1
        %v476 = vmul.f32 %v472, 0.1
        %v477 = vsel %vm473, %v471, %v475
        %v478 = vsel %vm474, %v472, %v476
        %v479 = vld [vmem:[%s2] sm:$0xf]
        %v480 = vpack.c.bf16 %v477, %v477
        %v481 = vpack.c.bf16 %v478, %v478
        %vm482 = vcmask 64512
        %v484 = vsel %vm482, %v479, 0
        %vm486 = vcmask 1043456
        %v488 = vsel %vm486, %v480, 0
        %v491 = vsel %vm486, %v481, 0
        %493 = vmatpush.bf16.msra.mxu0 0
        %494 = vmatpush.bf16.msra.mxu0 0
        %495 = vmatpush.bf16.msra.mxu0 0
        %496 = vmatpush.bf16.msra.mxu0 0
        %497 = vmatpush.bf16.msra.mxu0 0
        %498 = vmatpush.bf16.msra.mxu0 0
        %499 = vmatpush.bf16.msra.mxu0 0
        %500 = vmatpush.bf16.msra.mxu0 %v488
        %501 = vmatmul.bf16.gmra.mxu0 %v484
        %v502 = vpop.f32.mrf.mxu0
        %v503 = vadd.f32 0.0, %v502
        %v504 = vpop.f32.mrf.mxu0
        %505 = vdwg.mxu0
        %506 = vmatpush.bf16.msra.mxu0 0
        %507 = vmatpush.bf16.msra.mxu0 0
        %508 = vmatpush.bf16.msra.mxu0 0
        %509 = vmatpush.bf16.msra.mxu0 0
        %510 = vmatpush.bf16.msra.mxu0 0
        %511 = vmatpush.bf16.msra.mxu0 0
        %512 = vmatpush.bf16.msra.mxu0 0
        %513 = vmatpush.bf16.msra.mxu0 %v491
        %514 = vmatmul.bf16.gmra.mxu0 %v484
        %v515 = vpop.f32.mrf.mxu0
        %v516 = vadd.f32 0.0, %v515
        %v517 = vpop.f32.mrf.mxu0
        %518 = vdwg.mxu0
        %v519 = vadd.f32 %v503, %v516
        %520 = vadd.xlane.f32.xlu0 %v519
        %v521 = vpop.xlane.xlu0 %520
        %v522 = vmul.f32 %v521, %v447
        %v523 = vmax.f32 %v503, %v516
        %524 = vmax.xlane.f32.xlu0 %v523
        %v525 = vpop.xlane.xlu0 %524
        %vm526 = vcmask 7168
        %v527 = vsel %vm526, %v522, %v525
        %v528 = vld [vmem:[%s3] sm:$0xf]
        %v530 = vsel %vm482, %v528, 0
        %532 = vmatpush.msra.mxu0 0.0
        %533 = vmatpush.msra.mxu0 0.0
        %534 = vmatpush.msra.mxu0 0.0
        %535 = vmatpush.msra.mxu0 0.0
        %536 = vmatpush.msra.mxu0 0.0
        %537 = vmatpush.msra.mxu0 0.0
        %538 = vmatpush.msra.mxu0 0.0
        %539 = vmatpush.msra.mxu0 0.0
        %540 = vmatpush.msra.mxu0 0.0
        %541 = vmatpush.msra.mxu0 0.0
        %542 = vmatpush.msra.mxu0 0.0
        %543 = vmatpush.msra.mxu0 0.0
        %544 = vmatpush.msra.mxu0 0.0
        %545 = vmatpush.msra.mxu0 0.0
        %546 = vmatpush.msra.mxu0 0.0
        %547 = vmatpush.msra.mxu0 %v527
        %548 = vmatmul.f32.gmra.mxu0 %v530
        %v549 = vpop.f32.mrf.mxu0
        %v550 = vadd.f32 0.0, %v549
        %551 = vdwg.mxu0
        %v552 = vmax.f32 %v550, 0.0
        %v553 = vld [vmem:[%s4] sm:$0xff]
        %vm554 = vcmask 31744
        %v556 = vsel %vm554, %v553, 0
        %v559 = vsel %vm486, %v552, 0
        %561 = vmatpush.msra.mxu0 0.0
        %562 = vmatpush.msra.mxu0 0.0
        %563 = vmatpush.msra.mxu0 0.0
        %564 = vmatpush.msra.mxu0 0.0
        %565 = vmatpush.msra.mxu0 0.0
        %566 = vmatpush.msra.mxu0 0.0
        %567 = vmatpush.msra.mxu0 0.0
        %568 = vmatpush.msra.mxu0 0.0
        %569 = vmatpush.msra.mxu0 0.0
        %570 = vmatpush.msra.mxu0 0.0
        %571 = vmatpush.msra.mxu0 0.0
        %572 = vmatpush.msra.mxu0 0.0
        %573 = vmatpush.msra.mxu0 0.0
        %574 = vmatpush.msra.mxu0 0.0
        %575 = vmatpush.msra.mxu0 0.0
        %576 = vmatpush.msra.mxu0 %v559
        %577 = vmatmul.f32.gmra.mxu0 %v556
        %v578 = vpop.f32.mrf.mxu0
        %v579 = vadd.f32 0.0, %v578
        %580 = vdwg.mxu0
        %582 = vrot.lane.b32.xlu0 %v579, 127
        %v583 = vpop.permute.xlu0 %582
        %v585 = vadd.f32 %v579, %v583
        %v586 = vxor.u32 %v585, 2147483648
        %v587 = vmul.f32 %v586, 1.442695
        %v588 = vpow.pop %v587
        %v589 = vadd.f32 %v588, 1.0
        %v590 = vrcp.pop %v589
        %v591 = vmul.f32 %v589, %v590
        %v592 = vsub.f32 1.0, %v591
        %v593 = vmul.f32 %v590, %v592
        %v594 = vadd.f32 %v590, %v593
        %vm595 = vweird.f32 %v589
        %vm596 = vweird.f32 %v590
        %vm597 = vmor %vm595, %vm596
        %v598 = vsel %vm597, %v590, %v594
        %v599 = vand.u32 2147483647, %v589
        %vm600 = vcmp.eq.f32.partialorder %v599, 8.507059e+37
        %v601 = vand.u32 %v589, 2147483648
        %v602 = vor.u32 1.1754944e-38, %v601
        %v603 = vsel %vm600, %v602, %v598
        %v604 = vmul.f32 1.0, %v603
        %606 = vset.pattern.permute.xlu0 0
        %607 = vperm.xlu0 %606, %v604
        %v608 = vpop.permute.xlu0 %607
        %v610 = vmul.f32 %v503, %v608
        %v611 = vmul.f32 %v516, %v608
        %v612 = vrot.slane %v610, 4
        %v613 = vadd.f32 %v610, %v612
        %v614 = vrot.slane %v613, 2
        %v615 = vadd.f32 %v613, %v614
        %v616 = vrot.slane %v615, 1
        %v617 = vadd.f32 %v615, %v616
        %v618 = vrot.slane %v611, 4
        %v619 = vadd.f32 %v611, %v618
        %v620 = vrot.slane %v619, 2
        %v621 = vadd.f32 %v619, %v620
        %v622 = vrot.slane %v621, 1
        %v623 = vadd.f32 %v621, %v622
        %v624 = vrcp.pop 8.0
        %v625 = vmul.f32 8.0, %v624
        %v626 = vsub.f32 1.0, %v625
        %v627 = vmul.f32 %v624, %v626
        %v628 = vadd.f32 %v624, %v627
        %vm629 = vweird.f32 %v624
        %v630 = vsel %vm629, %v624, %v628
        %v631 = vmul.f32 %v617, %v630
        %v632 = vmul.f32 %v623, %v630
        %v633 = vrot.slane %v610, 4
        %v634 = vmax.f32 %v610, %v633
        %v635 = vrot.slane %v634, 2
        %v636 = vmax.f32 %v634, %v635
        %v637 = vrot.slane %v636, 1
        %v638 = vmax.f32 %v636, %v637
        %v639 = vrot.slane %v611, 4
        %v640 = vmax.f32 %v611, %v639
        %v641 = vrot.slane %v640, 2
        %v642 = vmax.f32 %v640, %v641
        %v643 = vrot.slane %v642, 1
        %v644 = vmax.f32 %v642, %v643
        %vm645 = vcmask 1040384
        %v646 = vsel %vm645, %v631, %v638
        %v647 = vsel %vm645, %v632, %v644
        %s648 = sld [smem:[#allocation2]]
        %v649 = vstv %s648
        %v650 = vadd.f32 %v649, 0.0
        %652 = vrot.lane.b32.xlu0 %v647, 51
        %v653 = vpop.permute.xlu0 %652
        %656 = vrot.lane.b32.xlu0 %v646, 51
        %v657 = vpop.permute.xlu0 %656
        %vm658 = vcmask 416768
        %v659 = vsel %vm658, %v657, %v653
        %v662 = vsel %vm658, %v653, %v657
        %v663 = vld [vmem:[#allocation7] ss:$8 sm:$0x3]
        %s664 = sld [smem:[#allocation9]]
        %v665 = vstv %s664
        %v666 = vmul.f32 %v665, %v662
        %v667 = vmul.f32 %v665, %v659
        %s668 = sld [smem:[#allocation9 + $0x31]]
        %v669 = vstv %s668
        %v670 = vmul.f32 %v669, %v662
        %v671 = vmul.f32 %v669, %v659
        %v674 = vrot.slane %v670, 1
        %v675 = vrot.slane %v671, 1
        %v678 = vadd.f32 %v666, %v674
        %v679 = vadd.f32 %v667, %v675
        %v682 = vrot.slane %v679, 7
        %v683 = vsel %vm645, %v678, %v682
        %v685 = vmul.f32 %v663, %v683
        %v686 = vadd.f32 %v650, %v685
        %687 = vrot.lane.b32.xlu0 %v647, 50
        %v688 = vpop.permute.xlu0 %687
        %690 = vrot.lane.b32.xlu0 %v646, 50
        %v691 = vpop.permute.xlu0 %690
        %vm692 = vcmask 408576
        %v693 = vsel %vm692, %v691, %v688
        %v696 = vsel %vm692, %v688, %v691
        %s697 = scalar_lea.vmem [#allocation7], 1
        %v698 = vld [vmem:[%s697] ss:$8 sm:$0x3]
        %s699 = sld [smem:[#allocation9 + $0x1]]
        %v700 = vstv %s699
        %v701 = vmul.f32 %v700, %v696
        %v702 = vmul.f32 %v700, %v693
        %s703 = sld [smem:[#allocation9 + $0x32]]
        %v704 = vstv %s703
        %v705 = vmul.f32 %v704, %v696
        %v706 = vmul.f32 %v704, %v693
        %v709 = vrot.slane %v705, 1
        %v710 = vrot.slane %v706, 1
        %v713 = vadd.f32 %v701, %v709
        %v714 = vadd.f32 %v702, %v710
        %v717 = vrot.slane %v714, 7
        %v718 = vsel %vm645, %v713, %v717
        %v720 = vmul.f32 %v698, %v718
        %v721 = vadd.f32 %v686, %v720
        %722 = vrot.lane.b32.xlu0 %v647, 49
        %v723 = vpop.permute.xlu0 %722
        %725 = vrot.lane.b32.xlu0 %v646, 49
        %v726 = vpop.permute.xlu0 %725
        %vm727 = vcmask 400384
        %v728 = vsel %vm727, %v726, %v723
        %v731 = vsel %vm727, %v723, %v726
        %s732 = scalar_lea.vmem [#allocation7], 2
        %v733 = vld [vmem:[%s732] ss:$8 sm:$0x3]
        %s734 = sld [smem:[#allocation9 + $0x2]]
        %v735 = vstv %s734
        %v736 = vmul.f32 %v735, %v731
        %v737 = vmul.f32 %v735, %v728
        %s738 = sld [smem:[#allocation9 + $0x33]]
        %v739 = vstv %s738
        %v740 = vmul.f32 %v739, %v731
        %v741 = vmul.f32 %v739, %v728
        %v744 = vrot.slane %v740, 1
        %v745 = vrot.slane %v741, 1
        %v748 = vadd.f32 %v736, %v744
        %v749 = vadd.f32 %v737, %v745
        %v752 = vrot.slane %v749, 7
        %v753 = vsel %vm645, %v748, %v752
        %v755 = vmul.f32 %v733, %v753
        %v756 = vadd.f32 %v721, %v755
        %757 = vrot.lane.b32.xlu0 %v647, 48
        %v758 = vpop.permute.xlu0 %757
        %760 = vrot.lane.b32.xlu0 %v646, 48
        %v761 = vpop.permute.xlu0 %760
        %vm762 = vcmask 392192
        %v763 = vsel %vm762, %v761, %v758
        %v766 = vsel %vm762, %v758, %v761
        %s767 = scalar_lea.vmem [#allocation7], 3
        %v768 = vld [vmem:[%s767] ss:$8 sm:$0x3]
        %s769 = sld [smem:[#allocation9 + $0x3]]
        %v770 = vstv %s769
        %v771 = vmul.f32 %v770, %v766
        %v772 = vmul.f32 %v770, %v763
        %s773 = sld [smem:[#allocation9 + $0x34]]
        %v774 = vstv %s773
        %v775 = vmul.f32 %v774, %v766
        %v776 = vmul.f32 %v774, %v763
        %v779 = vrot.slane %v775, 1
        %v780 = vrot.slane %v776, 1
        %v783 = vadd.f32 %v771, %v779
        %v784 = vadd.f32 %v772, %v780
        %v787 = vrot.slane %v784, 7
        %v788 = vsel %vm645, %v783, %v787
        %v790 = vmul.f32 %v768, %v788
        %v791 = vadd.f32 %v756, %v790
        %792 = vrot.lane.b32.xlu0 %v647, 47
        %v793 = vpop.permute.xlu0 %792
        %795 = vrot.lane.b32.xlu0 %v646, 47
        %v796 = vpop.permute.xlu0 %795
        %vm797 = vcmask 384000
        %v798 = vsel %vm797, %v796, %v793
        %v801 = vsel %vm797, %v793, %v796
        %s802 = scalar_lea.vmem [#allocation7], 4
        %v803 = vld [vmem:[%s802] ss:$8 sm:$0x3]
        %s804 = sld [smem:[#allocation9 + $0x4]]
        %v805 = vstv %s804
        %v806 = vmul.f32 %v805, %v801
        %v807 = vmul.f32 %v805, %v798
        %s808 = sld [smem:[#allocation9 + $0x35]]
        %v809 = vstv %s808
        %v810 = vmul.f32 %v809, %v801
        %v811 = vmul.f32 %v809, %v798
        %v814 = vrot.slane %v810, 1
        %v815 = vrot.slane %v811, 1
        %v818 = vadd.f32 %v806, %v814
        %v819 = vadd.f32 %v807, %v815
        %v822 = vrot.slane %v819, 7
        %v823 = vsel %vm645, %v818, %v822
        %v825 = vmul.f32 %v803, %v823
        %v826 = vadd.f32 %v791, %v825
        %827 = vrot.lane.b32.xlu0 %v647, 46
        %v828 = vpop.permute.xlu0 %827
        %830 = vrot.lane.b32.xlu0 %v646, 46
        %v831 = vpop.permute.xlu0 %830
        %vm832 = vcmask 375808
        %v833 = vsel %vm832, %v831, %v828
        %v836 = vsel %vm832, %v828, %v831
        %s837 = scalar_lea.vmem [#allocation7], 5
        %v838 = vld [vmem:[%s837] ss:$8 sm:$0x3]
        %s839 = sld [smem:[#allocation9 + $0x5]]
        %v840 = vstv %s839
        %v841 = vmul.f32 %v840, %v836
        %v842 = vmul.f32 %v840, %v833
        %s843 = sld [smem:[#allocation9 + $0x36]]
        %v844 = vstv %s843
        %v845 = vmul.f32 %v844, %v836
        %v846 = vmul.f32 %v844, %v833
        %v849 = vrot.slane %v845, 1
        %v850 = vrot.slane %v846, 1
        %v853 = vadd.f32 %v841, %v849
        %v854 = vadd.f32 %v842, %v850
        %v857 = vrot.slane %v854, 7
        %v858 = vsel %vm645, %v853, %v857
        %v860 = vmul.f32 %v838, %v858
        %v861 = vadd.f32 %v826, %v860
        %862 = vrot.lane.b32.xlu0 %v647, 45
        %v863 = vpop.permute.xlu0 %862
        %865 = vrot.lane.b32.xlu0 %v646, 45
        %v866 = vpop.permute.xlu0 %865
        %vm867 = vcmask 367616
        %v868 = vsel %vm867, %v866, %v863
        %v871 = vsel %vm867, %v863, %v866
        %s872 = scalar_lea.vmem [#allocation7], 6
        %v873 = vld [vmem:[%s872] ss:$8 sm:$0x3]
        %s874 = sld [smem:[#allocation9 + $0x6]]
        %v875 = vstv %s874
        %v876 = vmul.f32 %v875, %v871
        %v877 = vmul.f32 %v875, %v868
        %s878 = sld [smem:[#allocation9 + $0x37]]
        %v879 = vstv %s878
        %v880 = vmul.f32 %v879, %v871
        %v881 = vmul.f32 %v879, %v868
        %v884 = vrot.slane %v880, 1
        %v885 = vrot.slane %v881, 1
        %v888 = vadd.f32 %v876, %v884
        %v889 = vadd.f32 %v877, %v885
        %v892 = vrot.slane %v889, 7
        %v893 = vsel %vm645, %v888, %v892
        %v895 = vmul.f32 %v873, %v893
        %v896 = vadd.f32 %v861, %v895
        %897 = vrot.lane.b32.xlu0 %v647, 35
        %v898 = vpop.permute.xlu0 %897
        %900 = vrot.lane.b32.xlu0 %v646, 35
        %v901 = vpop.permute.xlu0 %900
        %vm902 = vcmask 285696
        %v903 = vsel %vm902, %v901, %v898
        %v906 = vsel %vm902, %v898, %v901
        %s907 = scalar_lea.vmem [#allocation7], 7
        %v908 = vld [vmem:[%s907] ss:$8 sm:$0x3]
        %s909 = sld [smem:[#allocation9 + $0x7]]
        %v910 = vstv %s909
        %v911 = vmul.f32 %v910, %v906
        %v912 = vmul.f32 %v910, %v903
        %s913 = sld [smem:[#allocation9 + $0x38]]
        %v914 = vstv %s913
        %v915 = vmul.f32 %v914, %v906
        %v916 = vmul.f32 %v914, %v903
        %v919 = vrot.slane %v915, 1
        %v920 = vrot.slane %v916, 1
        %v923 = vadd.f32 %v911, %v919
        %v924 = vadd.f32 %v912, %v920
        %v927 = vrot.slane %v924, 7
        %v928 = vsel %vm645, %v923, %v927
        %v930 = vmul.f32 %v908, %v928
        %v931 = vadd.f32 %v896, %v930
        %932 = vrot.lane.b32.xlu0 %v647, 34
        %v933 = vpop.permute.xlu0 %932
        %935 = vrot.lane.b32.xlu0 %v646, 34
        %v936 = vpop.permute.xlu0 %935
        %vm937 = vcmask 277504
        %v938 = vsel %vm937, %v936, %v933
        %v941 = vsel %vm937, %v933, %v936
        %s942 = scalar_lea.vmem [#allocation7], 16
        %v943 = vld [vmem:[%s942] ss:$8 sm:$0x3]
        %s944 = sld [smem:[#allocation9 + $0x8]]
        %v945 = vstv %s944
        %v946 = vmul.f32 %v945, %v941
        %v947 = vmul.f32 %v945, %v938
        %s948 = sld [smem:[#allocation9 + $0x39]]
        %v949 = vstv %s948
        %v950 = vmul.f32 %v949, %v941
        %v951 = vmul.f32 %v949, %v938
        %v954 = vrot.slane %v950, 1
        %v955 = vrot.slane %v951, 1
        %v958 = vadd.f32 %v946, %v954
        %v959 = vadd.f32 %v947, %v955
        %v962 = vrot.slane %v959, 7
        %v963 = vsel %vm645, %v958, %v962
        %v965 = vmul.f32 %v943, %v963
        %v966 = vadd.f32 %v931, %v965
        %967 = vrot.lane.b32.xlu0 %v647, 33
        %v968 = vpop.permute.xlu0 %967
        %970 = vrot.lane.b32.xlu0 %v646, 33
        %v971 = vpop.permute.xlu0 %970
        %vm972 = vcmask 269312
        %v973 = vsel %vm972, %v971, %v968
        %v976 = vsel %vm972, %v968, %v971
        %s977 = scalar_lea.vmem [#allocation7], 17
        %v978 = vld [vmem:[%s977] ss:$8 sm:$0x3]
        %s979 = sld [smem:[#allocation9 + $0x9]]
        %v980 = vstv %s979
        %v981 = vmul.f32 %v980, %v976
        %v982 = vmul.f32 %v980, %v973
        %s983 = sld [smem:[#allocation9 + $0x3a]]
        %v984 = vstv %s983
        %v985 = vmul.f32 %v984, %v976
        %v986 = vmul.f32 %v984, %v973
        %v989 = vrot.slane %v985, 1
        %v990 = vrot.slane %v986, 1
        %v993 = vadd.f32 %v981, %v989
        %v994 = vadd.f32 %v982, %v990
        %v997 = vrot.slane %v994, 7
        %v998 = vsel %vm645, %v993, %v997
        %v1000 = vmul.f32 %v978, %v998
        %v1001 = vadd.f32 %v966, %v1000
        %1002 = vrot.lane.b32.xlu0 %v647, 32
        %v1003 = vpop.permute.xlu0 %1002
        %1005 = vrot.lane.b32.xlu0 %v646, 32
        %v1006 = vpop.permute.xlu0 %1005
        %vm1007 = vcmask 261120
        %v1008 = vsel %vm1007, %v1006, %v1003
        %v1011 = vsel %vm1007, %v1003, %v1006
        %s1012 = scalar_lea.vmem [#allocation7], 18
        %v1013 = vld [vmem:[%s1012] ss:$8 sm:$0x3]
        %s1014 = sld [smem:[#allocation9 + $0xa]]
        %v1015 = vstv %s1014
        %v1016 = vmul.f32 %v1015, %v1011
        %v1017 = vmul.f32 %v1015, %v1008
        %s1018 = sld [smem:[#allocation9 + $0x3b]]
        %v1019 = vstv %s1018
        %v1020 = vmul.f32 %v1019, %v1011
        %v1021 = vmul.f32 %v1019, %v1008
        %v1024 = vrot.slane %v1020, 1
        %v1025 = vrot.slane %v1021, 1
        %v1028 = vadd.f32 %v1016, %v1024
        %v1029 = vadd.f32 %v1017, %v1025
        %v1032 = vrot.slane %v1029, 7
        %v1033 = vsel %vm645, %v1028, %v1032
        %v1035 = vmul.f32 %v1013, %v1033
        %v1036 = vadd.f32 %v1001, %v1035
        %1037 = vrot.lane.b32.xlu0 %v647, 31
        %v1038 = vpop.permute.xlu0 %1037
        %1040 = vrot.lane.b32.xlu0 %v646, 31
        %v1041 = vpop.permute.xlu0 %1040
        %vm1042 = vcmask 252928
        %v1043 = vsel %vm1042, %v1041, %v1038
        %v1046 = vsel %vm1042, %v1038, %v1041
        %s1047 = scalar_lea.vmem [#allocation7], 19
        %v1048 = vld [vmem:[%s1047] ss:$8 sm:$0x3]
        %s1049 = sld [smem:[#allocation9 + $0xb]]
        %v1050 = vstv %s1049
        %v1051 = vmul.f32 %v1050, %v1046
        %v1052 = vmul.f32 %v1050, %v1043
        %s1053 = sld [smem:[#allocation9 + $0x3c]]
        %v1054 = vstv %s1053
        %v1055 = vmul.f32 %v1054, %v1046
        %v1056 = vmul.f32 %v1054, %v1043
        %v1059 = vrot.slane %v1055, 1
        %v1060 = vrot.slane %v1056, 1
        %v1063 = vadd.f32 %v1051, %v1059
        %v1064 = vadd.f32 %v1052, %v1060
        %v1067 = vrot.slane %v1064, 7
        %v1068 = vsel %vm645, %v1063, %v1067
        %v1070 = vmul.f32 %v1048, %v1068
        %v1071 = vadd.f32 %v1036, %v1070
        %1072 = vrot.lane.b32.xlu0 %v647, 30
        %v1073 = vpop.permute.xlu0 %1072
        %1075 = vrot.lane.b32.xlu0 %v646, 30
        %v1076 = vpop.permute.xlu0 %1075
        %vm1077 = vcmask 244736
        %v1078 = vsel %vm1077, %v1076, %v1073
        %v1081 = vsel %vm1077, %v1073, %v1076
        %s1082 = scalar_lea.vmem [#allocation7], 20
        %v1083 = vld [vmem:[%s1082] ss:$8 sm:$0x3]
        %s1084 = sld [smem:[#allocation9 + $0xc]]
        %v1085 = vstv %s1084
        %v1086 = vmul.f32 %v1085, %v1081
        %v1087 = vmul.f32 %v1085, %v1078
        %s1088 = sld [smem:[#allocation9 + $0x3d]]
        %v1089 = vstv %s1088
        %v1090 = vmul.f32 %v1089, %v1081
        %v1091 = vmul.f32 %v1089, %v1078
        %v1094 = vrot.slane %v1090, 1
        %v1095 = vrot.slane %v1091, 1
        %v1098 = vadd.f32 %v1086, %v1094
        %v1099 = vadd.f32 %v1087, %v1095
        %v1102 = vrot.slane %v1099, 7
        %v1103 = vsel %vm645, %v1098, %v1102
        %v1105 = vmul.f32 %v1083, %v1103
        %v1106 = vadd.f32 %v1071, %v1105
        %1107 = vrot.lane.b32.xlu0 %v647, 29
        %v1108 = vpop.permute.xlu0 %1107
        %1110 = vrot.lane.b32.xlu0 %v646, 29
        %v1111 = vpop.permute.xlu0 %1110
        %vm1112 = vcmask 236544
        %v1113 = vsel %vm1112, %v1111, %v1108
        %v1116 = vsel %vm1112, %v1108, %v1111
        %s1117 = scalar_lea.vmem [#allocation7], 21
        %v1118 = vld [vmem:[%s1117] ss:$8 sm:$0x3]
        %s1119 = sld [smem:[#allocation9 + $0xd]]
        %v1120 = vstv %s1119
        %v1121 = vmul.f32 %v1120, %v1116
        %v1122 = vmul.f32 %v1120, %v1113
        %s1123 = sld [smem:[#allocation9 + $0x3e]]
        %v1124 = vstv %s1123
        %v1125 = vmul.f32 %v1124, %v1116
        %v1126 = vmul.f32 %v1124, %v1113
        %v1129 = vrot.slane %v1125, 1
        %v1130 = vrot.slane %v1126, 1
        %v1133 = vadd.f32 %v1121, %v1129
        %v1134 = vadd.f32 %v1122, %v1130
        %v1137 = vrot.slane %v1134, 7
        %v1138 = vsel %vm645, %v1133, %v1137
        %v1140 = vmul.f32 %v1118, %v1138
        %v1141 = vadd.f32 %v1106, %v1140
        %1142 = vrot.lane.b32.xlu0 %v647, 19
        %v1143 = vpop.permute.xlu0 %1142
        %1145 = vrot.lane.b32.xlu0 %v646, 19
        %v1146 = vpop.permute.xlu0 %1145
        %vm1147 = vcmask 154624
        %v1148 = vsel %vm1147, %v1146, %v1143
        %v1151 = vsel %vm1147, %v1143, %v1146
        %s1152 = scalar_lea.vmem [#allocation7], 22
        %v1153 = vld [vmem:[%s1152] ss:$8 sm:$0x3]
        %s1154 = sld [smem:[#allocation9 + $0xe]]
        %v1155 = vstv %s1154
        %v1156 = vmul.f32 %v1155, %v1151
        %v1157 = vmul.f32 %v1155, %v1148
        %s1158 = sld [smem:[#allocation9 + $0x3f]]
        %v1159 = vstv %s1158
        %v1160 = vmul.f32 %v1159, %v1151
        %v1161 = vmul.f32 %v1159, %v1148
        %v1164 = vrot.slane %v1160, 1
        %v1165 = vrot.slane %v1161, 1
        %v1168 = vadd.f32 %v1156, %v1164
        %v1169 = vadd.f32 %v1157, %v1165
        %v1172 = vrot.slane %v1169, 7
        %v1173 = vsel %vm645, %v1168, %v1172
        %v1175 = vmul.f32 %v1153, %v1173
        %v1176 = vadd.f32 %v1141, %v1175
        %1177 = vrot.lane.b32.xlu0 %v647, 18
        %v1178 = vpop.permute.xlu0 %1177
        %1180 = vrot.lane.b32.xlu0 %v646, 18
        %v1181 = vpop.permute.xlu0 %1180
        %vm1182 = vcmask 146432
        %v1183 = vsel %vm1182, %v1181, %v1178
        %v1186 = vsel %vm1182, %v1178, %v1181
        %s1187 = scalar_lea.vmem [#allocation7], 23
        %v1188 = vld [vmem:[%s1187] ss:$8 sm:$0x3]
        %s1189 = sld [smem:[#allocation9 + $0xf]]
        %v1190 = vstv %s1189
        %v1191 = vmul.f32 %v1190, %v1186
        %v1192 = vmul.f32 %v1190, %v1183
        %s1193 = sld [smem:[#allocation9 + $0x40]]
        %v1194 = vstv %s1193
        %v1195 = vmul.f32 %v1194, %v1186
        %v1196 = vmul.f32 %v1194, %v1183
        %v1199 = vrot.slane %v1195, 1
        %v1200 = vrot.slane %v1196, 1
        %v1203 = vadd.f32 %v1191, %v1199
        %v1204 = vadd.f32 %v1192, %v1200
        %v1207 = vrot.slane %v1204, 7
        %v1208 = vsel %vm645, %v1203, %v1207
        %v1210 = vmul.f32 %v1188, %v1208
        %v1211 = vadd.f32 %v1176, %v1210
        %1212 = vrot.lane.b32.xlu0 %v647, 17
        %v1213 = vpop.permute.xlu0 %1212
        %1215 = vrot.lane.b32.xlu0 %v646, 17
        %v1216 = vpop.permute.xlu0 %1215
        %vm1217 = vcmask 138240
        %v1218 = vsel %vm1217, %v1216, %v1213
        %v1221 = vsel %vm1217, %v1213, %v1216
        %s1222 = scalar_lea.vmem [#allocation7], 32
        %v1223 = vld [vmem:[%s1222] ss:$8 sm:$0x3]
        %s1224 = sld [smem:[#allocation9 + $0x10]]
        %v1225 = vstv %s1224
        %v1226 = vmul.f32 %v1225, %v1221
        %v1227 = vmul.f32 %v1225, %v1218
        %s1228 = sld [smem:[#allocation9 + $0x41]]
        %v1229 = vstv %s1228
        %v1230 = vmul.f32 %v1229, %v1221
        %v1231 = vmul.f32 %v1229, %v1218
        %v1234 = vrot.slane %v1230, 1
        %v1235 = vrot.slane %v1231, 1
        %v1238 = vadd.f32 %v1226, %v1234
        %v1239 = vadd.f32 %v1227, %v1235
        %v1242 = vrot.slane %v1239, 7
        %v1243 = vsel %vm645, %v1238, %v1242
        %v1245 = vmul.f32 %v1223, %v1243
        %v1246 = vadd.f32 %v1211, %v1245
        %1247 = vrot.lane.b32.xlu0 %v647, 16
        %v1248 = vpop.permute.xlu0 %1247
        %1250 = vrot.lane.b32.xlu0 %v646, 16
        %v1251 = vpop.permute.xlu0 %1250
        %vm1252 = vcmask 130048
        %v1253 = vsel %vm1252, %v1251, %v1248
        %v1256 = vsel %vm1252, %v1248, %v1251
        %s1257 = scalar_lea.vmem [#allocation7], 33
        %v1258 = vld [vmem:[%s1257] ss:$8 sm:$0x3]
        %s1259 = sld [smem:[#allocation9 + $0x11]]
        %v1260 = vstv %s1259
        %v1261 = vmul.f32 %v1260, %v1256
        %v1262 = vmul.f32 %v1260, %v1253
        %s1263 = sld [smem:[#allocation9 + $0x42]]
        %v1264 = vstv %s1263
        %v1265 = vmul.f32 %v1264, %v1256
        %v1266 = vmul.f32 %v1264, %v1253
        %v1269 = vrot.slane %v1265, 1
        %v1270 = vrot.slane %v1266, 1
        %v1273 = vadd.f32 %v1261, %v1269
        %v1274 = vadd.f32 %v1262, %v1270
        %v1277 = vrot.slane %v1274, 7
        %v1278 = vsel %vm645, %v1273, %v1277
        %v1280 = vmul.f32 %v1258, %v1278
        %v1281 = vadd.f32 %v1246, %v1280
        %1282 = vrot.lane.b32.xlu0 %v647, 15
        %v1283 = vpop.permute.xlu0 %1282
        %1285 = vrot.lane.b32.xlu0 %v646, 15
        %v1286 = vpop.permute.xlu0 %1285
        %vm1287 = vcmask 121856
        %v1288 = vsel %vm1287, %v1286, %v1283
        %v1291 = vsel %vm1287, %v1283, %v1286
        %s1292 = scalar_lea.vmem [#allocation7], 34
        %v1293 = vld [vmem:[%s1292] ss:$8 sm:$0x3]
        %s1294 = sld [smem:[#allocation9 + $0x12]]
        %v1295 = vstv %s1294
        %v1296 = vmul.f32 %v1295, %v1291
        %v1297 = vmul.f32 %v1295, %v1288
        %s1298 = sld [smem:[#allocation9 + $0x43]]
        %v1299 = vstv %s1298
        %v1300 = vmul.f32 %v1299, %v1291
        %v1301 = vmul.f32 %v1299, %v1288
        %v1304 = vrot.slane %v1300, 1
        %v1305 = vrot.slane %v1301, 1
        %v1308 = vadd.f32 %v1296, %v1304
        %v1309 = vadd.f32 %v1297, %v1305
        %v1312 = vrot.slane %v1309, 7
        %v1313 = vsel %vm645, %v1308, %v1312
        %v1315 = vmul.f32 %v1293, %v1313
        %v1316 = vadd.f32 %v1281, %v1315
        %1317 = vrot.lane.b32.xlu0 %v647, 14
        %v1318 = vpop.permute.xlu0 %1317
        %1320 = vrot.lane.b32.xlu0 %v646, 14
        %v1321 = vpop.permute.xlu0 %1320
        %vm1322 = vcmask 113664
        %v1323 = vsel %vm1322, %v1321, %v1318
        %v1326 = vsel %vm1322, %v1318, %v1321
        %s1327 = scalar_lea.vmem [#allocation7], 35
        %v1328 = vld [vmem:[%s1327] ss:$8 sm:$0x3]
        %s1329 = sld [smem:[#allocation9 + $0x13]]
        %v1330 = vstv %s1329
        %v1331 = vmul.f32 %v1330, %v1326
        %v1332 = vmul.f32 %v1330, %v1323
        %s1333 = sld [smem:[#allocation9 + $0x44]]
        %v1334 = vstv %s1333
        %v1335 = vmul.f32 %v1334, %v1326
        %v1336 = vmul.f32 %v1334, %v1323
        %v1339 = vrot.slane %v1335, 1
        %v1340 = vrot.slane %v1336, 1
        %v1343 = vadd.f32 %v1331, %v1339
        %v1344 = vadd.f32 %v1332, %v1340
        %v1347 = vrot.slane %v1344, 7
        %v1348 = vsel %vm645, %v1343, %v1347
        %v1350 = vmul.f32 %v1328, %v1348
        %v1351 = vadd.f32 %v1316, %v1350
        %1352 = vrot.lane.b32.xlu0 %v647, 13
        %v1353 = vpop.permute.xlu0 %1352
        %1355 = vrot.lane.b32.xlu0 %v646, 13
        %v1356 = vpop.permute.xlu0 %1355
        %vm1357 = vcmask 105472
        %v1358 = vsel %vm1357, %v1356, %v1353
        %v1361 = vsel %vm1357, %v1353, %v1356
        %s1362 = scalar_lea.vmem [#allocation7], 36
        %v1363 = vld [vmem:[%s1362] ss:$8 sm:$0x3]
        %s1364 = sld [smem:[#allocation9 + $0x14]]
        %v1365 = vstv %s1364
        %v1366 = vmul.f32 %v1365, %v1361
        %v1367 = vmul.f32 %v1365, %v1358
        %s1368 = sld [smem:[#allocation9 + $0x45]]
        %v1369 = vstv %s1368
        %v1370 = vmul.f32 %v1369, %v1361
        %v1371 = vmul.f32 %v1369, %v1358
        %v1374 = vrot.slane %v1370, 1
        %v1375 = vrot.slane %v1371, 1
        %v1378 = vadd.f32 %v1366, %v1374
        %v1379 = vadd.f32 %v1367, %v1375
        %v1382 = vrot.slane %v1379, 7
        %v1383 = vsel %vm645, %v1378, %v1382
        %v1385 = vmul.f32 %v1363, %v1383
        %v1386 = vadd.f32 %v1351, %v1385
        %1387 = vrot.lane.b32.xlu0 %v647, 3
        %v1388 = vpop.permute.xlu0 %1387
        %1390 = vrot.lane.b32.xlu0 %v646, 3
        %v1391 = vpop.permute.xlu0 %1390
        %vm1392 = vcmask 23552
        %v1393 = vsel %vm1392, %v1391, %v1388
        %v1396 = vsel %vm1392, %v1388, %v1391
        %s1397 = scalar_lea.vmem [#allocation7], 37
        %v1398 = vld [vmem:[%s1397] ss:$8 sm:$0x3]
        %s1399 = sld [smem:[#allocation9 + $0x15]]
        %v1400 = vstv %s1399
        %v1401 = vmul.f32 %v1400, %v1396
        %v1402 = vmul.f32 %v1400, %v1393
        %s1403 = sld [smem:[#allocation9 + $0x46]]
        %v1404 = vstv %s1403
        %v1405 = vmul.f32 %v1404, %v1396
        %v1406 = vmul.f32 %v1404, %v1393
        %v1409 = vrot.slane %v1405, 1
        %v1410 = vrot.slane %v1406, 1
        %v1413 = vadd.f32 %v1401, %v1409
        %v1414 = vadd.f32 %v1402, %v1410
        %v1417 = vrot.slane %v1414, 7
        %v1418 = vsel %vm645, %v1413, %v1417
        %v1420 = vmul.f32 %v1398, %v1418
        %v1421 = vadd.f32 %v1386, %v1420
        %1422 = vrot.lane.b32.xlu0 %v647, 2
        %v1423 = vpop.permute.xlu0 %1422
        %1425 = vrot.lane.b32.xlu0 %v646, 2
        %v1426 = vpop.permute.xlu0 %1425
        %vm1427 = vcmask 15360
        %v1428 = vsel %vm1427, %v1426, %v1423
        %v1431 = vsel %vm1427, %v1423, %v1426
        %s1432 = scalar_lea.vmem [#allocation7], 38
        %v1433 = vld [vmem:[%s1432] ss:$8 sm:$0x3]
        %s1434 = sld [smem:[#allocation9 + $0x16]]
        %v1435 = vstv %s1434
        %v1436 = vmul.f32 %v1435, %v1431
        %v1437 = vmul.f32 %v1435, %v1428
        %s1438 = sld [smem:[#allocation9 + $0x47]]
        %v1439 = vstv %s1438
        %v1440 = vmul.f32 %v1439, %v1431
        %v1441 = vmul.f32 %v1439, %v1428
        %v1444 = vrot.slane %v1440, 1
        %v1445 = vrot.slane %v1441, 1
        %v1448 = vadd.f32 %v1436, %v1444
        %v1449 = vadd.f32 %v1437, %v1445
        %v1452 = vrot.slane %v1449, 7
        %v1453 = vsel %vm645, %v1448, %v1452
        %v1455 = vmul.f32 %v1433, %v1453
        %v1456 = vadd.f32 %v1421, %v1455
        %1457 = vrot.lane.b32.xlu0 %v647, 1
        %v1458 = vpop.permute.xlu0 %1457
        %1460 = vrot.lane.b32.xlu0 %v646, 1
        %v1461 = vpop.permute.xlu0 %1460
        %v1462 = vsel %vm526, %v1461, %v1458
        %v1465 = vsel %vm526, %v1458, %v1461
        %s1466 = scalar_lea.vmem [#allocation7], 39
        %v1467 = vld [vmem:[%s1466] ss:$8 sm:$0x3]
        %s1468 = sld [smem:[#allocation9 + $0x17]]
        %v1469 = vstv %s1468
        %v1470 = vmul.f32 %v1469, %v1465
        %v1471 = vmul.f32 %v1469, %v1462
        %s1472 = sld [smem:[#allocation9 + $0x48]]
        %v1473 = vstv %s1472
        %v1474 = vmul.f32 %v1473, %v1465
        %v1475 = vmul.f32 %v1473, %v1462
        %v1478 = vrot.slane %v1474, 1
        %v1479 = vrot.slane %v1475, 1
        %v1482 = vadd.f32 %v1470, %v1478
        %v1483 = vadd.f32 %v1471, %v1479
        %v1486 = vrot.slane %v1483, 7
        %v1487 = vsel %vm645, %v1482, %v1486
        %v1489 = vmul.f32 %v1467, %v1487
        %v1490 = vadd.f32 %v1456, %v1489
        %s1491 = scalar_lea.vmem [#allocation7], 48
        %v1492 = vld [vmem:[%s1491] ss:$8 sm:$0x3]
        %s1493 = sld [smem:[#allocation9 + $0x18]]
        %v1494 = vstv %s1493
        %v1495 = vmul.f32 %v1494, %v646
        %v1496 = vmul.f32 %v1494, %v647
        %s1497 = sld [smem:[#allocation9 + $0x49]]
        %v1498 = vstv %s1497
        %v1499 = vmul.f32 %v1498, %v646
        %v1500 = vmul.f32 %v1498, %v647
        %v1503 = vrot.slane %v1499, 1
        %v1504 = vrot.slane %v1500, 1
        %v1507 = vadd.f32 %v1495, %v1503
        %v1508 = vadd.f32 %v1496, %v1504
        %v1511 = vrot.slane %v1508, 7
        %v1512 = vsel %vm645, %v1507, %v1511
        %v1514 = vmul.f32 %v1492, %v1512
        %v1515 = vadd.f32 %v1490, %v1514
        %1516 = vrot.lane.b32.xlu0 %v646, 127
        %v1517 = vpop.permute.xlu0 %1516
        %1518 = vrot.lane.b32.xlu0 %v647, 127
        %v1519 = vpop.permute.xlu0 %1518
        %vm1520 = vcmask 1039360
        %v1521 = vsel %vm1520, %v1517, %v1519
        %v1525 = vsel %vm1520, %v1519, %v1517
        %s1526 = scalar_lea.vmem [#allocation7], 49
        %v1527 = vld [vmem:[%s1526] ss:$8 sm:$0x3]
        %s1528 = sld [smem:[#allocation9 + $0x19]]
        %v1529 = vstv %s1528
        %v1530 = vmul.f32 %v1529, %v1521
        %v1531 = vmul.f32 %v1529, %v1525
        %s1532 = sld [smem:[#allocation9 + $0x4a]]
        %v1533 = vstv %s1532
        %v1534 = vmul.f32 %v1533, %v1521
        %v1535 = vmul.f32 %v1533, %v1525
        %v1538 = vrot.slane %v1534, 1
        %v1539 = vrot.slane %v1535, 1
        %v1542 = vadd.f32 %v1530, %v1538
        %v1543 = vadd.f32 %v1531, %v1539
        %v1546 = vrot.slane %v1543, 7
        %v1547 = vsel %vm645, %v1542, %v1546
        %v1549 = vmul.f32 %v1527, %v1547
        %v1550 = vadd.f32 %v1515, %v1549
        %1551 = vrot.lane.b32.xlu0 %v646, 126
        %v1552 = vpop.permute.xlu0 %1551
        %1553 = vrot.lane.b32.xlu0 %v647, 126
        %v1554 = vpop.permute.xlu0 %1553
        %vm1555 = vcmask 1031168
        %v1556 = vsel %vm1555, %v1552, %v1554
        %v1560 = vsel %vm1555, %v1554, %v1552
        %s1561 = scalar_lea.vmem [#allocation7], 50
        %v1562 = vld [vmem:[%s1561] ss:$8 sm:$0x3]
        %s1563 = sld [smem:[#allocation9 + $0x1a]]
        %v1564 = vstv %s1563
        %v1565 = vmul.f32 %v1564, %v1556
        %v1566 = vmul.f32 %v1564, %v1560
        %s1567 = sld [smem:[#allocation9 + $0x4b]]
        %v1568 = vstv %s1567
        %v1569 = vmul.f32 %v1568, %v1556
        %v1570 = vmul.f32 %v1568, %v1560
        %v1573 = vrot.slane %v1569, 1
        %v1574 = vrot.slane %v1570, 1
        %v1577 = vadd.f32 %v1565, %v1573
        %v1578 = vadd.f32 %v1566, %v1574
        %v1581 = vrot.slane %v1578, 7
        %v1582 = vsel %vm645, %v1577, %v1581
        %v1584 = vmul.f32 %v1562, %v1582
        %v1585 = vadd.f32 %v1550, %v1584
        %1586 = vrot.lane.b32.xlu0 %v646, 125
        %v1587 = vpop.permute.xlu0 %1586
        %1588 = vrot.lane.b32.xlu0 %v647, 125
        %v1589 = vpop.permute.xlu0 %1588
        %vm1590 = vcmask 1022976
        %v1591 = vsel %vm1590, %v1587, %v1589
        %v1595 = vsel %vm1590, %v1589, %v1587
        %s1596 = scalar_lea.vmem [#allocation7], 51
        %v1597 = vld [vmem:[%s1596] ss:$8 sm:$0x3]
        %s1598 = sld [smem:[#allocation9 + $0x1b]]
        %v1599 = vstv %s1598
        %v1600 = vmul.f32 %v1599, %v1591
        %v1601 = vmul.f32 %v1599, %v1595
        %s1602 = sld [smem:[#allocation9 + $0x4c]]
        %v1603 = vstv %s1602
        %v1604 = vmul.f32 %v1603, %v1591
        %v1605 = vmul.f32 %v1603, %v1595
        %v1608 = vrot.slane %v1604, 1
        %v1609 = vrot.slane %v1605, 1
        %v1612 = vadd.f32 %v1600, %v1608
        %v1613 = vadd.f32 %v1601, %v1609
        %v1616 = vrot.slane %v1613, 7
        %v1617 = vsel %vm645, %v1612, %v1616
        %v1619 = vmul.f32 %v1597, %v1617
        %v1620 = vadd.f32 %v1585, %v1619
        %1621 = vrot.lane.b32.xlu0 %v646, 115
        %v1622 = vpop.permute.xlu0 %1621
        %1623 = vrot.lane.b32.xlu0 %v647, 115
        %v1624 = vpop.permute.xlu0 %1623
        %vm1625 = vcmask 941056
        %v1626 = vsel %vm1625, %v1622, %v1624
        %v1630 = vsel %vm1625, %v1624, %v1622
        %s1631 = scalar_lea.vmem [#allocation7], 52
        %v1632 = vld [vmem:[%s1631] ss:$8 sm:$0x3]
        %s1633 = sld [smem:[#allocation9 + $0x1c]]
        %v1634 = vstv %s1633
        %v1635 = vmul.f32 %v1634, %v1626
        %v1636 = vmul.f32 %v1634, %v1630
        %s1637 = sld [smem:[#allocation9 + $0x4d]]
        %v1638 = vstv %s1637
        %v1639 = vmul.f32 %v1638, %v1626
        %v1640 = vmul.f32 %v1638, %v1630
        %v1643 = vrot.slane %v1639, 1
        %v1644 = vrot.slane %v1640, 1
        %v1647 = vadd.f32 %v1635, %v1643
        %v1648 = vadd.f32 %v1636, %v1644
        %v1651 = vrot.slane %v1648, 7
        %v1652 = vsel %vm645, %v1647, %v1651
        %v1654 = vmul.f32 %v1632, %v1652
        %v1655 = vadd.f32 %v1620, %v1654
        %1656 = vrot.lane.b32.xlu0 %v646, 114
        %v1657 = vpop.permute.xlu0 %1656
        %1658 = vrot.lane.b32.xlu0 %v647, 114
        %v1659 = vpop.permute.xlu0 %1658
        %vm1660 = vcmask 932864
        %v1661 = vsel %vm1660, %v1657, %v1659
        %v1665 = vsel %vm1660, %v1659, %v1657
        %s1666 = scalar_lea.vmem [#allocation7], 53
        %v1667 = vld [vmem:[%s1666] ss:$8 sm:$0x3]
        %s1668 = sld [smem:[#allocation9 + $0x1d]]
        %v1669 = vstv %s1668
        %v1670 = vmul.f32 %v1669, %v1661
        %v1671 = vmul.f32 %v1669, %v1665
        %s1672 = sld [smem:[#allocation9 + $0x4e]]
        %v1673 = vstv %s1672
        %v1674 = vmul.f32 %v1673, %v1661
        %v1675 = vmul.f32 %v1673, %v1665
        %v1678 = vrot.slane %v1674, 1
        %v1679 = vrot.slane %v1675, 1
        %v1682 = vadd.f32 %v1670, %v1678
        %v1683 = vadd.f32 %v1671, %v1679
        %v1686 = vrot.slane %v1683, 7
        %v1687 = vsel %vm645, %v1682, %v1686
        %v1689 = vmul.f32 %v1667, %v1687
        %v1690 = vadd.f32 %v1655, %v1689
        %1691 = vrot.lane.b32.xlu0 %v646, 113
        %v1692 = vpop.permute.xlu0 %1691
        %1693 = vrot.lane.b32.xlu0 %v647, 113
        %v1694 = vpop.permute.xlu0 %1693
        %vm1695 = vcmask 924672
        %v1696 = vsel %vm1695, %v1692, %v1694
        %v1700 = vsel %vm1695, %v1694, %v1692
        %s1701 = scalar_lea.vmem [#allocation7], 54
        %v1702 = vld [vmem:[%s1701] ss:$8 sm:$0x3]
        %s1703 = sld [smem:[#allocation9 + $0x1e]]
        %v1704 = vstv %s1703
        %v1705 = vmul.f32 %v1704, %v1696
        %v1706 = vmul.f32 %v1704, %v1700
        %s1707 = sld [smem:[#allocation9 + $0x4f]]
        %v1708 = vstv %s1707
        %v1709 = vmul.f32 %v1708, %v1696
        %v1710 = vmul.f32 %v1708, %v1700
        %v1713 = vrot.slane %v1709, 1
        %v1714 = vrot.slane %v1710, 1
        %v1717 = vadd.f32 %v1705, %v1713
        %v1718 = vadd.f32 %v1706, %v1714
        %v1721 = vrot.slane %v1718, 7
        %v1722 = vsel %vm645, %v1717, %v1721
        %v1724 = vmul.f32 %v1702, %v1722
        %v1725 = vadd.f32 %v1690, %v1724
        %1726 = vrot.lane.b32.xlu0 %v646, 112
        %v1727 = vpop.permute.xlu0 %1726
        %1728 = vrot.lane.b32.xlu0 %v647, 112
        %v1729 = vpop.permute.xlu0 %1728
        %vm1730 = vcmask 916480
        %v1731 = vsel %vm1730, %v1727, %v1729
        %v1735 = vsel %vm1730, %v1729, %v1727
        %s1736 = scalar_lea.vmem [#allocation7], 55
        %v1737 = vld [vmem:[%s1736] ss:$8 sm:$0x3]
        %s1738 = sld [smem:[#allocation9 + $0x1f]]
        %v1739 = vstv %s1738
        %v1740 = vmul.f32 %v1739, %v1731
        %v1741 = vmul.f32 %v1739, %v1735
        %s1742 = sld [smem:[#allocation9 + $0x50]]
        %v1743 = vstv %s1742
        %v1744 = vmul.f32 %v1743, %v1731
        %v1745 = vmul.f32 %v1743, %v1735
        %v1748 = vrot.slane %v1744, 1
        %v1749 = vrot.slane %v1745, 1
        %v1752 = vadd.f32 %v1740, %v1748
        %v1753 = vadd.f32 %v1741, %v1749
        %v1756 = vrot.slane %v1753, 7
        %v1757 = vsel %vm645, %v1752, %v1756
        %v1759 = vmul.f32 %v1737, %v1757
        %v1760 = vadd.f32 %v1725, %v1759
        %1761 = vrot.lane.b32.xlu0 %v646, 111
        %v1762 = vpop.permute.xlu0 %1761
        %1763 = vrot.lane.b32.xlu0 %v647, 111
        %v1764 = vpop.permute.xlu0 %1763
        %vm1765 = vcmask 908288
        %v1766 = vsel %vm1765, %v1762, %v1764
        %v1770 = vsel %vm1765, %v1764, %v1762
        %s1771 = scalar_lea.vmem [#allocation7], 64
        %v1772 = vld [vmem:[%s1771] ss:$8 sm:$0x3]
        %s1773 = sld [smem:[#allocation9 + $0x20]]
        %v1774 = vstv %s1773
        %v1775 = vmul.f32 %v1774, %v1766
        %v1776 = vmul.f32 %v1774, %v1770
        %s1777 = sld [smem:[#allocation9 + $0x51]]
        %v1778 = vstv %s1777
        %v1779 = vmul.f32 %v1778, %v1766
        %v1780 = vmul.f32 %v1778, %v1770
        %v1783 = vrot.slane %v1779, 1
        %v1784 = vrot.slane %v1780, 1
        %v1787 = vadd.f32 %v1775, %v1783
        %v1788 = vadd.f32 %v1776, %v1784
        %v1791 = vrot.slane %v1788, 7
        %v1792 = vsel %vm645, %v1787, %v1791
        %v1794 = vmul.f32 %v1772, %v1792
        %v1795 = vadd.f32 %v1760, %v1794
        %1796 = vrot.lane.b32.xlu0 %v646, 110
        %v1797 = vpop.permute.xlu0 %1796
        %1798 = vrot.lane.b32.xlu0 %v647, 110
        %v1799 = vpop.permute.xlu0 %1798
        %vm1800 = vcmask 900096
        %v1801 = vsel %vm1800, %v1797, %v1799
        %v1805 = vsel %vm1800, %v1799, %v1797
        %s1806 = scalar_lea.vmem [#allocation7], 65
        %v1807 = vld [vmem:[%s1806] ss:$8 sm:$0x3]
        %s1808 = sld [smem:[#allocation9 + $0x21]]
        %v1809 = vstv %s1808
        %v1810 = vmul.f32 %v1809, %v1801
        %v1811 = vmul.f32 %v1809, %v1805
        %s1812 = sld [smem:[#allocation9 + $0x52]]
        %v1813 = vstv %s1812
        %v1814 = vmul.f32 %v1813, %v1801
        %v1815 = vmul.f32 %v1813, %v1805
        %v1818 = vrot.slane %v1814, 1
        %v1819 = vrot.slane %v1815, 1
        %v1822 = vadd.f32 %v1810, %v1818
        %v1823 = vadd.f32 %v1811, %v1819
        %v1826 = vrot.slane %v1823, 7
        %v1827 = vsel %vm645, %v1822, %v1826
        %v1829 = vmul.f32 %v1807, %v1827
        %v1830 = vadd.f32 %v1795, %v1829
        %1831 = vrot.lane.b32.xlu0 %v646, 109
        %v1832 = vpop.permute.xlu0 %1831
        %1833 = vrot.lane.b32.xlu0 %v647, 109
        %v1834 = vpop.permute.xlu0 %1833
        %vm1835 = vcmask 891904
        %v1836 = vsel %vm1835, %v1832, %v1834
        %v1840 = vsel %vm1835, %v1834, %v1832
        %s1841 = scalar_lea.vmem [#allocation7], 66
        %v1842 = vld [vmem:[%s1841] ss:$8 sm:$0x3]
        %s1843 = sld [smem:[#allocation9 + $0x22]]
        %v1844 = vstv %s1843
        %v1845 = vmul.f32 %v1844, %v1836
        %v1846 = vmul.f32 %v1844, %v1840
        %s1847 = sld [smem:[#allocation9 + $0x53]]
        %v1848 = vstv %s1847
        %v1849 = vmul.f32 %v1848, %v1836
        %v1850 = vmul.f32 %v1848, %v1840
        %v1853 = vrot.slane %v1849, 1
        %v1854 = vrot.slane %v1850, 1
        %v1857 = vadd.f32 %v1845, %v1853
        %v1858 = vadd.f32 %v1846, %v1854
        %v1861 = vrot.slane %v1858, 7
        %v1862 = vsel %vm645, %v1857, %v1861
        %v1864 = vmul.f32 %v1842, %v1862
        %v1865 = vadd.f32 %v1830, %v1864
        %1866 = vrot.lane.b32.xlu0 %v646, 99
        %v1867 = vpop.permute.xlu0 %1866
        %1868 = vrot.lane.b32.xlu0 %v647, 99
        %v1869 = vpop.permute.xlu0 %1868
        %vm1870 = vcmask 809984
        %v1871 = vsel %vm1870, %v1867, %v1869
        %v1875 = vsel %vm1870, %v1869, %v1867
        %s1876 = scalar_lea.vmem [#allocation7], 67
        %v1877 = vld [vmem:[%s1876] ss:$8 sm:$0x3]
        %s1878 = sld [smem:[#allocation9 + $0x23]]
        %v1879 = vstv %s1878
        %v1880 = vmul.f32 %v1879, %v1871
        %v1881 = vmul.f32 %v1879, %v1875
        %s1882 = sld [smem:[#allocation9 + $0x54]]
        %v1883 = vstv %s1882
        %v1884 = vmul.f32 %v1883, %v1871
        %v1885 = vmul.f32 %v1883, %v1875
        %v1888 = vrot.slane %v1884, 1
        %v1889 = vrot.slane %v1885, 1
        %v1892 = vadd.f32 %v1880, %v1888
        %v1893 = vadd.f32 %v1881, %v1889
        %v1896 = vrot.slane %v1893, 7
        %v1897 = vsel %vm645, %v1892, %v1896
        %v1899 = vmul.f32 %v1877, %v1897
        %v1900 = vadd.f32 %v1865, %v1899
        %1901 = vrot.lane.b32.xlu0 %v646, 98
        %v1902 = vpop.permute.xlu0 %1901
        %1903 = vrot.lane.b32.xlu0 %v647, 98
        %v1904 = vpop.permute.xlu0 %1903
        %vm1905 = vcmask 801792
        %v1906 = vsel %vm1905, %v1902, %v1904
        %v1910 = vsel %vm1905, %v1904, %v1902
        %s1911 = scalar_lea.vmem [#allocation7], 68
        %v1912 = vld [vmem:[%s1911] ss:$8 sm:$0x3]
        %s1913 = sld [smem:[#allocation9 + $0x24]]
        %v1914 = vstv %s1913
        %v1915 = vmul.f32 %v1914, %v1906
        %v1916 = vmul.f32 %v1914, %v1910
        %s1917 = sld [smem:[#allocation9 + $0x55]]
        %v1918 = vstv %s1917
        %v1919 = vmul.f32 %v1918, %v1906
        %v1920 = vmul.f32 %v1918, %v1910
        %v1923 = vrot.slane %v1919, 1
        %v1924 = vrot.slane %v1920, 1
        %v1927 = vadd.f32 %v1915, %v1923
        %v1928 = vadd.f32 %v1916, %v1924
        %v1931 = vrot.slane %v1928, 7
        %v1932 = vsel %vm645, %v1927, %v1931
        %v1934 = vmul.f32 %v1912, %v1932
        %v1935 = vadd.f32 %v1900, %v1934
        %1936 = vrot.lane.b32.xlu0 %v646, 97
        %v1937 = vpop.permute.xlu0 %1936
        %1938 = vrot.lane.b32.xlu0 %v647, 97
        %v1939 = vpop.permute.xlu0 %1938
        %vm1940 = vcmask 793600
        %v1941 = vsel %vm1940, %v1937, %v1939
        %v1945 = vsel %vm1940, %v1939, %v1937
        %s1946 = scalar_lea.vmem [#allocation7], 69
        %v1947 = vld [vmem:[%s1946] ss:$8 sm:$0x3]
        %s1948 = sld [smem:[#allocation9 + $0x25]]
        %v1949 = vstv %s1948
        %v1950 = vmul.f32 %v1949, %v1941
        %v1951 = vmul.f32 %v1949, %v1945
        %s1952 = sld [smem:[#allocation9 + $0x56]]
        %v1953 = vstv %s1952
        %v1954 = vmul.f32 %v1953, %v1941
        %v1955 = vmul.f32 %v1953, %v1945
        %v1958 = vrot.slane %v1954, 1
        %v1959 = vrot.slane %v1955, 1
        %v1962 = vadd.f32 %v1950, %v1958
        %v1963 = vadd.f32 %v1951, %v1959
        %v1966 = vrot.slane %v1963, 7
        %v1967 = vsel %vm645, %v1962, %v1966
        %v1969 = vmul.f32 %v1947, %v1967
        %v1970 = vadd.f32 %v1935, %v1969
        %1971 = vrot.lane.b32.xlu0 %v646, 96
        %v1972 = vpop.permute.xlu0 %1971
        %1973 = vrot.lane.b32.xlu0 %v647, 96
        %v1974 = vpop.permute.xlu0 %1973
        %vm1975 = vcmask 785408
        %v1976 = vsel %vm1975, %v1972, %v1974
        %v1980 = vsel %vm1975, %v1974, %v1972
        %s1981 = scalar_lea.vmem [#allocation7], 70
        %v1982 = vld [vmem:[%s1981] ss:$8 sm:$0x3]
        %s1983 = sld [smem:[#allocation9 + $0x26]]
        %v1984 = vstv %s1983
        %v1985 = vmul.f32 %v1984, %v1976
        %v1986 = vmul.f32 %v1984, %v1980
        %s1987 = sld [smem:[#allocation9 + $0x57]]
        %v1988 = vstv %s1987
        %v1989 = vmul.f32 %v1988, %v1976
        %v1990 = vmul.f32 %v1988, %v1980
        %v1993 = vrot.slane %v1989, 1
        %v1994 = vrot.slane %v1990, 1
        %v1997 = vadd.f32 %v1985, %v1993
        %v1998 = vadd.f32 %v1986, %v1994
        %v2001 = vrot.slane %v1998, 7
        %v2002 = vsel %vm645, %v1997, %v2001
        %v2004 = vmul.f32 %v1982, %v2002
        %v2005 = vadd.f32 %v1970, %v2004
        %2006 = vrot.lane.b32.xlu0 %v646, 95
        %v2007 = vpop.permute.xlu0 %2006
        %2008 = vrot.lane.b32.xlu0 %v647, 95
        %v2009 = vpop.permute.xlu0 %2008
        %vm2010 = vcmask 777216
        %v2011 = vsel %vm2010, %v2007, %v2009
        %v2015 = vsel %vm2010, %v2009, %v2007
        %s2016 = scalar_lea.vmem [#allocation7], 71
        %v2017 = vld [vmem:[%s2016] ss:$8 sm:$0x3]
        %s2018 = sld [smem:[#allocation9 + $0x27]]
        %v2019 = vstv %s2018
        %v2020 = vmul.f32 %v2019, %v2011
        %v2021 = vmul.f32 %v2019, %v2015
        %s2022 = sld [smem:[#allocation9 + $0x58]]
        %v2023 = vstv %s2022
        %v2024 = vmul.f32 %v2023, %v2011
        %v2025 = vmul.f32 %v2023, %v2015
        %v2028 = vrot.slane %v2024, 1
        %v2029 = vrot.slane %v2025, 1
        %v2032 = vadd.f32 %v2020, %v2028
        %v2033 = vadd.f32 %v2021, %v2029
        %v2036 = vrot.slane %v2033, 7
        %v2037 = vsel %vm645, %v2032, %v2036
        %v2039 = vmul.f32 %v2017, %v2037
        %v2040 = vadd.f32 %v2005, %v2039
        %2041 = vrot.lane.b32.xlu0 %v646, 94
        %v2042 = vpop.permute.xlu0 %2041
        %2043 = vrot.lane.b32.xlu0 %v647, 94
        %v2044 = vpop.permute.xlu0 %2043
        %vm2045 = vcmask 769024
        %v2046 = vsel %vm2045, %v2042, %v2044
        %v2050 = vsel %vm2045, %v2044, %v2042
        %s2051 = scalar_lea.vmem [#allocation7], 80
        %v2052 = vld [vmem:[%s2051] ss:$8 sm:$0x3]
        %s2053 = sld [smem:[#allocation9 + $0x28]]
        %v2054 = vstv %s2053
        %v2055 = vmul.f32 %v2054, %v2046
        %v2056 = vmul.f32 %v2054, %v2050
        %s2057 = sld [smem:[#allocation9 + $0x59]]
        %v2058 = vstv %s2057
        %v2059 = vmul.f32 %v2058, %v2046
        %v2060 = vmul.f32 %v2058, %v2050
        %v2063 = vrot.slane %v2059, 1
        %v2064 = vrot.slane %v2060, 1
        %v2067 = vadd.f32 %v2055, %v2063
        %v2068 = vadd.f32 %v2056, %v2064
        %v2071 = vrot.slane %v2068, 7
        %v2072 = vsel %vm645, %v2067, %v2071
        %v2074 = vmul.f32 %v2052, %v2072
        %v2075 = vadd.f32 %v2040, %v2074
        %2076 = vrot.lane.b32.xlu0 %v646, 93
        %v2077 = vpop.permute.xlu0 %2076
        %2078 = vrot.lane.b32.xlu0 %v647, 93
        %v2079 = vpop.permute.xlu0 %2078
        %vm2080 = vcmask 760832
        %v2081 = vsel %vm2080, %v2077, %v2079
        %v2085 = vsel %vm2080, %v2079, %v2077
        %s2086 = scalar_lea.vmem [#allocation7], 81
        %v2087 = vld [vmem:[%s2086] ss:$8 sm:$0x3]
        %s2088 = sld [smem:[#allocation9 + $0x29]]
        %v2089 = vstv %s2088
        %v2090 = vmul.f32 %v2089, %v2081
        %v2091 = vmul.f32 %v2089, %v2085
        %s2092 = sld [smem:[#allocation9 + $0x5a]]
        %v2093 = vstv %s2092
        %v2094 = vmul.f32 %v2093, %v2081
        %v2095 = vmul.f32 %v2093, %v2085
        %v2098 = vrot.slane %v2094, 1
        %v2099 = vrot.slane %v2095, 1
        %v2102 = vadd.f32 %v2090, %v2098
        %v2103 = vadd.f32 %v2091, %v2099
        %v2106 = vrot.slane %v2103, 7
        %v2107 = vsel %vm645, %v2102, %v2106
        %v2109 = vmul.f32 %v2087, %v2107
        %v2110 = vadd.f32 %v2075, %v2109
        %2111 = vrot.lane.b32.xlu0 %v646, 83
        %v2112 = vpop.permute.xlu0 %2111
        %2113 = vrot.lane.b32.xlu0 %v647, 83
        %v2114 = vpop.permute.xlu0 %2113
        %vm2115 = vcmask 678912
        %v2116 = vsel %vm2115, %v2112, %v2114
        %v2120 = vsel %vm2115, %v2114, %v2112
        %s2121 = scalar_lea.vmem [#allocation7], 82
        %v2122 = vld [vmem:[%s2121] ss:$8 sm:$0x3]
        %s2123 = sld [smem:[#allocation9 + $0x2a]]
        %v2124 = vstv %s2123
        %v2125 = vmul.f32 %v2124, %v2116
        %v2126 = vmul.f32 %v2124, %v2120
        %s2127 = sld [smem:[#allocation9 + $0x5b]]
        %v2128 = vstv %s2127
        %v2129 = vmul.f32 %v2128, %v2116
        %v2130 = vmul.f32 %v2128, %v2120
        %v2133 = vrot.slane %v2129, 1
        %v2134 = vrot.slane %v2130, 1
        %v2137 = vadd.f32 %v2125, %v2133
        %v2138 = vadd.f32 %v2126, %v2134
        %v2141 = vrot.slane %v2138, 7
        %v2142 = vsel %vm645, %v2137, %v2141
        %v2144 = vmul.f32 %v2122, %v2142
        %v2145 = vadd.f32 %v2110, %v2144
        %2146 = vrot.lane.b32.xlu0 %v646, 82
        %v2147 = vpop.permute.xlu0 %2146
        %2148 = vrot.lane.b32.xlu0 %v647, 82
        %v2149 = vpop.permute.xlu0 %2148
        %vm2150 = vcmask 670720
        %v2151 = vsel %vm2150, %v2147, %v2149
        %v2155 = vsel %vm2150, %v2149, %v2147
        %s2156 = scalar_lea.vmem [#allocation7], 83
        %v2157 = vld [vmem:[%s2156] ss:$8 sm:$0x3]
        %s2158 = sld [smem:[#allocation9 + $0x2b]]
        %v2159 = vstv %s2158
        %v2160 = vmul.f32 %v2159, %v2151
        %v2161 = vmul.f32 %v2159, %v2155
        %s2162 = sld [smem:[#allocation9 + $0x5c]]
        %v2163 = vstv %s2162
        %v2164 = vmul.f32 %v2163, %v2151
        %v2165 = vmul.f32 %v2163, %v2155
        %v2168 = vrot.slane %v2164, 1
        %v2169 = vrot.slane %v2165, 1
        %v2172 = vadd.f32 %v2160, %v2168
        %v2173 = vadd.f32 %v2161, %v2169
        %v2176 = vrot.slane %v2173, 7
        %v2177 = vsel %vm645, %v2172, %v2176
        %v2179 = vmul.f32 %v2157, %v2177
        %v2180 = vadd.f32 %v2145, %v2179
        %2181 = vrot.lane.b32.xlu0 %v646, 81
        %v2182 = vpop.permute.xlu0 %2181
        %2183 = vrot.lane.b32.xlu0 %v647, 81
        %v2184 = vpop.permute.xlu0 %2183
        %vm2185 = vcmask 662528
        %v2186 = vsel %vm2185, %v2182, %v2184
        %v2190 = vsel %vm2185, %v2184, %v2182
        %s2191 = scalar_lea.vmem [#allocation7], 84
        %v2192 = vld [vmem:[%s2191] ss:$8 sm:$0x3]
        %s2193 = sld [smem:[#allocation9 + $0x2c]]
        %v2194 = vstv %s2193
        %v2195 = vmul.f32 %v2194, %v2186
        %v2196 = vmul.f32 %v2194, %v2190
        %s2197 = sld [smem:[#allocation9 + $0x5d]]
        %v2198 = vstv %s2197
        %v2199 = vmul.f32 %v2198, %v2186
        %v2200 = vmul.f32 %v2198, %v2190
        %v2203 = vrot.slane %v2199, 1
        %v2204 = vrot.slane %v2200, 1
        %v2207 = vadd.f32 %v2195, %v2203
        %v2208 = vadd.f32 %v2196, %v2204
        %v2211 = vrot.slane %v2208, 7
        %v2212 = vsel %vm645, %v2207, %v2211
        %v2214 = vmul.f32 %v2192, %v2212
        %v2215 = vadd.f32 %v2180, %v2214
        %2216 = vrot.lane.b32.xlu0 %v646, 80
        %v2217 = vpop.permute.xlu0 %2216
        %2218 = vrot.lane.b32.xlu0 %v647, 80
        %v2219 = vpop.permute.xlu0 %2218
        %vm2220 = vcmask 654336
        %v2221 = vsel %vm2220, %v2217, %v2219
        %v2225 = vsel %vm2220, %v2219, %v2217
        %s2226 = scalar_lea.vmem [#allocation7], 85
        %v2227 = vld [vmem:[%s2226] ss:$8 sm:$0x3]
        %s2228 = sld [smem:[#allocation9 + $0x2d]]
        %v2229 = vstv %s2228
        %v2230 = vmul.f32 %v2229, %v2221
        %v2231 = vmul.f32 %v2229, %v2225
        %s2232 = sld [smem:[#allocation9 + $0x5e]]
        %v2233 = vstv %s2232
        %v2234 = vmul.f32 %v2233, %v2221
        %v2235 = vmul.f32 %v2233, %v2225
        %v2238 = vrot.slane %v2234, 1
        %v2239 = vrot.slane %v2235, 1
        %v2242 = vadd.f32 %v2230, %v2238
        %v2243 = vadd.f32 %v2231, %v2239
        %v2246 = vrot.slane %v2243, 7
        %v2247 = vsel %vm645, %v2242, %v2246
        %v2249 = vmul.f32 %v2227, %v2247
        %v2250 = vadd.f32 %v2215, %v2249
        %2251 = vrot.lane.b32.xlu0 %v646, 79
        %v2252 = vpop.permute.xlu0 %2251
        %2253 = vrot.lane.b32.xlu0 %v647, 79
        %v2254 = vpop.permute.xlu0 %2253
        %vm2255 = vcmask 646144
        %v2256 = vsel %vm2255, %v2252, %v2254
        %v2260 = vsel %vm2255, %v2254, %v2252
        %s2261 = scalar_lea.vmem [#allocation7], 86
        %v2262 = vld [vmem:[%s2261] ss:$8 sm:$0x3]
        %s2263 = sld [smem:[#allocation9 + $0x2e]]
        %v2264 = vstv %s2263
        %v2265 = vmul.f32 %v2264, %v2256
        %v2266 = vmul.f32 %v2264, %v2260
        %s2267 = sld [smem:[#allocation9 + $0x5f]]
        %v2268 = vstv %s2267
        %v2269 = vmul.f32 %v2268, %v2256
        %v2270 = vmul.f32 %v2268, %v2260
        %v2273 = vrot.slane %v2269, 1
        %v2274 = vrot.slane %v2270, 1
        %v2277 = vadd.f32 %v2265, %v2273
        %v2278 = vadd.f32 %v2266, %v2274
        %v2281 = vrot.slane %v2278, 7
        %v2282 = vsel %vm645, %v2277, %v2281
        %v2284 = vmul.f32 %v2262, %v2282
        %v2285 = vadd.f32 %v2250, %v2284
        %2286 = vrot.lane.b32.xlu0 %v646, 78
        %v2287 = vpop.permute.xlu0 %2286
        %2288 = vrot.lane.b32.xlu0 %v647, 78
        %v2289 = vpop.permute.xlu0 %2288
        %vm2290 = vcmask 637952
        %v2291 = vsel %vm2290, %v2287, %v2289
        %v2295 = vsel %vm2290, %v2289, %v2287
        %s2296 = scalar_lea.vmem [#allocation7], 87
        %v2297 = vld [vmem:[%s2296] ss:$8 sm:$0x3]
        %s2298 = sld [smem:[#allocation9 + $0x2f]]
        %v2299 = vstv %s2298
        %v2300 = vmul.f32 %v2299, %v2291
        %v2301 = vmul.f32 %v2299, %v2295
        %s2302 = sld [smem:[#allocation9 + $0x60]]
        %v2303 = vstv %s2302
        %v2304 = vmul.f32 %v2303, %v2291
        %v2305 = vmul.f32 %v2303, %v2295
        %v2308 = vrot.slane %v2304, 1
        %v2309 = vrot.slane %v2305, 1
        %v2312 = vadd.f32 %v2300, %v2308
        %v2313 = vadd.f32 %v2301, %v2309
        %v2316 = vrot.slane %v2313, 7
        %v2317 = vsel %vm645, %v2312, %v2316
        %v2319 = vmul.f32 %v2297, %v2317
        %v2320 = vadd.f32 %v2285, %v2319
        %2321 = vrot.lane.b32.xlu0 %v646, 77
        %v2322 = vpop.permute.xlu0 %2321
        %2323 = vrot.lane.b32.xlu0 %v647, 77
        %v2324 = vpop.permute.xlu0 %2323
        %vm2325 = vcmask 629760
        %v2326 = vsel %vm2325, %v2322, %v2324
        %v2330 = vsel %vm2325, %v2324, %v2322
        %s2331 = scalar_lea.vmem [#allocation7], 96
        %v2332 = vld [vmem:[%s2331] ss:$8 sm:$0x3]
        %s2333 = sld [smem:[#allocation9 + $0x30]]
        %v2334 = vstv %s2333
        %v2335 = vmul.f32 %v2334, %v2326
        %v2336 = vmul.f32 %v2334, %v2330
        %s2337 = sld [smem:[#allocation9 + $0x61]]
        %v2338 = vstv %s2337
        %v2339 = vmul.f32 %v2338, %v2326
        %v2340 = vmul.f32 %v2338, %v2330
        %v2343 = vrot.slane %v2339, 1
        %v2344 = vrot.slane %v2340, 1
        %v2347 = vadd.f32 %v2335, %v2343
        %v2348 = vadd.f32 %v2336, %v2344
        %v2351 = vrot.slane %v2348, 7
        %v2352 = vsel %vm645, %v2347, %v2351
        %v2354 = vmul.f32 %v2332, %v2352
        %v2355 = vadd.f32 %v2320, %v2354
        %v2356 = vxor.u32 %v2355, 2147483648
        %v2357 = vmul.f32 %v2356, 1.442695
        %v2358 = vpow.pop %v2357
        %v2359 = vadd.f32 %v2358, 1.0
        %v2360 = vrcp.pop %v2359
        %v2361 = vmul.f32 %v2359, %v2360
        %v2362 = vsub.f32 1.0, %v2361
        %v2363 = vmul.f32 %v2360, %v2362
        %v2364 = vadd.f32 %v2360, %v2363
        %vm2365 = vweird.f32 %v2359
        %vm2366 = vweird.f32 %v2360
        %vm2367 = vmor %vm2365, %vm2366
        %v2368 = vsel %vm2367, %v2360, %v2364
        %v2369 = vand.u32 2147483647, %v2359
        %vm2370 = vcmp.eq.f32.partialorder %v2369, 8.507059e+37
        %v2371 = vand.u32 %v2359, 2147483648
        %v2372 = vor.u32 1.1754944e-38, %v2371
        %v2373 = vsel %vm2370, %v2372, %v2368
        %v2374 = vmul.f32 1.0, %v2373
        %v2376 = vperm.slane %v2374, 0
        %v2377 = vperm.slane %v2374, 1
        %v2380 = vmul.f32 %v610, %v2376
        %v2381 = vmul.f32 %v611, %v2377
        %vm2382 = vcmp.gt.f32.partialorder %v2380, 0.0
        %vm2383 = vcmp.gt.f32.partialorder %v2381, 0.0
        %v2384 = vmul.f32 %v2380, 0.1
        %v2385 = vmul.f32 %v2381, 0.1
        %v2386 = vsel %vm2382, %v2380, %v2384
        %v2387 = vsel %vm2383, %v2381, %v2385
        %2388 = vst [vmem:[%s357] sm:$0xff] %v2386
        %2389 = vst [vmem:[%s357 + $0x8] sm:$0xff] %v2387
        %s2390 = sand.u32 %s209, 1
        %s2391 = scalar_lea.sflag [#allocation5], %s2390
        %s2392 = sand.u32 %s209, 1
        %s2393 = smul.addr %s2392, 16
        %s2394 = scalar_lea.vmem [#allocation10], %s2393
        // Predicated region
        $region65: #{tpu_custom_call.1} parent=51 // pred_check
          %p2395 = pneg %p219
        $region66: #{tpu_custom_call.1} parent=51 // pred_check_branch
          %2397 = sbr.rel (%p2395) target = $region68
        $region67: #{tpu_custom_call.1} parent=51 // pred_region
          %2399 = vsyncadd %s2391, 0
          %s2400 = smul.addr %s28, 2
          %s2401 = smul.addr %s2400, 8
          %s2402 = scalar_lea.hbm %s8, %s2401
          %s2404 = sshll.u32 %s2394, 4
          %s2405 = int_to_ptr.vmem [resolvable:$true] %s2404
          %s2406 = sshll.u32 %s2402, 4
          %s2407 = int_to_ptr.hbm [resolvable:$true] %s2406
          %2409 = dma.vmem_to_hbm [thread:$0]  %s2405, 256, %s2407, %s2391
        $region68: #{tpu_custom_call.1} parent=51 // pred_fallthru
          _
      $region52: #{tpu_custom_call.1} parent=5 // pred_fallthru
        _
      %p2410 = scmp.le.s32.totalorder 2, %s23
      // Predicated region
      $region69: #{tpu_custom_call.1} parent=5 // pred_check
        %p2411 = pneg %p2410
      $region70: #{tpu_custom_call.1} parent=5 // pred_check_branch
        %2413 = sbr.rel (%p2411) target = $region72
      $region71: #{tpu_custom_call.1} parent=5 // pred_region
        %s2414 = ssub.s32 %s23, 2
        // Predicated region
        $region73: #{tpu_custom_call.1} parent=71 // pred_check
          %p2415 = pneg %p225
        $region74: #{tpu_custom_call.1} parent=71 // pred_check_branch
          %2417 = sbr.rel (%p2415) target = $region76
        $region75: #{tpu_custom_call.1} parent=71 // pred_region
          %s2418 = sand.u32 %s210, 1
          %s2419 = scalar_lea.sflag [#allocation5], %s2418
          %s2420 = sand.u32 %s210, 1
          %s2421 = smul.addr %s2420, 16
          %s2422 = scalar_lea.vmem [#allocation10], %s2421
          %2424 = dma.done %s2419, 256
        $region76: #{tpu_custom_call.1} parent=71 // pred_fallthru
          _
      $region72: #{tpu_custom_call.1} parent=5 // pred_fallthru
        _
    $region6: #{tpu_custom_call.1} parent=1 // loop_footer
      %s27 = sadd.s32 1, %s23
    $region7: #{tpu_custom_call.1} parent=1 // loop_footer_branch
      %22 = sbr.rel target = $region3
    $region8: #{tpu_custom_call.1} parent=1 // loop_exit
      _
    %2425 = vsyncpa [#allocation4], 1
    %s2426 = scalar_lea.sflag [#allocation4], 1
    %2427 = vsyncpa %s2426, 1
    %2428 = vsyncpa [#allocation8], 1
    %2429 = vsyncpa [#allocation5], 1
    %s2430 = scalar_lea.sflag [#allocation5], 1
    %2431 = vsyncpa %s2430, 1
    %2432 = vsyncpa [#allocation6], 1
    %s2433 = scalar_lea.sflag [#allocation6], 1
    %2434 = vsyncpa %s2433, 1

</llo_original>
